<compile_context>
chip_gen: v6e
topology: v6e:2x2x1
jax: 0.10.0
libtpu: 0.0.40
codegen_flags: <defaults>
</compile_context>

<pallas_src>
import math

import jax
import jax.numpy as jnp
from jax.experimental import pallas as pl

# ----------------------------- synthetic config ------------------------------
VOCAB = 100
HIDDEN = 32
N_LAYERS = 2
N_HEADS = 4
HEAD_DIM = HIDDEN // N_HEADS
INTERMEDIATE = 64
MAX_POS = 64
TYPE_VOCAB = 2
NUM_LABELS = 5          # args.num_class
PRE_SEQ_LEN = 4         # args.prefix_seq_len
PREFIX_HIDDEN = 48      # config.prefix_hidden_size (scaled down from 768)
BATCH = 2
SEQ = 8

LN_EPS_BERT = 1e-12     # HF BertLayerNorm eps
LN_EPS_TORCH = 1e-5     # nn.LayerNorm default (PoolerEndLogits)
NEG_MASK = -10000.0     # BERT additive attention mask value
PAD_NEG = -1e9          # bias for padded start-head lanes (softmax-neutral)

BS = BATCH * SEQ
HC = HIDDEN + NUM_LABELS
PREF_OUT = N_LAYERS * 2 * HIDDEN   # flat prefix K/V width
LANE = 128


# ------------------------ weight-slab layout (static) -------------------------
def _build_layout():
    layout = {}
    row = [0]

    def add(name, nrows, ncols):
        layout[name] = (row[0], nrows, ncols)
        row[0] += -(-nrows // 8) * 8          # sublane-align every block

    for li in range(N_LAYERS):
        add(f"qkv_w{li}", HIDDEN, 3 * HIDDEN)
        add(f"qkv_b{li}", 1, 3 * HIDDEN)
        add(f"ao_w{li}", HIDDEN, HIDDEN)
        add(f"ao_b{li}", 1, HIDDEN)
        add(f"ln1_g{li}", 1, HIDDEN)
        add(f"ln1_b{li}", 1, HIDDEN)
        add(f"i_w{li}", HIDDEN, INTERMEDIATE)
        add(f"i_b{li}", 1, INTERMEDIATE)
        add(f"o_w{li}", INTERMEDIATE, HIDDEN)
        add(f"o_b{li}", 1, HIDDEN)
        add(f"ln2_g{li}", 1, HIDDEN)
        add(f"ln2_b{li}", 1, HIDDEN)
        add(f"pref_k{li}", PRE_SEQ_LEN, HIDDEN)
        add(f"pref_v{li}", PRE_SEQ_LEN, HIDDEN)
    add("emb_ln_g", 1, HIDDEN)
    add("emb_ln_b", 1, HIDDEN)
    add("start_w", HIDDEN, LANE)              # padded to 128 output lanes
    add("start_b", 1, LANE)
    add("e0_wh", HIDDEN, HC)
    add("e0_wl", NUM_LABELS, HC)
    add("e0_b", 1, HC)
    add("end_ln_g", 1, HC)
    add("end_ln_b", 1, HC)
    add("e1_w", HC, LANE)                     # padded to 128 output lanes
    add("e1_b", 1, LANE)
    return layout, -(-row[0] // 8) * 8


LAYOUT, SLAB_ROWS = _build_layout()


# ------------------------------- Pallas kernel --------------------------------
def _full_spec(shape):
    nd = len(shape)
    return pl.BlockSpec(shape, lambda *_: (0,) * nd)


def _ln(x, g, b, eps):
    mean = jnp.mean(x, axis=-1, keepdims=True)
    var = jnp.mean(jnp.square(x - mean), axis=-1, keepdims=True)
    return (x - mean) * jax.lax.rsqrt(var + eps) * g + b


def _fused_forward_kernel(emb_ref, mask_ref, slab_ref, out_ref):
    f32 = jnp.float32

    def w(name):
        r, nr, nc = LAYOUT[name]
        return slab_ref[r:r + nr, 0:nc]       # static slab slice (free)

    mask_big = mask_ref[...]                                   # (BS, P+BS), prefix cols = 0
    hidden = _ln(emb_ref[...], w("emb_ln_g"), w("emb_ln_b"), LN_EPS_BERT)   # (BS, H)

    # ---- transformer layers (statically unrolled) ----
    for li in range(N_LAYERS):
        # fused QKV (Q columns/bias pre-scaled by 1/sqrt(D) at pack time)
        qkv = jnp.dot(hidden, w(f"qkv_w{li}"), preferred_element_type=f32) + w(f"qkv_b{li}")
        pref_k = w(f"pref_k{li}")             # (P, H), head h at cols h*D:(h+1)*D
        pref_v = w(f"pref_v{li}")

        ctx_heads = []
        for h in range(N_HEADS):
            c0 = h * HEAD_DIM
            q = qkv[:, c0:c0 + HEAD_DIM]                                     # (BS, D)
            ks = qkv[:, HIDDEN + c0:HIDDEN + c0 + HEAD_DIM]                  # (BS, D)
            vs = qkv[:, 2 * HIDDEN + c0:2 * HIDDEN + c0 + HEAD_DIM]          # (BS, D)
            kf = jnp.concatenate([pref_k[:, c0:c0 + HEAD_DIM], ks], axis=0)  # (P+BS, D)
            vf = jnp.concatenate([pref_v[:, c0:c0 + HEAD_DIM], vs], axis=0)  # (P+BS, D)

            s = jax.lax.dot_general(q, kf, (((1,), (1,)), ((), ())),
                                    preferred_element_type=f32) + mask_big   # (BS, P+BS)
            m = jnp.max(s, axis=-1, keepdims=True)
            e = jnp.exp(s - m)
            probs = e / jnp.sum(e, axis=-1, keepdims=True)                   # exact softmax
            ctx_heads.append(jnp.dot(probs, vf, preferred_element_type=f32)) # (BS, D)
        ctx = jnp.concatenate(ctx_heads, axis=-1)                            # (BS, H)

        attn_out = jnp.dot(ctx, w(f"ao_w{li}"), preferred_element_type=f32) + w(f"ao_b{li}")
        h1 = _ln(attn_out + hidden, w(f"ln1_g{li}"), w(f"ln1_b{li}"), LN_EPS_BERT)
        # TODO(synk): HF BERT uses erf-GELU; tanh approximation used for Mosaic safety.
        inter = jax.nn.gelu(
            jnp.dot(h1, w(f"i_w{li}"), preferred_element_type=f32) + w(f"i_b{li}"),
            approximate=True)
        ffn = jnp.dot(inter, w(f"o_w{li}"), preferred_element_type=f32) + w(f"o_b{li}")
        hidden = _ln(ffn + h1, w(f"ln2_g{li}"), w(f"ln2_b{li}"), LN_EPS_BERT)

    # ---- span heads (dropout = identity in eval) ----
    # start head: weights lane-padded to 128; padded bias = -1e9 so the softmax
    # over the padded row is identical to a 5-wide softmax (exp -> 0).
    start_pad = jnp.dot(hidden, w("start_w"), preferred_element_type=f32) + w("start_b")
    sm = jnp.max(start_pad, axis=-1, keepdims=True)
    se = jnp.exp(start_pad - sm)
    label_pad = se / jnp.sum(se, axis=-1, keepdims=True)        # (BS, 128)
    label5 = label_pad[:, 0:NUM_LABELS]                         # (BS, C) soft labels (eval path)

    # PoolerEndLogits: dense_0 on concat([hidden, label_logits], -1) as split matmuls
    e0 = (jnp.dot(hidden, w("e0_wh"), preferred_element_type=f32)
          + jnp.dot(label5, w("e0_wl"), preferred_element_type=f32)
          + w("e0_b"))
    e0 = _ln(jnp.tanh(e0), w("end_ln_g"), w("end_ln_b"), LN_EPS_TORCH)
    end_pad = jnp.dot(e0, w("e1_w"), preferred_element_type=f32) + w("e1_b")

    # lane-dense output slab: rows [0, BS) = start, rows [BS, 2*BS) = end
    out_ref[0:BS, :] = start_pad
    out_ref[BS:2 * BS, :] = end_pad


# ----------------------------- parameter creation -----------------------------
def _dense(key, fan_in, fan_out):
    w = jax.random.normal(key, (fan_in, fan_out), jnp.float32) * 0.02
    b = jnp.zeros((fan_out,), jnp.float32)
    return w, b


def init_params(key):
    keys = iter(jax.random.split(key, 64))
    p = {}
    # BERT embeddings
    p["word_emb"] = jax.random.normal(next(keys), (VOCAB, HIDDEN), jnp.float32) * 0.02
    p["pos_emb"] = jax.random.normal(next(keys), (MAX_POS, HIDDEN), jnp.float32) * 0.02
    p["type_emb"] = jax.random.normal(next(keys), (TYPE_VOCAB, HIDDEN), jnp.float32) * 0.02
    p["emb_ln_g"] = jnp.ones((HIDDEN,), jnp.float32)
    p["emb_ln_b"] = jnp.zeros((HIDDEN,), jnp.float32)
    # BERT layers
    layers = []
    for _ in range(N_LAYERS):
        lp = {}
        lp["q_w"], lp["q_b"] = _dense(next(keys), HIDDEN, HIDDEN)
        lp["k_w"], lp["k_b"] = _dense(next(keys), HIDDEN, HIDDEN)
        lp["v_w"], lp["v_b"] = _dense(next(keys), HIDDEN, HIDDEN)
        lp["ao_w"], lp["ao_b"] = _dense(next(keys), HIDDEN, HIDDEN)
        lp["ln1_g"] = jnp.ones((HIDDEN,), jnp.float32)
        lp["ln1_b"] = jnp.zeros((HIDDEN,), jnp.float32)
        lp["i_w"], lp["i_b"] = _dense(next(keys), HIDDEN, INTERMEDIATE)
        lp["o_w"], lp["o_b"] = _dense(next(keys), INTERMEDIATE, HIDDEN)
        lp["ln2_g"] = jnp.ones((HIDDEN,), jnp.float32)
        lp["ln2_b"] = jnp.zeros((HIDDEN,), jnp.float32)
        layers.append(lp)
    p["layers"] = layers
    # pooler + heads (pooler/classifier1 only feed the training-time loss)
    p["pool_w"], p["pool_b"] = _dense(next(keys), HIDDEN, HIDDEN)            # unused at inference
    p["cls1_w"], p["cls1_b"] = _dense(next(keys), HIDDEN, 2)                 # unused at inference
    p["start_w"], p["start_b"] = _dense(next(keys), HIDDEN, NUM_LABELS)      # start_fc
    p["end_d0_w"], p["end_d0_b"] = _dense(next(keys), HC, HC)                # end_fc.dense_0
    p["end_ln_g"] = jnp.ones((HC,), jnp.float32)
    p["end_ln_b"] = jnp.zeros((HC,), jnp.float32)
    p["end_d1_w"], p["end_d1_b"] = _dense(next(keys), HC, NUM_LABELS)        # end_fc.dense_1
    # PrefixEncoder (prefix_projection = True)
    p["prefix_emb"] = jax.random.normal(next(keys), (PRE_SEQ_LEN, HIDDEN), jnp.float32) * 0.02
    p["pref_t0_w"], p["pref_t0_b"] = _dense(next(keys), HIDDEN, PREFIX_HIDDEN)
    p["pref_t1_w"], p["pref_t1_b"] = _dense(next(keys), PREFIX_HIDDEN, PREF_OUT)
    return p


def pack_params(p):
    """One-time repacking: PrefixEncoder MLP hoisted (weight-only, eval dropout = id),
    fused QKV with 1/sqrt(D) folded into Q, span-head weights lane-padded to 128,
    everything packed into a single lane-aligned (SLAB_ROWS, 128) f32 slab."""
    scale = 1.0 / math.sqrt(HEAD_DIM)

    # Hoisted PrefixEncoder MLP: (P, 2*L*H) with flat layout (layer2, head, d)
    ph = jnp.tanh(p["prefix_emb"] @ p["pref_t0_w"] + p["pref_t0_b"])
    pkv = ph @ p["pref_t1_w"] + p["pref_t1_b"]

    slab = jnp.zeros((SLAB_ROWS, LANE), jnp.float32)

    def put(slab, name, arr):
        r, nr, nc = LAYOUT[name]
        arr = jnp.asarray(arr, jnp.float32).reshape(nr, nc)
        return slab.at[r:r + nr, :nc].set(arr)

    for li, lp in enumerate(p["layers"]):
        qkv_w = jnp.concatenate([lp["q_w"] * scale, lp["k_w"], lp["v_w"]], axis=1)
        qkv_b = jnp.concatenate([lp["q_b"] * scale, lp["k_b"], lp["v_b"]])
        slab = put(slab, f"qkv_w{li}", qkv_w)
        slab = put(slab, f"qkv_b{li}", qkv_b[None, :])
        slab = put(slab, f"ao_w{li}", lp["ao_w"])
        slab = put(slab, f"ao_b{li}", lp["ao_b"][None, :])
        slab = put(slab, f"ln1_g{li}", lp["ln1_g"][None, :])
        slab = put(slab, f"ln1_b{li}", lp["ln1_b"][None, :])
        slab = put(slab, f"i_w{li}", lp["i_w"])
        slab = put(slab, f"i_b{li}", lp["i_b"][None, :])
        slab = put(slab, f"o_w{li}", lp["o_w"])
        slab = put(slab, f"o_b{li}", lp["o_b"][None, :])
        slab = put(slab, f"ln2_g{li}", lp["ln2_g"][None, :])
        slab = put(slab, f"ln2_b{li}", lp["ln2_b"][None, :])
        slab = put(slab, f"pref_k{li}", pkv[:, (2 * li) * HIDDEN:(2 * li + 1) * HIDDEN])
        slab = put(slab, f"pref_v{li}", pkv[:, (2 * li + 1) * HIDDEN:(2 * li + 2) * HIDDEN])

    slab = put(slab, "emb_ln_g", p["emb_ln_g"][None, :])
    slab = put(slab, "emb_ln_b", p["emb_ln_b"][None, :])

    start_w_pad = jnp.zeros((HIDDEN, LANE), jnp.float32).at[:, :NUM_LABELS].set(p["start_w"])
    start_b_pad = jnp.full((1, LANE), PAD_NEG, jnp.float32).at[0, :NUM_LABELS].set(p["start_b"])
    e1_w_pad = jnp.zeros((HC, LANE), jnp.float32).at[:, :NUM_LABELS].set(p["end_d1_w"])
    e1_b_pad = jnp.zeros((1, LANE), jnp.float32).at[0, :NUM_LABELS].set(p["end_d1_b"])

    slab = put(slab, "start_w", start_w_pad)
    slab = put(slab, "start_b", start_b_pad)
    slab = put(slab, "e0_wh", p["end_d0_w"][:HIDDEN, :])
    slab = put(slab, "e0_wl", p["end_d0_w"][HIDDEN:, :])
    slab = put(slab, "e0_b", p["end_d0_b"][None, :])
    slab = put(slab, "end_ln_g", p["end_ln_g"][None, :])
    slab = put(slab, "end_ln_b", p["end_ln_b"][None, :])
    slab = put(slab, "e1_w", e1_w_pad)
    slab = put(slab, "e1_b", e1_b_pad)

    return dict(slab=slab, word_emb=p["word_emb"], pos_emb=p["pos_emb"],
                type_emb=p["type_emb"])


# --------------------------------- forward ------------------------------------
@jax.jit
def bert_span_prefix_forward(packed, input_ids, attention_mask):
    B, S = input_ids.shape
    P = PRE_SEQ_LEN

    # XLA glue: embedding gathers (data-dependent) + additive mask construction.
    positions = jnp.arange(P, P + S, dtype=jnp.int32)   # shifted by past_key_values_length
    emb = (packed["word_emb"][input_ids]
           + packed["pos_emb"][positions][None, :, :]
           + packed["type_emb"][0][None, None, :]).reshape(B * S, HIDDEN).astype(jnp.float32)

    # block-diagonal-over-batch + token attention mask (additive -10000), padded
    # with zero columns for the always-visible prefix tokens.
    batch_ids = jnp.repeat(jnp.arange(B), S)
    same_batch = batch_ids[:, None] == batch_ids[None, :]
    valid = attention_mask.reshape(B * S).astype(bool)[None, :]
    seq_mask = jnp.where(same_batch & valid, 0.0, NEG_MASK).astype(jnp.float32)   # (BS, BS)
    mask_big = jnp.concatenate(
        [jnp.zeros((B * S, P), jnp.float32), seq_mask], axis=1)                   # (BS, P+BS)

    out = pl.pallas_call(
        _fused_forward_kernel,
        out_shape=jax.ShapeDtypeStruct((2 * B * S, LANE), jnp.float32),
        in_specs=[_full_spec(emb.shape),
                  _full_spec(mask_big.shape),
                  _full_spec(packed["slab"].shape)],
        out_specs=_full_spec((2 * B * S, LANE)),
    )(emb, mask_big, packed["slab"])

    start_logits = out[:B * S, :NUM_LABELS].reshape(B, S, NUM_LABELS)
    end_logits = out[B * S:, :NUM_LABELS].reshape(B, S, NUM_LABELS)

    # TODO(synk): pooler + classifier1 (have_ans_logits) and the CE/FL/LS/DL loss branches
    # only affect the training-time loss path; they are omitted from this inference forward.
    return start_logits, end_logits


# ----------------------------------- main --------------------------------------
if __name__ == "__main__":
    key = jax.random.PRNGKey(0)
    pkey, ikey = jax.random.split(key)
    params = init_params(pkey)
    packed = pack_params(params)

    input_ids = jax.random.randint(ikey, (BATCH, SEQ), 0, VOCAB, dtype=jnp.int32)
    attention_mask = jnp.ones((BATCH, SEQ), dtype=jnp.int32).at[:, SEQ - 2:].set(0)
    # token_label / have_ans / ans_nums from the torch signature are only used by the
    # (training-time) loss branches and are therefore not needed here.

    start_logits, end_logits = bert_span_prefix_forward(packed, input_ids, attention_mask)
    jax.block_until_ready((start_logits, end_logits))

    assert start_logits.shape == (BATCH, SEQ, NUM_LABELS)
    assert end_logits.shape == (BATCH, SEQ, NUM_LABELS)
    assert bool(jnp.all(jnp.isfinite(start_logits))) and bool(jnp.all(jnp.isfinite(end_logits)))
    print("KERNEL_OK")
</pallas_src>

<mosaic_0001>
module attributes {stable_mosaic.version = 11 : i64} {
  func.func @_fused_forward_kernel(%arg0: memref<16x32xf32, #tpu.memory_space<vmem>>, %arg1: memref<16x20xf32, #tpu.memory_space<vmem>>, %arg2: memref<648x128xf32, #tpu.memory_space<vmem>>, %arg3: memref<32x128xf32, #tpu.memory_space<vmem>>) attributes {dimension_semantics = [], scalar_prefetch = 0 : i64, scratch_operands = 0 : i64, tpu.core_type = #tpu.core_type<tc>} {
    %c0 = arith.constant 0 : index
    %c0_0 = arith.constant 0 : index
    %0 = vector.load %arg1[%c0, %c0_0] : memref<16x20xf32, #tpu.memory_space<vmem>>, vector<16x20xf32>
    %c0_1 = arith.constant 0 : index
    %c0_2 = arith.constant 0 : index
    %1 = vector.load %arg0[%c0_1, %c0_2] : memref<16x32xf32, #tpu.memory_space<vmem>>, vector<16x32xf32>
    %c480 = arith.constant 480 : index
    %c0_3 = arith.constant 0 : index
    %2 = vector.load %arg2[%c480, %c0_3] : memref<648x128xf32, #tpu.memory_space<vmem>>, vector<1x32xf32>
    %c488 = arith.constant 488 : index
    %c0_4 = arith.constant 0 : index
    %3 = vector.load %arg2[%c488, %c0_4] : memref<648x128xf32, #tpu.memory_space<vmem>>, vector<1x32xf32>
    %cst = arith.constant dense<0.000000e+00> : vector<16xf32>
    %4 = vector.multi_reduction <add>, %1, %cst [1] : vector<16x32xf32> to vector<16xf32>
    %5 = vector.shape_cast %4 : vector<16xf32> to vector<16x1xf32>
    %cst_5 = arith.constant 3.200000e+01 : f32
    %6 = vector.broadcast %cst_5 : f32 to vector<16x1xf32>
    %7 = arith.divf %5, %6 : vector<16x1xf32>
    %8 = vector.broadcast %7 : vector<16x1xf32> to vector<16x32xf32>
    %9 = arith.subf %1, %8 : vector<16x32xf32>
    %10 = arith.mulf %9, %9 : vector<16x32xf32>
    %cst_6 = arith.constant dense<0.000000e+00> : vector<16xf32>
    %11 = vector.multi_reduction <add>, %10, %cst_6 [1] : vector<16x32xf32> to vector<16xf32>
    %12 = vector.shape_cast %11 : vector<16xf32> to vector<16x1xf32>
    %cst_7 = arith.constant 3.200000e+01 : f32
    %13 = vector.broadcast %cst_7 : f32 to vector<16x1xf32>
    %14 = arith.divf %12, %13 : vector<16x1xf32>
    %15 = vector.broadcast %7 : vector<16x1xf32> to vector<16x32xf32>
    %16 = arith.subf %1, %15 : vector<16x32xf32>
    %cst_8 = arith.constant 9.99999996E-13 : f32
    %17 = vector.broadcast %cst_8 : f32 to vector<16x1xf32>
    %18 = arith.addf %14, %17 : vector<16x1xf32>
    %19 = math.rsqrt %18 : vector<16x1xf32>
    %20 = vector.broadcast %19 : vector<16x1xf32> to vector<16x32xf32>
    %21 = arith.mulf %16, %20 : vector<16x32xf32>
    %22 = vector.broadcast %2 : vector<1x32xf32> to vector<16x32xf32>
    %23 = arith.mulf %21, %22 : vector<16x32xf32>
    %24 = vector.broadcast %3 : vector<1x32xf32> to vector<16x32xf32>
    %25 = arith.addf %23, %24 : vector<16x32xf32>
    %c0_9 = arith.constant 0 : index
    %c0_10 = arith.constant 0 : index
    %26 = vector.load %arg2[%c0_9, %c0_10] : memref<648x128xf32, #tpu.memory_space<vmem>>, vector<32x96xf32>
    %cst_11 = arith.constant dense<0.000000e+00> : vector<16x96xf32>
    %27 = tpu.matmul %25, %26, %cst_11 {dimension_numbers = #tpu.dot_dimension_numbers<[1], [0], [0], [1], [0, 0, 1, 1], [], []>} : vector<16x32xf32>, vector<32x96xf32>, vector<16x96xf32> -> vector<16x96xf32>
    %c32 = arith.constant 32 : index
    %c0_12 = arith.constant 0 : index
    %28 = vector.load %arg2[%c32, %c0_12] : memref<648x128xf32, #tpu.memory_space<vmem>>, vector<1x96xf32>
    %29 = vector.broadcast %28 : vector<1x96xf32> to vector<16x96xf32>
    %30 = arith.addf %27, %29 : vector<16x96xf32>
    %c224 = arith.constant 224 : index
    %c0_13 = arith.constant 0 : index
    %31 = vector.load %arg2[%c224, %c0_13] : memref<648x128xf32, #tpu.memory_space<vmem>>, vector<4x32xf32>
    %c232 = arith.constant 232 : index
    %c0_14 = arith.constant 0 : index
    %32 = vector.load %arg2[%c232, %c0_14] : memref<648x128xf32, #tpu.memory_space<vmem>>, vector<4x32xf32>
    %33 = vector.extract_strided_slice %30 {offsets = [0, 0], sizes = [16, 8], strides = [1, 1]} : vector<16x96xf32> to vector<16x8xf32>
    %34 = vector.extract_strided_slice %30 {offsets = [0, 32], sizes = [16, 8], strides = [1, 1]} : vector<16x96xf32> to vector<16x8xf32>
    %35 = vector.extract_strided_slice %30 {offsets = [0, 64], sizes = [16, 8], strides = [1, 1]} : vector<16x96xf32> to vector<16x8xf32>
    %36 = vector.extract_strided_slice %31 {offsets = [0, 0], sizes = [4, 8], strides = [1, 1]} : vector<4x32xf32> to vector<4x8xf32>
    %37 = tpu.concatenate %36, %34 in 0 : vector<4x8xf32>, vector<16x8xf32> -> vector<20x8xf32>
    %38 = vector.extract_strided_slice %32 {offsets = [0, 0], sizes = [4, 8], strides = [1, 1]} : vector<4x32xf32> to vector<4x8xf32>
    %39 = tpu.concatenate %38, %35 in 0 : vector<4x8xf32>, vector<16x8xf32> -> vector<20x8xf32>
    %cst_15 = arith.constant dense<0.000000e+00> : vector<16x20xf32>
    %40 = tpu.matmul %33, %37, %cst_15 {dimension_numbers = #tpu.dot_dimension_numbers<[1], [1], [0], [0], [0, 0, 1, 0], [], []>} : vector<16x8xf32>, vector<20x8xf32>, vector<16x20xf32> -> vector<16x20xf32>
    %41 = arith.addf %40, %0 : vector<16x20xf32>
    %cst_16 = arith.constant dense<0xFF800000> : vector<16xf32>
    %42 = vector.multi_reduction <maximumf>, %41, %cst_16 [1] : vector<16x20xf32> to vector<16xf32>
    %43 = vector.shape_cast %42 : vector<16xf32> to vector<16x1xf32>
    %44 = vector.broadcast %43 : vector<16x1xf32> to vector<16x20xf32>
    %45 = arith.subf %41, %44 : vector<16x20xf32>
    %46 = math.exp %45 : vector<16x20xf32>
    %cst_17 = arith.constant dense<0.000000e+00> : vector<16xf32>
    %47 = vector.multi_reduction <add>, %46, %cst_17 [1] : vector<16x20xf32> to vector<16xf32>
    %48 = vector.shape_cast %47 : vector<16xf32> to vector<16x1xf32>
    %49 = vector.broadcast %48 : vector<16x1xf32> to vector<16x20xf32>
    %50 = arith.divf %46, %49 : vector<16x20xf32>
    %cst_18 = arith.constant dense<0.000000e+00> : vector<16x8xf32>
    %51 = tpu.matmul %50, %39, %cst_18 {dimension_numbers = #tpu.dot_dimension_numbers<[1], [0], [0], [1], [0, 0, 1, 1], [], []>} : vector<16x20xf32>, vector<20x8xf32>, vector<16x8xf32> -> vector<16x8xf32>
    %52 = vector.extract_strided_slice %30 {offsets = [0, 8], sizes = [16, 8], strides = [1, 1]} : vector<16x96xf32> to vector<16x8xf32>
    %53 = vector.extract_strided_slice %30 {offsets = [0, 40], sizes = [16, 8], strides = [1, 1]} : vector<16x96xf32> to vector<16x8xf32>
    %54 = vector.extract_strided_slice %30 {offsets = [0, 72], sizes = [16, 8], strides = [1, 1]} : vector<16x96xf32> to vector<16x8xf32>
    %55 = vector.extract_strided_slice %31 {offsets = [0, 8], sizes = [4, 8], strides = [1, 1]} : vector<4x32xf32> to vector<4x8xf32>
    %56 = tpu.concatenate %55, %53 in 0 : vector<4x8xf32>, vector<16x8xf32> -> vector<20x8xf32>
    %57 = vector.extract_strided_slice %32 {offsets = [0, 8], sizes = [4, 8], strides = [1, 1]} : vector<4x32xf32> to vector<4x8xf32>
    %58 = tpu.concatenate %57, %54 in 0 : vector<4x8xf32>, vector<16x8xf32> -> vector<20x8xf32>
    %cst_19 = arith.constant dense<0.000000e+00> : vector<16x20xf32>
    %59 = tpu.matmul %52, %56, %cst_19 {dimension_numbers = #tpu.dot_dimension_numbers<[1], [1], [0], [0], [0, 0, 1, 0], [], []>} : vector<16x8xf32>, vector<20x8xf32>, vector<16x20xf32> -> vector<16x20xf32>
    %60 = arith.addf %59, %0 : vector<16x20xf32>
    %cst_20 = arith.constant dense<0xFF800000> : vector<16xf32>
    %61 = vector.multi_reduction <maximumf>, %60, %cst_20 [1] : vector<16x20xf32> to vector<16xf32>
    %62 = vector.shape_cast %61 : vector<16xf32> to vector<16x1xf32>
    %63 = vector.broadcast %62 : vector<16x1xf32> to vector<16x20xf32>
    %64 = arith.subf %60, %63 : vector<16x20xf32>
    %65 = math.exp %64 : vector<16x20xf32>
    %cst_21 = arith.constant dense<0.000000e+00> : vector<16xf32>
    %66 = vector.multi_reduction <add>, %65, %cst_21 [1] : vector<16x20xf32> to vector<16xf32>
    %67 = vector.shape_cast %66 : vector<16xf32> to vector<16x1xf32>
    %68 = vector.broadcast %67 : vector<16x1xf32> to vector<16x20xf32>
    %69 = arith.divf %65, %68 : vector<16x20xf32>
    %cst_22 = arith.constant dense<0.000000e+00> : vector<16x8xf32>
    %70 = tpu.matmul %69, %58, %cst_22 {dimension_numbers = #tpu.dot_dimension_numbers<[1], [0], [0], [1], [0, 0, 1, 1], [], []>} : vector<16x20xf32>, vector<20x8xf32>, vector<16x8xf32> -> vector<16x8xf32>
    %71 = vector.extract_strided_slice %30 {offsets = [0, 16], sizes = [16, 8], strides = [1, 1]} : vector<16x96xf32> to vector<16x8xf32>
    %72 = vector.extract_strided_slice %30 {offsets = [0, 48], sizes = [16, 8], strides = [1, 1]} : vector<16x96xf32> to vector<16x8xf32>
    %73 = vector.extract_strided_slice %30 {offsets = [0, 80], sizes = [16, 8], strides = [1, 1]} : vector<16x96xf32> to vector<16x8xf32>
    %74 = vector.extract_strided_slice %31 {offsets = [0, 16], sizes = [4, 8], strides = [1, 1]} : vector<4x32xf32> to vector<4x8xf32>
    %75 = tpu.concatenate %74, %72 in 0 : vector<4x8xf32>, vector<16x8xf32> -> vector<20x8xf32>
    %76 = vector.extract_strided_slice %32 {offsets = [0, 16], sizes = [4, 8], strides = [1, 1]} : vector<4x32xf32> to vector<4x8xf32>
    %77 = tpu.concatenate %76, %73 in 0 : vector<4x8xf32>, vector<16x8xf32> -> vector<20x8xf32>
    %cst_23 = arith.constant dense<0.000000e+00> : vector<16x20xf32>
    %78 = tpu.matmul %71, %75, %cst_23 {dimension_numbers = #tpu.dot_dimension_numbers<[1], [1], [0], [0], [0, 0, 1, 0], [], []>} : vector<16x8xf32>, vector<20x8xf32>, vector<16x20xf32> -> vector<16x20xf32>
    %79 = arith.addf %78, %0 : vector<16x20xf32>
    %cst_24 = arith.constant dense<0xFF800000> : vector<16xf32>
    %80 = vector.multi_reduction <maximumf>, %79, %cst_24 [1] : vector<16x20xf32> to vector<16xf32>
    %81 = vector.shape_cast %80 : vector<16xf32> to vector<16x1xf32>
    %82 = vector.broadcast %81 : vector<16x1xf32> to vector<16x20xf32>
    %83 = arith.subf %79, %82 : vector<16x20xf32>
    %84 = math.exp %83 : vector<16x20xf32>
    %cst_25 = arith.constant dense<0.000000e+00> : vector<16xf32>
    %85 = vector.multi_reduction <add>, %84, %cst_25 [1] : vector<16x20xf32> to vector<16xf32>
    %86 = vector.shape_cast %85 : vector<16xf32> to vector<16x1xf32>
    %87 = vector.broadcast %86 : vector<16x1xf32> to vector<16x20xf32>
    %88 = arith.divf %84, %87 : vector<16x20xf32>
    %cst_26 = arith.constant dense<0.000000e+00> : vector<16x8xf32>
    %89 = tpu.matmul %88, %77, %cst_26 {dimension_numbers = #tpu.dot_dimension_numbers<[1], [0], [0], [1], [0, 0, 1, 1], [], []>} : vector<16x20xf32>, vector<20x8xf32>, vector<16x8xf32> -> vector<16x8xf32>
    %90 = vector.extract_strided_slice %30 {offsets = [0, 24], sizes = [16, 8], strides = [1, 1]} : vector<16x96xf32> to vector<16x8xf32>
    %91 = vector.extract_strided_slice %30 {offsets = [0, 56], sizes = [16, 8], strides = [1, 1]} : vector<16x96xf32> to vector<16x8xf32>
    %92 = vector.extract_strided_slice %30 {offsets = [0, 88], sizes = [16, 8], strides = [1, 1]} : vector<16x96xf32> to vector<16x8xf32>
    %93 = vector.extract_strided_slice %31 {offsets = [0, 24], sizes = [4, 8], strides = [1, 1]} : vector<4x32xf32> to vector<4x8xf32>
    %94 = tpu.concatenate %93, %91 in 0 : vector<4x8xf32>, vector<16x8xf32> -> vector<20x8xf32>
    %95 = vector.extract_strided_slice %32 {offsets = [0, 24], sizes = [4, 8], strides = [1, 1]} : vector<4x32xf32> to vector<4x8xf32>
    %96 = tpu.concatenate %95, %92 in 0 : vector<4x8xf32>, vector<16x8xf32> -> vector<20x8xf32>
    %cst_27 = arith.constant dense<0.000000e+00> : vector<16x20xf32>
    %97 = tpu.matmul %90, %94, %cst_27 {dimension_numbers = #tpu.dot_dimension_numbers<[1], [1], [0], [0], [0, 0, 1, 0], [], []>} : vector<16x8xf32>, vector<20x8xf32>, vector<16x20xf32> -> vector<16x20xf32>
    %98 = arith.addf %97, %0 : vector<16x20xf32>
    %cst_28 = arith.constant dense<0xFF800000> : vector<16xf32>
    %99 = vector.multi_reduction <maximumf>, %98, %cst_28 [1] : vector<16x20xf32> to vector<16xf32>
    %100 = vector.shape_cast %99 : vector<16xf32> to vector<16x1xf32>
    %101 = vector.broadcast %100 : vector<16x1xf32> to vector<16x20xf32>
    %102 = arith.subf %98, %101 : vector<16x20xf32>
    %103 = math.exp %102 : vector<16x20xf32>
    %cst_29 = arith.constant dense<0.000000e+00> : vector<16xf32>
    %104 = vector.multi_reduction <add>, %103, %cst_29 [1] : vector<16x20xf32> to vector<16xf32>
    %105 = vector.shape_cast %104 : vector<16xf32> to vector<16x1xf32>
    %106 = vector.broadcast %105 : vector<16x1xf32> to vector<16x20xf32>
    %107 = arith.divf %103, %106 : vector<16x20xf32>
    %cst_30 = arith.constant dense<0.000000e+00> : vector<16x8xf32>
    %108 = tpu.matmul %107, %96, %cst_30 {dimension_numbers = #tpu.dot_dimension_numbers<[1], [0], [0], [1], [0, 0, 1, 1], [], []>} : vector<16x20xf32>, vector<20x8xf32>, vector<16x8xf32> -> vector<16x8xf32>
    %109 = tpu.concatenate %51, %70, %89, %108 in 1 : vector<16x8xf32>, vector<16x8xf32>, vector<16x8xf32>, vector<16x8xf32> -> vector<16x32xf32>
    %c40 = arith.constant 40 : index
    %c0_31 = arith.constant 0 : index
    %110 = vector.load %arg2[%c40, %c0_31] : memref<648x128xf32, #tpu.memory_space<vmem>>, vector<32x32xf32>
    %cst_32 = arith.constant dense<0.000000e+00> : vector<16x32xf32>
    %111 = tpu.matmul %109, %110, %cst_32 {dimension_numbers = #tpu.dot_dimension_numbers<[1], [0], [0], [1], [0, 0, 1, 1], [], []>} : vector<16x32xf32>, vector<32x32xf32>, vector<16x32xf32> -> vector<16x32xf32>
    %c72 = arith.constant 72 : index
    %c0_33 = arith.constant 0 : index
    %112 = vector.load %arg2[%c72, %c0_33] : memref<648x128xf32, #tpu.memory_space<vmem>>, vector<1x32xf32>
    %113 = vector.broadcast %112 : vector<1x32xf32> to vector<16x32xf32>
    %114 = arith.addf %111, %113 : vector<16x32xf32>
    %115 = arith.addf %114, %25 : vector<16x32xf32>
    %c80 = arith.constant 80 : index
    %c0_34 = arith.constant 0 : index
    %116 = vector.load %arg2[%c80, %c0_34] : memref<648x128xf32, #tpu.memory_space<vmem>>, vector<1x32xf32>
    %c88 = arith.constant 88 : index
    %c0_35 = arith.constant 0 : index
    %117 = vector.load %arg2[%c88, %c0_35] : memref<648x128xf32, #tpu.memory_space<vmem>>, vector<1x32xf32>
    %cst_36 = arith.constant dense<0.000000e+00> : vector<16xf32>
    %118 = vector.multi_reduction <add>, %115, %cst_36 [1] : vector<16x32xf32> to vector<16xf32>
    %119 = vector.shape_cast %118 : vector<16xf32> to vector<16x1xf32>
    %cst_37 = arith.constant 3.200000e+01 : f32
    %120 = vector.broadcast %cst_37 : f32 to vector<16x1xf32>
    %121 = arith.divf %119, %120 : vector<16x1xf32>
    %122 = vector.broadcast %121 : vector<16x1xf32> to vector<16x32xf32>
    %123 = arith.subf %115, %122 : vector<16x32xf32>
    %124 = arith.mulf %123, %123 : vector<16x32xf32>
    %cst_38 = arith.constant dense<0.000000e+00> : vector<16xf32>
    %125 = vector.multi_reduction <add>, %124, %cst_38 [1] : vector<16x32xf32> to vector<16xf32>
    %126 = vector.shape_cast %125 : vector<16xf32> to vector<16x1xf32>
    %cst_39 = arith.constant 3.200000e+01 : f32
    %127 = vector.broadcast %cst_39 : f32 to vector<16x1xf32>
    %128 = arith.divf %126, %127 : vector<16x1xf32>
    %129 = vector.broadcast %121 : vector<16x1xf32> to vector<16x32xf32>
    %130 = arith.subf %115, %129 : vector<16x32xf32>
    %cst_40 = arith.constant 9.99999996E-13 : f32
    %131 = vector.broadcast %cst_40 : f32 to vector<16x1xf32>
    %132 = arith.addf %128, %131 : vector<16x1xf32>
    %133 = math.rsqrt %132 : vector<16x1xf32>
    %134 = vector.broadcast %133 : vector<16x1xf32> to vector<16x32xf32>
    %135 = arith.mulf %130, %134 : vector<16x32xf32>
    %136 = vector.broadcast %116 : vector<1x32xf32> to vector<16x32xf32>
    %137 = arith.mulf %135, %136 : vector<16x32xf32>
    %138 = vector.broadcast %117 : vector<1x32xf32> to vector<16x32xf32>
    %139 = arith.addf %137, %138 : vector<16x32xf32>
    %c96 = arith.constant 96 : index
    %c0_41 = arith.constant 0 : index
    %140 = vector.load %arg2[%c96, %c0_41] : memref<648x128xf32, #tpu.memory_space<vmem>>, vector<32x64xf32>
    %cst_42 = arith.constant dense<0.000000e+00> : vector<16x64xf32>
    %141 = tpu.matmul %139, %140, %cst_42 {dimension_numbers = #tpu.dot_dimension_numbers<[1], [0], [0], [1], [0, 0, 1, 1], [], []>} : vector<16x32xf32>, vector<32x64xf32>, vector<16x64xf32> -> vector<16x64xf32>
    %c128 = arith.constant 128 : index
    %c0_43 = arith.constant 0 : index
    %142 = vector.load %arg2[%c128, %c0_43] : memref<648x128xf32, #tpu.memory_space<vmem>>, vector<1x64xf32>
    %143 = vector.broadcast %142 : vector<1x64xf32> to vector<16x64xf32>
    %144 = arith.addf %141, %143 : vector<16x64xf32>
    %145 = arith.mulf %144, %144 : vector<16x64xf32>
    %146 = arith.mulf %144, %145 : vector<16x64xf32>
    %cst_44 = arith.constant 4.471500e-02 : f32
    %147 = vector.broadcast %cst_44 : f32 to vector<16x64xf32>
    %148 = arith.mulf %147, %146 : vector<16x64xf32>
    %149 = arith.addf %144, %148 : vector<16x64xf32>
    %cst_45 = arith.constant 0.797884583 : f32
    %150 = vector.broadcast %cst_45 : f32 to vector<16x64xf32>
    %151 = arith.mulf %150, %149 : vector<16x64xf32>
    %152 = math.tanh %151 : vector<16x64xf32>
    %cst_46 = arith.constant 1.000000e+00 : f32
    %153 = vector.broadcast %cst_46 : f32 to vector<16x64xf32>
    %154 = arith.addf %153, %152 : vector<16x64xf32>
    %cst_47 = arith.constant 5.000000e-01 : f32
    %155 = vector.broadcast %cst_47 : f32 to vector<16x64xf32>
    %156 = arith.mulf %155, %154 : vector<16x64xf32>
    %157 = arith.mulf %144, %156 : vector<16x64xf32>
    %c136 = arith.constant 136 : index
    %c0_48 = arith.constant 0 : index
    %158 = vector.load %arg2[%c136, %c0_48] : memref<648x128xf32, #tpu.memory_space<vmem>>, vector<64x32xf32>
    %cst_49 = arith.constant dense<0.000000e+00> : vector<16x32xf32>
    %159 = tpu.matmul %157, %158, %cst_49 {dimension_numbers = #tpu.dot_dimension_numbers<[1], [0], [0], [1], [0, 0, 1, 1], [], []>} : vector<16x64xf32>, vector<64x32xf32>, vector<16x32xf32> -> vector<16x32xf32>
    %c200 = arith.constant 200 : index
    %c0_50 = arith.constant 0 : index
    %160 = vector.load %arg2[%c200, %c0_50] : memref<648x128xf32, #tpu.memory_space<vmem>>, vector<1x32xf32>
    %161 = vector.broadcast %160 : vector<1x32xf32> to vector<16x32xf32>
    %162 = arith.addf %159, %161 : vector<16x32xf32>
    %163 = arith.addf %162, %139 : vector<16x32xf32>
    %c208 = arith.constant 208 : index
    %c0_51 = arith.constant 0 : index
    %164 = vector.load %arg2[%c208, %c0_51] : memref<648x128xf32, #tpu.memory_space<vmem>>, vector<1x32xf32>
    %c216 = arith.constant 216 : index
    %c0_52 = arith.constant 0 : index
    %165 = vector.load %arg2[%c216, %c0_52] : memref<648x128xf32, #tpu.memory_space<vmem>>, vector<1x32xf32>
    %cst_53 = arith.constant dense<0.000000e+00> : vector<16xf32>
    %166 = vector.multi_reduction <add>, %163, %cst_53 [1] : vector<16x32xf32> to vector<16xf32>
    %167 = vector.shape_cast %166 : vector<16xf32> to vector<16x1xf32>
    %cst_54 = arith.constant 3.200000e+01 : f32
    %168 = vector.broadcast %cst_54 : f32 to vector<16x1xf32>
    %169 = arith.divf %167, %168 : vector<16x1xf32>
    %170 = vector.broadcast %169 : vector<16x1xf32> to vector<16x32xf32>
    %171 = arith.subf %163, %170 : vector<16x32xf32>
    %172 = arith.mulf %171, %171 : vector<16x32xf32>
    %cst_55 = arith.constant dense<0.000000e+00> : vector<16xf32>
    %173 = vector.multi_reduction <add>, %172, %cst_55 [1] : vector<16x32xf32> to vector<16xf32>
    %174 = vector.shape_cast %173 : vector<16xf32> to vector<16x1xf32>
    %cst_56 = arith.constant 3.200000e+01 : f32
    %175 = vector.broadcast %cst_56 : f32 to vector<16x1xf32>
    %176 = arith.divf %174, %175 : vector<16x1xf32>
    %177 = vector.broadcast %169 : vector<16x1xf32> to vector<16x32xf32>
    %178 = arith.subf %163, %177 : vector<16x32xf32>
    %cst_57 = arith.constant 9.99999996E-13 : f32
    %179 = vector.broadcast %cst_57 : f32 to vector<16x1xf32>
    %180 = arith.addf %176, %179 : vector<16x1xf32>
    %181 = math.rsqrt %180 : vector<16x1xf32>
    %182 = vector.broadcast %181 : vector<16x1xf32> to vector<16x32xf32>
    %183 = arith.mulf %178, %182 : vector<16x32xf32>
    %184 = vector.broadcast %164 : vector<1x32xf32> to vector<16x32xf32>
    %185 = arith.mulf %183, %184 : vector<16x32xf32>
    %186 = vector.broadcast %165 : vector<1x32xf32> to vector<16x32xf32>
    %187 = arith.addf %185, %186 : vector<16x32xf32>
    %c240 = arith.constant 240 : index
    %c0_58 = arith.constant 0 : index
    %188 = vector.load %arg2[%c240, %c0_58] : memref<648x128xf32, #tpu.memory_space<vmem>>, vector<32x96xf32>
    %cst_59 = arith.constant dense<0.000000e+00> : vector<16x96xf32>
    %189 = tpu.matmul %187, %188, %cst_59 {dimension_numbers = #tpu.dot_dimension_numbers<[1], [0], [0], [1], [0, 0, 1, 1], [], []>} : vector<16x32xf32>, vector<32x96xf32>, vector<16x96xf32> -> vector<16x96xf32>
    %c272 = arith.constant 272 : index
    %c0_60 = arith.constant 0 : index
    %190 = vector.load %arg2[%c272, %c0_60] : memref<648x128xf32, #tpu.memory_space<vmem>>, vector<1x96xf32>
    %191 = vector.broadcast %190 : vector<1x96xf32> to vector<16x96xf32>
    %192 = arith.addf %189, %191 : vector<16x96xf32>
    %c464 = arith.constant 464 : index
    %c0_61 = arith.constant 0 : index
    %193 = vector.load %arg2[%c464, %c0_61] : memref<648x128xf32, #tpu.memory_space<vmem>>, vector<4x32xf32>
    %c472 = arith.constant 472 : index
    %c0_62 = arith.constant 0 : index
    %194 = vector.load %arg2[%c472, %c0_62] : memref<648x128xf32, #tpu.memory_space<vmem>>, vector<4x32xf32>
    %195 = vector.extract_strided_slice %192 {offsets = [0, 0], sizes = [16, 8], strides = [1, 1]} : vector<16x96xf32> to vector<16x8xf32>
    %196 = vector.extract_strided_slice %192 {offsets = [0, 32], sizes = [16, 8], strides = [1, 1]} : vector<16x96xf32> to vector<16x8xf32>
    %197 = vector.extract_strided_slice %192 {offsets = [0, 64], sizes = [16, 8], strides = [1, 1]} : vector<16x96xf32> to vector<16x8xf32>
    %198 = vector.extract_strided_slice %193 {offsets = [0, 0], sizes = [4, 8], strides = [1, 1]} : vector<4x32xf32> to vector<4x8xf32>
    %199 = tpu.concatenate %198, %196 in 0 : vector<4x8xf32>, vector<16x8xf32> -> vector<20x8xf32>
    %200 = vector.extract_strided_slice %194 {offsets = [0, 0], sizes = [4, 8], strides = [1, 1]} : vector<4x32xf32> to vector<4x8xf32>
    %201 = tpu.concatenate %200, %197 in 0 : vector<4x8xf32>, vector<16x8xf32> -> vector<20x8xf32>
    %cst_63 = arith.constant dense<0.000000e+00> : vector<16x20xf32>
    %202 = tpu.matmul %195, %199, %cst_63 {dimension_numbers = #tpu.dot_dimension_numbers<[1], [1], [0], [0], [0, 0, 1, 0], [], []>} : vector<16x8xf32>, vector<20x8xf32>, vector<16x20xf32> -> vector<16x20xf32>
    %203 = arith.addf %202, %0 : vector<16x20xf32>
    %cst_64 = arith.constant dense<0xFF800000> : vector<16xf32>
    %204 = vector.multi_reduction <maximumf>, %203, %cst_64 [1] : vector<16x20xf32> to vector<16xf32>
    %205 = vector.shape_cast %204 : vector<16xf32> to vector<16x1xf32>
    %206 = vector.broadcast %205 : vector<16x1xf32> to vector<16x20xf32>
    %207 = arith.subf %203, %206 : vector<16x20xf32>
    %208 = math.exp %207 : vector<16x20xf32>
    %cst_65 = arith.constant dense<0.000000e+00> : vector<16xf32>
    %209 = vector.multi_reduction <add>, %208, %cst_65 [1] : vector<16x20xf32> to vector<16xf32>
    %210 = vector.shape_cast %209 : vector<16xf32> to vector<16x1xf32>
    %211 = vector.broadcast %210 : vector<16x1xf32> to vector<16x20xf32>
    %212 = arith.divf %208, %211 : vector<16x20xf32>
    %cst_66 = arith.constant dense<0.000000e+00> : vector<16x8xf32>
    %213 = tpu.matmul %212, %201, %cst_66 {dimension_numbers = #tpu.dot_dimension_numbers<[1], [0], [0], [1], [0, 0, 1, 1], [], []>} : vector<16x20xf32>, vector<20x8xf32>, vector<16x8xf32> -> vector<16x8xf32>
    %214 = vector.extract_strided_slice %192 {offsets = [0, 8], sizes = [16, 8], strides = [1, 1]} : vector<16x96xf32> to vector<16x8xf32>
    %215 = vector.extract_strided_slice %192 {offsets = [0, 40], sizes = [16, 8], strides = [1, 1]} : vector<16x96xf32> to vector<16x8xf32>
    %216 = vector.extract_strided_slice %192 {offsets = [0, 72], sizes = [16, 8], strides = [1, 1]} : vector<16x96xf32> to vector<16x8xf32>
    %217 = vector.extract_strided_slice %193 {offsets = [0, 8], sizes = [4, 8], strides = [1, 1]} : vector<4x32xf32> to vector<4x8xf32>
    %218 = tpu.concatenate %217, %215 in 0 : vector<4x8xf32>, vector<16x8xf32> -> vector<20x8xf32>
    %219 = vector.extract_strided_slice %194 {offsets = [0, 8], sizes = [4, 8], strides = [1, 1]} : vector<4x32xf32> to vector<4x8xf32>
    %220 = tpu.concatenate %219, %216 in 0 : vector<4x8xf32>, vector<16x8xf32> -> vector<20x8xf32>
    %cst_67 = arith.constant dense<0.000000e+00> : vector<16x20xf32>
    %221 = tpu.matmul %214, %218, %cst_67 {dimension_numbers = #tpu.dot_dimension_numbers<[1], [1], [0], [0], [0, 0, 1, 0], [], []>} : vector<16x8xf32>, vector<20x8xf32>, vector<16x20xf32> -> vector<16x20xf32>
    %222 = arith.addf %221, %0 : vector<16x20xf32>
    %cst_68 = arith.constant dense<0xFF800000> : vector<16xf32>
    %223 = vector.multi_reduction <maximumf>, %222, %cst_68 [1] : vector<16x20xf32> to vector<16xf32>
    %224 = vector.shape_cast %223 : vector<16xf32> to vector<16x1xf32>
    %225 = vector.broadcast %224 : vector<16x1xf32> to vector<16x20xf32>
    %226 = arith.subf %222, %225 : vector<16x20xf32>
    %227 = math.exp %226 : vector<16x20xf32>
    %cst_69 = arith.constant dense<0.000000e+00> : vector<16xf32>
    %228 = vector.multi_reduction <add>, %227, %cst_69 [1] : vector<16x20xf32> to vector<16xf32>
    %229 = vector.shape_cast %228 : vector<16xf32> to vector<16x1xf32>
    %230 = vector.broadcast %229 : vector<16x1xf32> to vector<16x20xf32>
    %231 = arith.divf %227, %230 : vector<16x20xf32>
    %cst_70 = arith.constant dense<0.000000e+00> : vector<16x8xf32>
    %232 = tpu.matmul %231, %220, %cst_70 {dimension_numbers = #tpu.dot_dimension_numbers<[1], [0], [0], [1], [0, 0, 1, 1], [], []>} : vector<16x20xf32>, vector<20x8xf32>, vector<16x8xf32> -> vector<16x8xf32>
    %233 = vector.extract_strided_slice %192 {offsets = [0, 16], sizes = [16, 8], strides = [1, 1]} : vector<16x96xf32> to vector<16x8xf32>
    %234 = vector.extract_strided_slice %192 {offsets = [0, 48], sizes = [16, 8], strides = [1, 1]} : vector<16x96xf32> to vector<16x8xf32>
    %235 = vector.extract_strided_slice %192 {offsets = [0, 80], sizes = [16, 8], strides = [1, 1]} : vector<16x96xf32> to vector<16x8xf32>
    %236 = vector.extract_strided_slice %193 {offsets = [0, 16], sizes = [4, 8], strides = [1, 1]} : vector<4x32xf32> to vector<4x8xf32>
    %237 = tpu.concatenate %236, %234 in 0 : vector<4x8xf32>, vector<16x8xf32> -> vector<20x8xf32>
    %238 = vector.extract_strided_slice %194 {offsets = [0, 16], sizes = [4, 8], strides = [1, 1]} : vector<4x32xf32> to vector<4x8xf32>
    %239 = tpu.concatenate %238, %235 in 0 : vector<4x8xf32>, vector<16x8xf32> -> vector<20x8xf32>
    %cst_71 = arith.constant dense<0.000000e+00> : vector<16x20xf32>
    %240 = tpu.matmul %233, %237, %cst_71 {dimension_numbers = #tpu.dot_dimension_numbers<[1], [1], [0], [0], [0, 0, 1, 0], [], []>} : vector<16x8xf32>, vector<20x8xf32>, vector<16x20xf32> -> vector<16x20xf32>
    %241 = arith.addf %240, %0 : vector<16x20xf32>
    %cst_72 = arith.constant dense<0xFF800000> : vector<16xf32>
    %242 = vector.multi_reduction <maximumf>, %241, %cst_72 [1] : vector<16x20xf32> to vector<16xf32>
    %243 = vector.shape_cast %242 : vector<16xf32> to vector<16x1xf32>
    %244 = vector.broadcast %243 : vector<16x1xf32> to vector<16x20xf32>
    %245 = arith.subf %241, %244 : vector<16x20xf32>
    %246 = math.exp %245 : vector<16x20xf32>
    %cst_73 = arith.constant dense<0.000000e+00> : vector<16xf32>
    %247 = vector.multi_reduction <add>, %246, %cst_73 [1] : vector<16x20xf32> to vector<16xf32>
    %248 = vector.shape_cast %247 : vector<16xf32> to vector<16x1xf32>
    %249 = vector.broadcast %248 : vector<16x1xf32> to vector<16x20xf32>
    %250 = arith.divf %246, %249 : vector<16x20xf32>
    %cst_74 = arith.constant dense<0.000000e+00> : vector<16x8xf32>
    %251 = tpu.matmul %250, %239, %cst_74 {dimension_numbers = #tpu.dot_dimension_numbers<[1], [0], [0], [1], [0, 0, 1, 1], [], []>} : vector<16x20xf32>, vector<20x8xf32>, vector<16x8xf32> -> vector<16x8xf32>
    %252 = vector.extract_strided_slice %192 {offsets = [0, 24], sizes = [16, 8], strides = [1, 1]} : vector<16x96xf32> to vector<16x8xf32>
    %253 = vector.extract_strided_slice %192 {offsets = [0, 56], sizes = [16, 8], strides = [1, 1]} : vector<16x96xf32> to vector<16x8xf32>
    %254 = vector.extract_strided_slice %192 {offsets = [0, 88], sizes = [16, 8], strides = [1, 1]} : vector<16x96xf32> to vector<16x8xf32>
    %255 = vector.extract_strided_slice %193 {offsets = [0, 24], sizes = [4, 8], strides = [1, 1]} : vector<4x32xf32> to vector<4x8xf32>
    %256 = tpu.concatenate %255, %253 in 0 : vector<4x8xf32>, vector<16x8xf32> -> vector<20x8xf32>
    %257 = vector.extract_strided_slice %194 {offsets = [0, 24], sizes = [4, 8], strides = [1, 1]} : vector<4x32xf32> to vector<4x8xf32>
    %258 = tpu.concatenate %257, %254 in 0 : vector<4x8xf32>, vector<16x8xf32> -> vector<20x8xf32>
    %cst_75 = arith.constant dense<0.000000e+00> : vector<16x20xf32>
    %259 = tpu.matmul %252, %256, %cst_75 {dimension_numbers = #tpu.dot_dimension_numbers<[1], [1], [0], [0], [0, 0, 1, 0], [], []>} : vector<16x8xf32>, vector<20x8xf32>, vector<16x20xf32> -> vector<16x20xf32>
    %260 = arith.addf %259, %0 : vector<16x20xf32>
    %cst_76 = arith.constant dense<0xFF800000> : vector<16xf32>
    %261 = vector.multi_reduction <maximumf>, %260, %cst_76 [1] : vector<16x20xf32> to vector<16xf32>
    %262 = vector.shape_cast %261 : vector<16xf32> to vector<16x1xf32>
    %263 = vector.broadcast %262 : vector<16x1xf32> to vector<16x20xf32>
    %264 = arith.subf %260, %263 : vector<16x20xf32>
    %265 = math.exp %264 : vector<16x20xf32>
    %cst_77 = arith.constant dense<0.000000e+00> : vector<16xf32>
    %266 = vector.multi_reduction <add>, %265, %cst_77 [1] : vector<16x20xf32> to vector<16xf32>
    %267 = vector.shape_cast %266 : vector<16xf32> to vector<16x1xf32>
    %268 = vector.broadcast %267 : vector<16x1xf32> to vector<16x20xf32>
    %269 = arith.divf %265, %268 : vector<16x20xf32>
    %cst_78 = arith.constant dense<0.000000e+00> : vector<16x8xf32>
    %270 = tpu.matmul %269, %258, %cst_78 {dimension_numbers = #tpu.dot_dimension_numbers<[1], [0], [0], [1], [0, 0, 1, 1], [], []>} : vector<16x20xf32>, vector<20x8xf32>, vector<16x8xf32> -> vector<16x8xf32>
    %271 = tpu.concatenate %213, %232, %251, %270 in 1 : vector<16x8xf32>, vector<16x8xf32>, vector<16x8xf32>, vector<16x8xf32> -> vector<16x32xf32>
    %c280 = arith.constant 280 : index
    %c0_79 = arith.constant 0 : index
    %272 = vector.load %arg2[%c280, %c0_79] : memref<648x128xf32, #tpu.memory_space<vmem>>, vector<32x32xf32>
    %cst_80 = arith.constant dense<0.000000e+00> : vector<16x32xf32>
    %273 = tpu.matmul %271, %272, %cst_80 {dimension_numbers = #tpu.dot_dimension_numbers<[1], [0], [0], [1], [0, 0, 1, 1], [], []>} : vector<16x32xf32>, vector<32x32xf32>, vector<16x32xf32> -> vector<16x32xf32>
    %c312 = arith.constant 312 : index
    %c0_81 = arith.constant 0 : index
    %274 = vector.load %arg2[%c312, %c0_81] : memref<648x128xf32, #tpu.memory_space<vmem>>, vector<1x32xf32>
    %275 = vector.broadcast %274 : vector<1x32xf32> to vector<16x32xf32>
    %276 = arith.addf %273, %275 : vector<16x32xf32>
    %277 = arith.addf %276, %187 : vector<16x32xf32>
    %c320 = arith.constant 320 : index
    %c0_82 = arith.constant 0 : index
    %278 = vector.load %arg2[%c320, %c0_82] : memref<648x128xf32, #tpu.memory_space<vmem>>, vector<1x32xf32>
    %c328 = arith.constant 328 : index
    %c0_83 = arith.constant 0 : index
    %279 = vector.load %arg2[%c328, %c0_83] : memref<648x128xf32, #tpu.memory_space<vmem>>, vector<1x32xf32>
    %cst_84 = arith.constant dense<0.000000e+00> : vector<16xf32>
    %280 = vector.multi_reduction <add>, %277, %cst_84 [1] : vector<16x32xf32> to vector<16xf32>
    %281 = vector.shape_cast %280 : vector<16xf32> to vector<16x1xf32>
    %cst_85 = arith.constant 3.200000e+01 : f32
    %282 = vector.broadcast %cst_85 : f32 to vector<16x1xf32>
    %283 = arith.divf %281, %282 : vector<16x1xf32>
    %284 = vector.broadcast %283 : vector<16x1xf32> to vector<16x32xf32>
    %285 = arith.subf %277, %284 : vector<16x32xf32>
    %286 = arith.mulf %285, %285 : vector<16x32xf32>
    %cst_86 = arith.constant dense<0.000000e+00> : vector<16xf32>
    %287 = vector.multi_reduction <add>, %286, %cst_86 [1] : vector<16x32xf32> to vector<16xf32>
    %288 = vector.shape_cast %287 : vector<16xf32> to vector<16x1xf32>
    %cst_87 = arith.constant 3.200000e+01 : f32
    %289 = vector.broadcast %cst_87 : f32 to vector<16x1xf32>
    %290 = arith.divf %288, %289 : vector<16x1xf32>
    %291 = vector.broadcast %283 : vector<16x1xf32> to vector<16x32xf32>
    %292 = arith.subf %277, %291 : vector<16x32xf32>
    %cst_88 = arith.constant 9.99999996E-13 : f32
    %293 = vector.broadcast %cst_88 : f32 to vector<16x1xf32>
    %294 = arith.addf %290, %293 : vector<16x1xf32>
    %295 = math.rsqrt %294 : vector<16x1xf32>
    %296 = vector.broadcast %295 : vector<16x1xf32> to vector<16x32xf32>
    %297 = arith.mulf %292, %296 : vector<16x32xf32>
    %298 = vector.broadcast %278 : vector<1x32xf32> to vector<16x32xf32>
    %299 = arith.mulf %297, %298 : vector<16x32xf32>
    %300 = vector.broadcast %279 : vector<1x32xf32> to vector<16x32xf32>
    %301 = arith.addf %299, %300 : vector<16x32xf32>
    %c336 = arith.constant 336 : index
    %c0_89 = arith.constant 0 : index
    %302 = vector.load %arg2[%c336, %c0_89] : memref<648x128xf32, #tpu.memory_space<vmem>>, vector<32x64xf32>
    %cst_90 = arith.constant dense<0.000000e+00> : vector<16x64xf32>
    %303 = tpu.matmul %301, %302, %cst_90 {dimension_numbers = #tpu.dot_dimension_numbers<[1], [0], [0], [1], [0, 0, 1, 1], [], []>} : vector<16x32xf32>, vector<32x64xf32>, vector<16x64xf32> -> vector<16x64xf32>
    %c368 = arith.constant 368 : index
    %c0_91 = arith.constant 0 : index
    %304 = vector.load %arg2[%c368, %c0_91] : memref<648x128xf32, #tpu.memory_space<vmem>>, vector<1x64xf32>
    %305 = vector.broadcast %304 : vector<1x64xf32> to vector<16x64xf32>
    %306 = arith.addf %303, %305 : vector<16x64xf32>
    %307 = arith.mulf %306, %306 : vector<16x64xf32>
    %308 = arith.mulf %306, %307 : vector<16x64xf32>
    %cst_92 = arith.constant 4.471500e-02 : f32
    %309 = vector.broadcast %cst_92 : f32 to vector<16x64xf32>
    %310 = arith.mulf %309, %308 : vector<16x64xf32>
    %311 = arith.addf %306, %310 : vector<16x64xf32>
    %cst_93 = arith.constant 0.797884583 : f32
    %312 = vector.broadcast %cst_93 : f32 to vector<16x64xf32>
    %313 = arith.mulf %312, %311 : vector<16x64xf32>
    %314 = math.tanh %313 : vector<16x64xf32>
    %cst_94 = arith.constant 1.000000e+00 : f32
    %315 = vector.broadcast %cst_94 : f32 to vector<16x64xf32>
    %316 = arith.addf %315, %314 : vector<16x64xf32>
    %cst_95 = arith.constant 5.000000e-01 : f32
    %317 = vector.broadcast %cst_95 : f32 to vector<16x64xf32>
    %318 = arith.mulf %317, %316 : vector<16x64xf32>
    %319 = arith.mulf %306, %318 : vector<16x64xf32>
    %c376 = arith.constant 376 : index
    %c0_96 = arith.constant 0 : index
    %320 = vector.load %arg2[%c376, %c0_96] : memref<648x128xf32, #tpu.memory_space<vmem>>, vector<64x32xf32>
    %cst_97 = arith.constant dense<0.000000e+00> : vector<16x32xf32>
    %321 = tpu.matmul %319, %320, %cst_97 {dimension_numbers = #tpu.dot_dimension_numbers<[1], [0], [0], [1], [0, 0, 1, 1], [], []>} : vector<16x64xf32>, vector<64x32xf32>, vector<16x32xf32> -> vector<16x32xf32>
    %c440 = arith.constant 440 : index
    %c0_98 = arith.constant 0 : index
    %322 = vector.load %arg2[%c440, %c0_98] : memref<648x128xf32, #tpu.memory_space<vmem>>, vector<1x32xf32>
    %323 = vector.broadcast %322 : vector<1x32xf32> to vector<16x32xf32>
    %324 = arith.addf %321, %323 : vector<16x32xf32>
    %325 = arith.addf %324, %301 : vector<16x32xf32>
    %c448 = arith.constant 448 : index
    %c0_99 = arith.constant 0 : index
    %326 = vector.load %arg2[%c448, %c0_99] : memref<648x128xf32, #tpu.memory_space<vmem>>, vector<1x32xf32>
    %c456 = arith.constant 456 : index
    %c0_100 = arith.constant 0 : index
    %327 = vector.load %arg2[%c456, %c0_100] : memref<648x128xf32, #tpu.memory_space<vmem>>, vector<1x32xf32>
    %cst_101 = arith.constant dense<0.000000e+00> : vector<16xf32>
    %328 = vector.multi_reduction <add>, %325, %cst_101 [1] : vector<16x32xf32> to vector<16xf32>
    %329 = vector.shape_cast %328 : vector<16xf32> to vector<16x1xf32>
    %cst_102 = arith.constant 3.200000e+01 : f32
    %330 = vector.broadcast %cst_102 : f32 to vector<16x1xf32>
    %331 = arith.divf %329, %330 : vector<16x1xf32>
    %332 = vector.broadcast %331 : vector<16x1xf32> to vector<16x32xf32>
    %333 = arith.subf %325, %332 : vector<16x32xf32>
    %334 = arith.mulf %333, %333 : vector<16x32xf32>
    %cst_103 = arith.constant dense<0.000000e+00> : vector<16xf32>
    %335 = vector.multi_reduction <add>, %334, %cst_103 [1] : vector<16x32xf32> to vector<16xf32>
    %336 = vector.shape_cast %335 : vector<16xf32> to vector<16x1xf32>
    %cst_104 = arith.constant 3.200000e+01 : f32
    %337 = vector.broadcast %cst_104 : f32 to vector<16x1xf32>
    %338 = arith.divf %336, %337 : vector<16x1xf32>
    %339 = vector.broadcast %331 : vector<16x1xf32> to vector<16x32xf32>
    %340 = arith.subf %325, %339 : vector<16x32xf32>
    %cst_105 = arith.constant 9.99999996E-13 : f32
    %341 = vector.broadcast %cst_105 : f32 to vector<16x1xf32>
    %342 = arith.addf %338, %341 : vector<16x1xf32>
    %343 = math.rsqrt %342 : vector<16x1xf32>
    %344 = vector.broadcast %343 : vector<16x1xf32> to vector<16x32xf32>
    %345 = arith.mulf %340, %344 : vector<16x32xf32>
    %346 = vector.broadcast %326 : vector<1x32xf32> to vector<16x32xf32>
    %347 = arith.mulf %345, %346 : vector<16x32xf32>
    %348 = vector.broadcast %327 : vector<1x32xf32> to vector<16x32xf32>
    %349 = arith.addf %347, %348 : vector<16x32xf32>
    %c496 = arith.constant 496 : index
    %c0_106 = arith.constant 0 : index
    %350 = vector.load %arg2[%c496, %c0_106] : memref<648x128xf32, #tpu.memory_space<vmem>>, vector<32x128xf32>
    %cst_107 = arith.constant dense<0.000000e+00> : vector<16x128xf32>
    %351 = tpu.matmul %349, %350, %cst_107 {dimension_numbers = #tpu.dot_dimension_numbers<[1], [0], [0], [1], [0, 0, 1, 1], [], []>} : vector<16x32xf32>, vector<32x128xf32>, vector<16x128xf32> -> vector<16x128xf32>
    %c528 = arith.constant 528 : index
    %c0_108 = arith.constant 0 : index
    %352 = vector.load %arg2[%c528, %c0_108] : memref<648x128xf32, #tpu.memory_space<vmem>>, vector<1x128xf32>
    %353 = vector.broadcast %352 : vector<1x128xf32> to vector<16x128xf32>
    %354 = arith.addf %351, %353 : vector<16x128xf32>
    %cst_109 = arith.constant dense<0xFF800000> : vector<16xf32>
    %355 = vector.multi_reduction <maximumf>, %354, %cst_109 [1] : vector<16x128xf32> to vector<16xf32>
    %356 = vector.shape_cast %355 : vector<16xf32> to vector<16x1xf32>
    %357 = vector.broadcast %356 : vector<16x1xf32> to vector<16x128xf32>
    %358 = arith.subf %354, %357 : vector<16x128xf32>
    %359 = math.exp %358 : vector<16x128xf32>
    %cst_110 = arith.constant dense<0.000000e+00> : vector<16xf32>
    %360 = vector.multi_reduction <add>, %359, %cst_110 [1] : vector<16x128xf32> to vector<16xf32>
    %361 = vector.shape_cast %360 : vector<16xf32> to vector<16x1xf32>
    %362 = vector.broadcast %361 : vector<16x1xf32> to vector<16x128xf32>
    %363 = arith.divf %359, %362 : vector<16x128xf32>
    %364 = vector.extract_strided_slice %363 {offsets = [0, 0], sizes = [16, 5], strides = [1, 1]} : vector<16x128xf32> to vector<16x5xf32>
    %c536 = arith.constant 536 : index
    %c0_111 = arith.constant 0 : index
    %365 = vector.load %arg2[%c536, %c0_111] : memref<648x128xf32, #tpu.memory_space<vmem>>, vector<32x37xf32>
    %cst_112 = arith.constant dense<0.000000e+00> : vector<16x37xf32>
    %366 = tpu.matmul %349, %365, %cst_112 {dimension_numbers = #tpu.dot_dimension_numbers<[1], [0], [0], [1], [0, 0, 1, 1], [], []>} : vector<16x32xf32>, vector<32x37xf32>, vector<16x37xf32> -> vector<16x37xf32>
    %c568 = arith.constant 568 : index
    %c0_113 = arith.constant 0 : index
    %367 = vector.load %arg2[%c568, %c0_113] : memref<648x128xf32, #tpu.memory_space<vmem>>, vector<5x37xf32>
    %cst_114 = arith.constant dense<0.000000e+00> : vector<16x37xf32>
    %368 = tpu.matmul %364, %367, %cst_114 {dimension_numbers = #tpu.dot_dimension_numbers<[1], [0], [0], [1], [0, 0, 1, 1], [], []>} : vector<16x5xf32>, vector<5x37xf32>, vector<16x37xf32> -> vector<16x37xf32>
    %369 = arith.addf %366, %368 : vector<16x37xf32>
    %c576 = arith.constant 576 : index
    %c0_115 = arith.constant 0 : index
    %370 = vector.load %arg2[%c576, %c0_115] : memref<648x128xf32, #tpu.memory_space<vmem>>, vector<1x37xf32>
    %371 = vector.broadcast %370 : vector<1x37xf32> to vector<16x37xf32>
    %372 = arith.addf %369, %371 : vector<16x37xf32>
    %373 = math.tanh %372 : vector<16x37xf32>
    %c584 = arith.constant 584 : index
    %c0_116 = arith.constant 0 : index
    %374 = vector.load %arg2[%c584, %c0_116] : memref<648x128xf32, #tpu.memory_space<vmem>>, vector<1x37xf32>
    %c592 = arith.constant 592 : index
    %c0_117 = arith.constant 0 : index
    %375 = vector.load %arg2[%c592, %c0_117] : memref<648x128xf32, #tpu.memory_space<vmem>>, vector<1x37xf32>
    %cst_118 = arith.constant dense<0.000000e+00> : vector<16xf32>
    %376 = vector.multi_reduction <add>, %373, %cst_118 [1] : vector<16x37xf32> to vector<16xf32>
    %377 = vector.shape_cast %376 : vector<16xf32> to vector<16x1xf32>
    %cst_119 = arith.constant 3.700000e+01 : f32
    %378 = vector.broadcast %cst_119 : f32 to vector<16x1xf32>
    %379 = arith.divf %377, %378 : vector<16x1xf32>
    %380 = vector.broadcast %379 : vector<16x1xf32> to vector<16x37xf32>
    %381 = arith.subf %373, %380 : vector<16x37xf32>
    %382 = arith.mulf %381, %381 : vector<16x37xf32>
    %cst_120 = arith.constant dense<0.000000e+00> : vector<16xf32>
    %383 = vector.multi_reduction <add>, %382, %cst_120 [1] : vector<16x37xf32> to vector<16xf32>
    %384 = vector.shape_cast %383 : vector<16xf32> to vector<16x1xf32>
    %cst_121 = arith.constant 3.700000e+01 : f32
    %385 = vector.broadcast %cst_121 : f32 to vector<16x1xf32>
    %386 = arith.divf %384, %385 : vector<16x1xf32>
    %387 = vector.broadcast %379 : vector<16x1xf32> to vector<16x37xf32>
    %388 = arith.subf %373, %387 : vector<16x37xf32>
    %cst_122 = arith.constant 9.99999974E-6 : f32
    %389 = vector.broadcast %cst_122 : f32 to vector<16x1xf32>
    %390 = arith.addf %386, %389 : vector<16x1xf32>
    %391 = math.rsqrt %390 : vector<16x1xf32>
    %392 = vector.broadcast %391 : vector<16x1xf32> to vector<16x37xf32>
    %393 = arith.mulf %388, %392 : vector<16x37xf32>
    %394 = vector.broadcast %374 : vector<1x37xf32> to vector<16x37xf32>
    %395 = arith.mulf %393, %394 : vector<16x37xf32>
    %396 = vector.broadcast %375 : vector<1x37xf32> to vector<16x37xf32>
    %397 = arith.addf %395, %396 : vector<16x37xf32>
    %c600 = arith.constant 600 : index
    %c0_123 = arith.constant 0 : index
    %398 = vector.load %arg2[%c600, %c0_123] : memref<648x128xf32, #tpu.memory_space<vmem>>, vector<37x128xf32>
    %cst_124 = arith.constant dense<0.000000e+00> : vector<16x128xf32>
    %399 = tpu.matmul %397, %398, %cst_124 {dimension_numbers = #tpu.dot_dimension_numbers<[1], [0], [0], [1], [0, 0, 1, 1], [], []>} : vector<16x37xf32>, vector<37x128xf32>, vector<16x128xf32> -> vector<16x128xf32>
    %c640 = arith.constant 640 : index
    %c0_125 = arith.constant 0 : index
    %400 = vector.load %arg2[%c640, %c0_125] : memref<648x128xf32, #tpu.memory_space<vmem>>, vector<1x128xf32>
    %401 = vector.broadcast %400 : vector<1x128xf32> to vector<16x128xf32>
    %402 = arith.addf %399, %401 : vector<16x128xf32>
    %c0_126 = arith.constant 0 : index
    %c0_127 = arith.constant 0 : index
    %403 = vector.load %arg3[%c0_126, %c0_127] : memref<32x128xf32, #tpu.memory_space<vmem>>, vector<16x128xf32>
    tpu.vector_store %arg3[%c0_126, %c0_127], %354 {strides = array<i32>} : memref<32x128xf32, #tpu.memory_space<vmem>>, vector<16x128xf32>,
    %c16 = arith.constant 16 : index
    %c0_128 = arith.constant 0 : index
    %404 = vector.load %arg3[%c16, %c0_128] : memref<32x128xf32, #tpu.memory_space<vmem>>, vector<16x128xf32>
    tpu.vector_store %arg3[%c16, %c0_128], %402 {strides = array<i32>} : memref<32x128xf32, #tpu.memory_space<vmem>>, vector<16x128xf32>,
    return
  }
}

</mosaic_0001>

<llo_original>
// kernel: bert_span_prefix_forward.1
$region0: #{bert_span_prefix_forward.1}
  #allocation0 [shape = 'u32[]', space=smem, size = 0x4, offset = 0x4, fixed_abs, tag = 'smem constant byte address 0x4 - core index']
  #allocation1 [shape = 'u32[144,128]{1,0:T(1,128)}', space=vmem, size = 0x12000, scoped, tag = 'internal scratch']
  %s0 = inlined_call_operand.vmem [shape: f32[16,32], index: 0, kind: input, shape index: {}]
  %s1 = inlined_call_operand.vmem [shape: f32[16,20], index: 1, kind: input, shape index: {}]
  %s2 = inlined_call_operand.hbm [shape: f32[648,128], index: 2, kind: input, shape index: {}]
  %s3 = inlined_call_operand.vmem [shape: f32[32,128], index: 3, kind: output, shape index: {}]
  %s4 = sld [smem:[#allocation0]]
  $region26: #{bert_span_prefix_forward.1} parent=0
    _
  %s6 = ssub.s32 1, %s4
  %s7 = scalar_select 0, %s6, %s4
  $region1: #{bert_span_prefix_forward.1} parent=0
    #allocation2 [shape = 'u8[331776]{0}', space=vmem, size = 0x51000, scoped, tag = 'input window, operand 2, single buffered']
    #allocation3 [shape = 's32[1]{0}', space=sflag, size = 0x4, scoped, tag = 'scoped memory for bert_span_prefix_forward.1']
    %8 = vsyncpa [#allocation3], 0
    // Predicated region
    $region2: #{bert_span_prefix_forward.1} parent=1 // pred_check
      _
    $region3: #{bert_span_prefix_forward.1} parent=1 // pred_check_branch
      %10 = sbr.rel (0) target = $region5
    $region4: #{bert_span_prefix_forward.1} parent=1 // pred_region
      _
    $region5: #{bert_span_prefix_forward.1} parent=1 // pred_fallthru
      _
    // Predicated region
    $region6: #{bert_span_prefix_forward.1} parent=1 // pred_check
      _
    $region7: #{bert_span_prefix_forward.1} parent=1 // pred_check_branch
      %12 = sbr.rel (0) target = $region9
    $region8: #{bert_span_prefix_forward.1} parent=1 // pred_region
      _
    $region9: #{bert_span_prefix_forward.1} parent=1 // pred_fallthru
      _
    // Predicated region
    $region10: #{bert_span_prefix_forward.1} parent=1 // pred_check
      _
    $region11: #{bert_span_prefix_forward.1} parent=1 // pred_check_branch
      %14 = sbr.rel (0) target = $region13
    $region12: #{bert_span_prefix_forward.1} parent=1 // pred_region
      %s16 = ssub.s32 10368, 10368
      %17 = vsyncadd [#allocation3], %s16
      %s18 = sshll.u32 [#allocation2], 4
      %s19 = int_to_ptr.vmem [resolvable:$true] %s18
      %24 = dma.hbm_to_vmem [thread:$0]  %s2, 10368, %s19, [#allocation3], 128, 128, 8
    $region13: #{bert_span_prefix_forward.1} parent=1 // pred_fallthru
      _
    // Predicated region
    $region14: #{bert_span_prefix_forward.1} parent=1 // pred_check
      _
    $region15: #{bert_span_prefix_forward.1} parent=1 // pred_check_branch
      %26 = sbr.rel (0) target = $region17
    $region16: #{bert_span_prefix_forward.1} parent=1 // pred_region
      %27 = dma.done [#allocation3], 10368
    $region17: #{bert_span_prefix_forward.1} parent=1 // pred_fallthru
      _
    %v28 = vld [vmem:[%s1] sm:$0xff]
    %v29 = vld [vmem:[%s1 + $0x8] sm:$0xff]
    %v30 = vld [vmem:[%s0] sm:$0xff]
    %v31 = vld [vmem:[%s0 + $0x8] sm:$0xff]
    %v32 = vld [vmem:[#allocation2 + $0x1e0] sm:$0x1]
    %v33 = vld [vmem:[#allocation2 + $0x1e8] sm:$0x1]
    %vm34 = vcmask 261120
    %v35 = vsel %vm34, %v30, 0.0
    %36 = vadd.xlane.f32.xlu0 %v35
    %v37 = vpop.xlane.xlu0 %36
    %v38 = vsel %vm34, %v31, 0.0
    %39 = vadd.xlane.f32.xlu0 %v38
    %v40 = vpop.xlane.xlu0 %39
    %v41 = vrcp.pop 32.0
    %v42 = vmul.f32 %v37, %v41
    %v43 = vmul.f32 %v40, %v41
    %v44 = vsub.f32 %v30, %v42
    %v45 = vsub.f32 %v31, %v43
    %v46 = vmul.f32 %v44, %v44
    %v47 = vmul.f32 %v45, %v45
    %v48 = vsel %vm34, %v46, 0.0
    %49 = vadd.xlane.f32.xlu0 %v48
    %v50 = vpop.xlane.xlu0 %49
    %v51 = vsel %vm34, %v47, 0.0
    %52 = vadd.xlane.f32.xlu0 %v51
    %v53 = vpop.xlane.xlu0 %52
    %v54 = vmul.f32 %v50, %v41
    %v55 = vmul.f32 %v53, %v41
    %v56 = vadd.f32 %v54, 1e-12
    %v57 = vadd.f32 %v55, 1e-12
    %v58 = vrsqrt.pop %v56
    %v59 = vrsqrt.pop %v57
    %v60 = vmul.f32 %v44, %v58
    %v61 = vmul.f32 %v45, %v59
    %v62 = vlaneseq
    %v63 = vshrl.u32 %v62, 7
    %v64 = vsub.s32 0, %v63
    %v65 = vrot.slane %v32, %v64
    %v66 = vmul.f32 %v60, %v65
    %v67 = vmul.f32 %v61, %v65
    %v68 = vlaneseq
    %v69 = vshrl.u32 %v68, 7
    %v70 = vsub.s32 0, %v69
    %v71 = vrot.slane %v33, %v70
    %v72 = vadd.f32 %v66, %v71
    %v73 = vadd.f32 %v67, %v71
    %v74 = vld [vmem:[#allocation2] sm:$0xff]
    %v75 = vld [vmem:[#allocation2 + $0x8] sm:$0xff]
    %v76 = vld [vmem:[#allocation2 + $0x10] sm:$0xff]
    %v77 = vld [vmem:[#allocation2 + $0x18] sm:$0xff]
    %v78 = vld [vmem:[#allocation2 + $0x20] sm:$0x1]
    %v79 = vlaneseq
    %v80 = vshrl.u32 %v79, 7
    %v81 = vsub.s32 0, %v80
    %v82 = vrot.slane %v78, %v81
    %v84 = vsel %vm34, %v72, 0
    %v87 = vsel %vm34, %v73, 0
    %89 = vmatprep.subr.mxu0 0.0
    %90 = vmatpush1.msra.mxu0 0.0
    %91 = vmatprep.subr.mxu0 0.0
    %92 = vmatpush1.msra.mxu0 0.0
    %93 = vmatprep.subr.mxu0 0.0
    %94 = vmatpush1.msra.mxu0 0.0
    %95 = vmatprep.subr.mxu0 0.0
    %96 = vmatpush1.msra.mxu0 0.0
    %97 = vmatprep.subr.mxu0 0.0
    %98 = vmatpush1.msra.mxu0 0.0
    %99 = vmatprep.subr.mxu0 0.0
    %100 = vmatpush1.msra.mxu0 0.0
    %101 = vmatprep.subr.mxu0 0.0
    %102 = vmatpush1.msra.mxu0 0.0
    %103 = vmatprep.subr.mxu0 0.0
    %104 = vmatpush1.msra.mxu0 0.0
    %105 = vmatprep.subr.mxu0 0.0
    %106 = vmatpush1.msra.mxu0 0.0
    %107 = vmatprep.subr.mxu0 0.0
    %108 = vmatpush1.msra.mxu0 0.0
    %109 = vmatprep.subr.mxu0 0.0
    %110 = vmatpush1.msra.mxu0 0.0
    %111 = vmatprep.subr.mxu0 0.0
    %112 = vmatpush1.msra.mxu0 0.0
    %113 = vmatprep.subr.mxu0 0.0
    %114 = vmatpush1.msra.mxu0 %v77
    %115 = vmatprep.subr.mxu0 0.0
    %116 = vmatpush1.msra.mxu0 %v76
    %117 = vmatprep.subr.mxu0 0.0
    %118 = vmatpush1.msra.mxu0 %v75
    %119 = vmatprep.subr.mxu0 0.0
    %120 = vmatpush1.msra.mxu0 %v74
    %121 = vmatprep.subr.mxu0 0.0
    %122 = vmatpush2.msra.mxu0 0.0
    %123 = vmatprep.subr.mxu0 0.0
    %124 = vmatpush2.msra.mxu0 0.0
    %125 = vmatprep.subr.mxu0 0.0
    %126 = vmatpush2.msra.mxu0 0.0
    %127 = vmatprep.subr.mxu0 0.0
    %128 = vmatpush2.msra.mxu0 0.0
    %129 = vmatprep.subr.mxu0 0.0
    %130 = vmatpush2.msra.mxu0 0.0
    %131 = vmatprep.subr.mxu0 0.0
    %132 = vmatpush2.msra.mxu0 0.0
    %133 = vmatprep.subr.mxu0 0.0
    %134 = vmatpush2.msra.mxu0 0.0
    %135 = vmatprep.subr.mxu0 0.0
    %136 = vmatpush2.msra.mxu0 0.0
    %137 = vmatprep.subr.mxu0 0.0
    %138 = vmatpush2.msra.mxu0 0.0
    %139 = vmatprep.subr.mxu0 0.0
    %140 = vmatpush2.msra.mxu0 0.0
    %141 = vmatprep.subr.mxu0 0.0
    %142 = vmatpush2.msra.mxu0 0.0
    %143 = vmatprep.subr.mxu0 0.0
    %144 = vmatpush2.msra.mxu0 0.0
    %145 = vmatprep.subr.mxu0 0.0
    %146 = vmatpush2.msra.mxu0 0.0
    %147 = vmatprep.subr.mxu0 0.0
    %148 = vmatpush2.msra.mxu0 0.0
    %149 = vmatprep.subr.mxu0 0.0
    %150 = vmatpush2.msra.mxu0 0.0
    %151 = vmatprep.subr.mxu0 0.0
    %152 = vmatpush2.msra.mxu0 0.0
    %153 = vmatprep.mubr.f32.mxu0 0.0
    %154 = vmatmul.mubr.f32.gmra.mxu0 %v84
    %v155 = vpop.f32.mrf.mxu0
    %v156 = vadd.f32 %v82, %v155
    %v157 = vpop.f32.mrf.mxu0
    %158 = vmatprep.mubr.f32.mxu0 0.0
    %159 = vmatmul.mubr.f32.gmra.mxu0 %v87
    %v160 = vpop.f32.mrf.mxu0
    %v161 = vadd.f32 %v82, %v160
    %v162 = vpop.f32.mrf.mxu0
    %163 = vdwg.mxu0
    %v164 = vld [vmem:[#allocation2 + $0xe0] sm:$0xf]
    %v165 = vld [vmem:[#allocation2 + $0xe8] sm:$0xf]
    %vm168 = vcmask 1043456
    %v169 = vrot.slane %v156, 4
    %v170 = vrot.slane %v161, 4
    %v171 = vsel %vm168, %v169, %v170
    %172 = vrot.lane.b32.xlu0 %v169, 96
    %v173 = vpop.permute.xlu0 %172
    %174 = vrot.lane.b32.xlu0 %v171, 96
    %v175 = vpop.permute.xlu0 %174
    %176 = vrot.lane.b32.xlu0 %v170, 96
    %v177 = vpop.permute.xlu0 %176
    %v179 = vsel %vm168, %v164, %v173
    %180 = vrot.lane.b32.xlu0 %v169, 64
    %v181 = vpop.permute.xlu0 %180
    %182 = vrot.lane.b32.xlu0 %v171, 64
    %v183 = vpop.permute.xlu0 %182
    %184 = vrot.lane.b32.xlu0 %v170, 64
    %v185 = vpop.permute.xlu0 %184
    %v188 = vsel %vm168, %v165, %v181
    %vm189 = vcmask 64512
    %v190 = vsel %vm189, %v156, 0
    %v192 = vsel %vm189, %v161, 0
    %v195 = vsel %vm189, %v179, 0
    %v197 = vsel %vm189, %v175, 0
    %v199 = vsel %vm189, %v177, 0
    %201 = vmatprep.subr.mxu0 0.0
    %202 = vmatpush1.xpose.msra.mxu0 0.0
    %203 = vmatprep.subr.mxu0 0.0
    %204 = vmatpush1.xpose.msra.mxu0 0.0
    %205 = vmatprep.subr.mxu0 0.0
    %206 = vmatpush1.xpose.msra.mxu0 0.0
    %207 = vmatprep.subr.mxu0 0.0
    %208 = vmatpush1.xpose.msra.mxu0 0.0
    %209 = vmatprep.subr.mxu0 0.0
    %210 = vmatpush1.xpose.msra.mxu0 0.0
    %211 = vmatprep.subr.mxu0 0.0
    %212 = vmatpush1.xpose.msra.mxu0 0.0
    %213 = vmatprep.subr.mxu0 0.0
    %214 = vmatpush1.xpose.msra.mxu0 0.0
    %215 = vmatprep.subr.mxu0 0.0
    %216 = vmatpush1.xpose.msra.mxu0 0.0
    %217 = vmatprep.subr.mxu0 0.0
    %218 = vmatpush1.xpose.msra.mxu0 0.0
    %219 = vmatprep.subr.mxu0 0.0
    %220 = vmatpush1.xpose.msra.mxu0 0.0
    %221 = vmatprep.subr.mxu0 0.0
    %222 = vmatpush1.xpose.msra.mxu0 0.0
    %223 = vmatprep.subr.mxu0 0.0
    %224 = vmatpush1.xpose.msra.mxu0 0.0
    %225 = vmatprep.subr.mxu0 0.0
    %226 = vmatpush1.xpose.msra.mxu0 0.0
    %227 = vmatprep.subr.mxu0 0.0
    %228 = vmatpush1.xpose.msra.mxu0 %v199
    %229 = vmatprep.subr.mxu0 0.0
    %230 = vmatpush1.xpose.msra.mxu0 %v197
    %231 = vmatprep.subr.mxu0 0.0
    %232 = vmatpush1.xpose.msra.mxu0 %v195
    %233 = vmatprep.subr.mxu0 0.0
    %234 = vmatpush2.xpose.msra.mxu0 0.0
    %235 = vmatprep.subr.mxu0 0.0
    %236 = vmatpush2.xpose.msra.mxu0 0.0
    %237 = vmatprep.subr.mxu0 0.0
    %238 = vmatpush2.xpose.msra.mxu0 0.0
    %239 = vmatprep.subr.mxu0 0.0
    %240 = vmatpush2.xpose.msra.mxu0 0.0
    %241 = vmatprep.subr.mxu0 0.0
    %242 = vmatpush2.xpose.msra.mxu0 0.0
    %243 = vmatprep.subr.mxu0 0.0
    %244 = vmatpush2.xpose.msra.mxu0 0.0
    %245 = vmatprep.subr.mxu0 0.0
    %246 = vmatpush2.xpose.msra.mxu0 0.0
    %247 = vmatprep.subr.mxu0 0.0
    %248 = vmatpush2.xpose.msra.mxu0 0.0
    %249 = vmatprep.subr.mxu0 0.0
    %250 = vmatpush2.xpose.msra.mxu0 0.0
    %251 = vmatprep.subr.mxu0 0.0
    %252 = vmatpush2.xpose.msra.mxu0 0.0
    %253 = vmatprep.subr.mxu0 0.0
    %254 = vmatpush2.xpose.msra.mxu0 0.0
    %255 = vmatprep.subr.mxu0 0.0
    %256 = vmatpush2.xpose.msra.mxu0 0.0
    %257 = vmatprep.subr.mxu0 0.0
    %258 = vmatpush2.xpose.msra.mxu0 0.0
    %259 = vmatprep.subr.mxu0 0.0
    %260 = vmatpush2.xpose.msra.mxu0 0.0
    %261 = vmatprep.subr.mxu0 0.0
    %262 = vmatpush2.xpose.msra.mxu0 0.0
    %263 = vmatprep.subr.mxu0 0.0
    %264 = vmatpush2.xpose.msra.mxu0 0.0
    %265 = vmatprep.mubr.f32.mxu0 0.0
    %266 = vmatmul.mubr.f32.gmra.mxu0 %v190
    %v267 = vpop.f32.mrf.mxu0
    %v268 = vadd.f32 %v28, %v267
    %v269 = vpop.f32.mrf.mxu0
    %270 = vmatprep.mubr.f32.mxu0 0.0
    %271 = vmatmul.mubr.f32.gmra.mxu0 %v192
    %v272 = vpop.f32.mrf.mxu0
    %v273 = vadd.f32 %v29, %v272
    %v274 = vpop.f32.mrf.mxu0
    %275 = vdwg.mxu0
    %vm276 = vcmask 162816
    %v277 = vsel %vm276, %v268, -inf
    %278 = vmax.xlane.f32.xlu0 %v277
    %v279 = vpop.xlane.xlu0 %278
    %v280 = vsel %vm276, %v273, -inf
    %281 = vmax.xlane.f32.xlu0 %v280
    %v282 = vpop.xlane.xlu0 %281
    %v283 = vsub.f32 %v268, %v279
    %v284 = vsub.f32 %v273, %v282
    %v285 = vmul.f32 %v283, 1.442695
    %v286 = vpow.pop %v285
    %v287 = vmul.f32 %v284, 1.442695
    %v288 = vpow.pop %v287
    %v289 = vsel %vm276, %v286, 0.0
    %290 = vadd.xlane.f32.xlu0 %v289
    %v291 = vpop.xlane.xlu0 %290
    %v292 = vsel %vm276, %v288, 0.0
    %293 = vadd.xlane.f32.xlu0 %v292
    %v294 = vpop.xlane.xlu0 %293
    %v295 = vrcp.pop %v291
    %v296 = vmul.f32 %v286, %v295
    %v297 = vrcp.pop %v294
    %v298 = vmul.f32 %v288, %v297
    %v300 = vsel %vm276, %v296, 0
    %v303 = vsel %vm276, %v298, 0
    %v305 = vsel %vm168, %v185, 0
    %307 = vmatprep.subr.mxu0 0.0
    %308 = vmatpush1.msra.mxu0 0.0
    %309 = vmatprep.subr.mxu0 0.0
    %310 = vmatpush1.msra.mxu0 0.0
    %311 = vmatprep.subr.mxu0 0.0
    %312 = vmatpush1.msra.mxu0 0.0
    %313 = vmatprep.subr.mxu0 0.0
    %314 = vmatpush1.msra.mxu0 0.0
    %315 = vmatprep.subr.mxu0 0.0
    %316 = vmatpush1.msra.mxu0 0.0
    %317 = vmatprep.subr.mxu0 0.0
    %318 = vmatpush1.msra.mxu0 0.0
    %319 = vmatprep.subr.mxu0 0.0
    %320 = vmatpush1.msra.mxu0 0.0
    %321 = vmatprep.subr.mxu0 0.0
    %322 = vmatpush1.msra.mxu0 0.0
    %323 = vmatprep.subr.mxu0 0.0
    %324 = vmatpush1.msra.mxu0 0.0
    %325 = vmatprep.subr.mxu0 0.0
    %326 = vmatpush1.msra.mxu0 0.0
    %327 = vmatprep.subr.mxu0 0.0
    %328 = vmatpush1.msra.mxu0 0.0
    %329 = vmatprep.subr.mxu0 0.0
    %330 = vmatpush1.msra.mxu0 0.0
    %331 = vmatprep.subr.mxu0 0.0
    %332 = vmatpush1.msra.mxu0 0.0
    %333 = vmatprep.subr.mxu0 0.0
    %334 = vmatpush1.msra.mxu0 %v305
    %335 = vmatprep.subr.mxu0 0.0
    %336 = vmatpush1.msra.mxu0 %v183
    %337 = vmatprep.subr.mxu0 0.0
    %338 = vmatpush1.msra.mxu0 %v188
    %339 = vmatprep.subr.mxu0 0.0
    %340 = vmatpush2.msra.mxu0 0.0
    %341 = vmatprep.subr.mxu0 0.0
    %342 = vmatpush2.msra.mxu0 0.0
    %343 = vmatprep.subr.mxu0 0.0
    %344 = vmatpush2.msra.mxu0 0.0
    %345 = vmatprep.subr.mxu0 0.0
    %346 = vmatpush2.msra.mxu0 0.0
    %347 = vmatprep.subr.mxu0 0.0
    %348 = vmatpush2.msra.mxu0 0.0
    %349 = vmatprep.subr.mxu0 0.0
    %350 = vmatpush2.msra.mxu0 0.0
    %351 = vmatprep.subr.mxu0 0.0
    %352 = vmatpush2.msra.mxu0 0.0
    %353 = vmatprep.subr.mxu0 0.0
    %354 = vmatpush2.msra.mxu0 0.0
    %355 = vmatprep.subr.mxu0 0.0
    %356 = vmatpush2.msra.mxu0 0.0
    %357 = vmatprep.subr.mxu0 0.0
    %358 = vmatpush2.msra.mxu0 0.0
    %359 = vmatprep.subr.mxu0 0.0
    %360 = vmatpush2.msra.mxu0 0.0
    %361 = vmatprep.subr.mxu0 0.0
    %362 = vmatpush2.msra.mxu0 0.0
    %363 = vmatprep.subr.mxu0 0.0
    %364 = vmatpush2.msra.mxu0 0.0
    %365 = vmatprep.subr.mxu0 0.0
    %366 = vmatpush2.msra.mxu0 0.0
    %367 = vmatprep.subr.mxu0 0.0
    %368 = vmatpush2.msra.mxu0 0.0
    %369 = vmatprep.subr.mxu0 0.0
    %370 = vmatpush2.msra.mxu0 0.0
    %371 = vmatprep.mubr.f32.mxu0 0.0
    %372 = vmatmul.mubr.f32.gmra.mxu0 %v300
    %v373 = vpop.f32.mrf.mxu0
    %v374 = vadd.f32 0.0, %v373
    %v375 = vpop.f32.mrf.mxu0
    %376 = vmatprep.mubr.f32.mxu0 0.0
    %377 = vmatmul.mubr.f32.gmra.mxu0 %v303
    %v378 = vpop.f32.mrf.mxu0
    %v379 = vadd.f32 0.0, %v378
    %v380 = vpop.f32.mrf.mxu0
    %381 = vdwg.mxu0
    %382 = vrot.lane.b32.xlu0 %v156, 120
    %v383 = vpop.permute.xlu0 %382
    %384 = vrot.lane.b32.xlu0 %v161, 120
    %v385 = vpop.permute.xlu0 %384
    %386 = vrot.lane.b32.xlu0 %v179, 120
    %v387 = vpop.permute.xlu0 %386
    %388 = vrot.lane.b32.xlu0 %v175, 120
    %v389 = vpop.permute.xlu0 %388
    %390 = vrot.lane.b32.xlu0 %v177, 120
    %v391 = vpop.permute.xlu0 %390
    %v392 = vsel %vm189, %v383, 0
    %v394 = vsel %vm189, %v385, 0
    %v396 = vsel %vm189, %v387, 0
    %v398 = vsel %vm189, %v389, 0
    %v400 = vsel %vm189, %v391, 0
    %402 = vmatprep.subr.mxu0 0.0
    %403 = vmatpush1.xpose.msra.mxu0 0.0
    %404 = vmatprep.subr.mxu0 0.0
    %405 = vmatpush1.xpose.msra.mxu0 0.0
    %406 = vmatprep.subr.mxu0 0.0
    %407 = vmatpush1.xpose.msra.mxu0 0.0
    %408 = vmatprep.subr.mxu0 0.0
    %409 = vmatpush1.xpose.msra.mxu0 0.0
    %410 = vmatprep.subr.mxu0 0.0
    %411 = vmatpush1.xpose.msra.mxu0 0.0
    %412 = vmatprep.subr.mxu0 0.0
    %413 = vmatpush1.xpose.msra.mxu0 0.0
    %414 = vmatprep.subr.mxu0 0.0
    %415 = vmatpush1.xpose.msra.mxu0 0.0
    %416 = vmatprep.subr.mxu0 0.0
    %417 = vmatpush1.xpose.msra.mxu0 0.0
    %418 = vmatprep.subr.mxu0 0.0
    %419 = vmatpush1.xpose.msra.mxu0 0.0
    %420 = vmatprep.subr.mxu0 0.0
    %421 = vmatpush1.xpose.msra.mxu0 0.0
    %422 = vmatprep.subr.mxu0 0.0
    %423 = vmatpush1.xpose.msra.mxu0 0.0
    %424 = vmatprep.subr.mxu0 0.0
    %425 = vmatpush1.xpose.msra.mxu0 0.0
    %426 = vmatprep.subr.mxu0 0.0
    %427 = vmatpush1.xpose.msra.mxu0 0.0
    %428 = vmatprep.subr.mxu0 0.0
    %429 = vmatpush1.xpose.msra.mxu0 %v400
    %430 = vmatprep.subr.mxu0 0.0
    %431 = vmatpush1.xpose.msra.mxu0 %v398
    %432 = vmatprep.subr.mxu0 0.0
    %433 = vmatpush1.xpose.msra.mxu0 %v396
    %434 = vmatprep.subr.mxu0 0.0
    %435 = vmatpush2.xpose.msra.mxu0 0.0
    %436 = vmatprep.subr.mxu0 0.0
    %437 = vmatpush2.xpose.msra.mxu0 0.0
    %438 = vmatprep.subr.mxu0 0.0
    %439 = vmatpush2.xpose.msra.mxu0 0.0
    %440 = vmatprep.subr.mxu0 0.0
    %441 = vmatpush2.xpose.msra.mxu0 0.0
    %442 = vmatprep.subr.mxu0 0.0
    %443 = vmatpush2.xpose.msra.mxu0 0.0
    %444 = vmatprep.subr.mxu0 0.0
    %445 = vmatpush2.xpose.msra.mxu0 0.0
    %446 = vmatprep.subr.mxu0 0.0
    %447 = vmatpush2.xpose.msra.mxu0 0.0
    %448 = vmatprep.subr.mxu0 0.0
    %449 = vmatpush2.xpose.msra.mxu0 0.0
    %450 = vmatprep.subr.mxu0 0.0
    %451 = vmatpush2.xpose.msra.mxu0 0.0
    %452 = vmatprep.subr.mxu0 0.0
    %453 = vmatpush2.xpose.msra.mxu0 0.0
    %454 = vmatprep.subr.mxu0 0.0
    %455 = vmatpush2.xpose.msra.mxu0 0.0
    %456 = vmatprep.subr.mxu0 0.0
    %457 = vmatpush2.xpose.msra.mxu0 0.0
    %458 = vmatprep.subr.mxu0 0.0
    %459 = vmatpush2.xpose.msra.mxu0 0.0
    %460 = vmatprep.subr.mxu0 0.0
    %461 = vmatpush2.xpose.msra.mxu0 0.0
    %462 = vmatprep.subr.mxu0 0.0
    %463 = vmatpush2.xpose.msra.mxu0 0.0
    %464 = vmatprep.subr.mxu0 0.0
    %465 = vmatpush2.xpose.msra.mxu0 0.0
    %466 = vmatprep.mubr.f32.mxu0 0.0
    %467 = vmatmul.mubr.f32.gmra.mxu0 %v392
    %v468 = vpop.f32.mrf.mxu0
    %v469 = vadd.f32 %v28, %v468
    %v470 = vpop.f32.mrf.mxu0
    %471 = vmatprep.mubr.f32.mxu0 0.0
    %472 = vmatmul.mubr.f32.gmra.mxu0 %v394
    %v473 = vpop.f32.mrf.mxu0
    %v474 = vadd.f32 %v29, %v473
    %v475 = vpop.f32.mrf.mxu0
    %476 = vdwg.mxu0
    %v477 = vsel %vm276, %v469, -inf
    %478 = vmax.xlane.f32.xlu0 %v477
    %v479 = vpop.xlane.xlu0 %478
    %v480 = vsel %vm276, %v474, -inf
    %481 = vmax.xlane.f32.xlu0 %v480
    %v482 = vpop.xlane.xlu0 %481
    %v483 = vsub.f32 %v469, %v479
    %v484 = vsub.f32 %v474, %v482
    %v485 = vmul.f32 %v483, 1.442695
    %v486 = vpow.pop %v485
    %v487 = vmul.f32 %v484, 1.442695
    %v488 = vpow.pop %v487
    %v489 = vsel %vm276, %v486, 0.0
    %490 = vadd.xlane.f32.xlu0 %v489
    %v491 = vpop.xlane.xlu0 %490
    %v492 = vsel %vm276, %v488, 0.0
    %493 = vadd.xlane.f32.xlu0 %v492
    %v494 = vpop.xlane.xlu0 %493
    %v495 = vrcp.pop %v491
    %v496 = vmul.f32 %v486, %v495
    %v497 = vrcp.pop %v494
    %v498 = vmul.f32 %v488, %v497
    %500 = vrot.lane.b32.xlu0 %v188, 120
    %v501 = vpop.permute.xlu0 %500
    %502 = vrot.lane.b32.xlu0 %v183, 120
    %v503 = vpop.permute.xlu0 %502
    %504 = vrot.lane.b32.xlu0 %v185, 120
    %v505 = vpop.permute.xlu0 %504
    %v509 = vsel %vm276, %v496, 0
    %v512 = vsel %vm276, %v498, 0
    %v514 = vsel %vm168, %v505, 0
    %516 = vmatprep.subr.mxu0 0.0
    %517 = vmatpush1.msra.mxu0 0.0
    %518 = vmatprep.subr.mxu0 0.0
    %519 = vmatpush1.msra.mxu0 0.0
    %520 = vmatprep.subr.mxu0 0.0
    %521 = vmatpush1.msra.mxu0 0.0
    %522 = vmatprep.subr.mxu0 0.0
    %523 = vmatpush1.msra.mxu0 0.0
    %524 = vmatprep.subr.mxu0 0.0
    %525 = vmatpush1.msra.mxu0 0.0
    %526 = vmatprep.subr.mxu0 0.0
    %527 = vmatpush1.msra.mxu0 0.0
    %528 = vmatprep.subr.mxu0 0.0
    %529 = vmatpush1.msra.mxu0 0.0
    %530 = vmatprep.subr.mxu0 0.0
    %531 = vmatpush1.msra.mxu0 0.0
    %532 = vmatprep.subr.mxu0 0.0
    %533 = vmatpush1.msra.mxu0 0.0
    %534 = vmatprep.subr.mxu0 0.0
    %535 = vmatpush1.msra.mxu0 0.0
    %536 = vmatprep.subr.mxu0 0.0
    %537 = vmatpush1.msra.mxu0 0.0
    %538 = vmatprep.subr.mxu0 0.0
    %539 = vmatpush1.msra.mxu0 0.0
    %540 = vmatprep.subr.mxu0 0.0
    %541 = vmatpush1.msra.mxu0 0.0
    %542 = vmatprep.subr.mxu0 0.0
    %543 = vmatpush1.msra.mxu0 %v514
    %544 = vmatprep.subr.mxu0 0.0
    %545 = vmatpush1.msra.mxu0 %v503
    %546 = vmatprep.subr.mxu0 0.0
    %547 = vmatpush1.msra.mxu0 %v501
    %548 = vmatprep.subr.mxu0 0.0
    %549 = vmatpush2.msra.mxu0 0.0
    %550 = vmatprep.subr.mxu0 0.0
    %551 = vmatpush2.msra.mxu0 0.0
    %552 = vmatprep.subr.mxu0 0.0
    %553 = vmatpush2.msra.mxu0 0.0
    %554 = vmatprep.subr.mxu0 0.0
    %555 = vmatpush2.msra.mxu0 0.0
    %556 = vmatprep.subr.mxu0 0.0
    %557 = vmatpush2.msra.mxu0 0.0
    %558 = vmatprep.subr.mxu0 0.0
    %559 = vmatpush2.msra.mxu0 0.0
    %560 = vmatprep.subr.mxu0 0.0
    %561 = vmatpush2.msra.mxu0 0.0
    %562 = vmatprep.subr.mxu0 0.0
    %563 = vmatpush2.msra.mxu0 0.0
    %564 = vmatprep.subr.mxu0 0.0
    %565 = vmatpush2.msra.mxu0 0.0
    %566 = vmatprep.subr.mxu0 0.0
    %567 = vmatpush2.msra.mxu0 0.0
    %568 = vmatprep.subr.mxu0 0.0
    %569 = vmatpush2.msra.mxu0 0.0
    %570 = vmatprep.subr.mxu0 0.0
    %571 = vmatpush2.msra.mxu0 0.0
    %572 = vmatprep.subr.mxu0 0.0
    %573 = vmatpush2.msra.mxu0 0.0
    %574 = vmatprep.subr.mxu0 0.0
    %575 = vmatpush2.msra.mxu0 0.0
    %576 = vmatprep.subr.mxu0 0.0
    %577 = vmatpush2.msra.mxu0 0.0
    %578 = vmatprep.subr.mxu0 0.0
    %579 = vmatpush2.msra.mxu0 0.0
    %580 = vmatprep.mubr.f32.mxu0 0.0
    %581 = vmatmul.mubr.f32.gmra.mxu0 %v509
    %v582 = vpop.f32.mrf.mxu0
    %v583 = vadd.f32 0.0, %v582
    %v584 = vpop.f32.mrf.mxu0
    %585 = vmatprep.mubr.f32.mxu0 0.0
    %586 = vmatmul.mubr.f32.gmra.mxu0 %v512
    %v587 = vpop.f32.mrf.mxu0
    %v588 = vadd.f32 0.0, %v587
    %v589 = vpop.f32.mrf.mxu0
    %590 = vdwg.mxu0
    %591 = vrot.lane.b32.xlu0 %v156, 112
    %v592 = vpop.permute.xlu0 %591
    %593 = vrot.lane.b32.xlu0 %v161, 112
    %v594 = vpop.permute.xlu0 %593
    %595 = vrot.lane.b32.xlu0 %v179, 112
    %v596 = vpop.permute.xlu0 %595
    %597 = vrot.lane.b32.xlu0 %v175, 112
    %v598 = vpop.permute.xlu0 %597
    %599 = vrot.lane.b32.xlu0 %v177, 112
    %v600 = vpop.permute.xlu0 %599
    %v601 = vsel %vm189, %v592, 0
    %v603 = vsel %vm189, %v594, 0
    %v605 = vsel %vm189, %v596, 0
    %v607 = vsel %vm189, %v598, 0
    %v609 = vsel %vm189, %v600, 0
    %611 = vmatprep.subr.mxu0 0.0
    %612 = vmatpush1.xpose.msra.mxu0 0.0
    %613 = vmatprep.subr.mxu0 0.0
    %614 = vmatpush1.xpose.msra.mxu0 0.0
    %615 = vmatprep.subr.mxu0 0.0
    %616 = vmatpush1.xpose.msra.mxu0 0.0
    %617 = vmatprep.subr.mxu0 0.0
    %618 = vmatpush1.xpose.msra.mxu0 0.0
    %619 = vmatprep.subr.mxu0 0.0
    %620 = vmatpush1.xpose.msra.mxu0 0.0
    %621 = vmatprep.subr.mxu0 0.0
    %622 = vmatpush1.xpose.msra.mxu0 0.0
    %623 = vmatprep.subr.mxu0 0.0
    %624 = vmatpush1.xpose.msra.mxu0 0.0
    %625 = vmatprep.subr.mxu0 0.0
    %626 = vmatpush1.xpose.msra.mxu0 0.0
    %627 = vmatprep.subr.mxu0 0.0
    %628 = vmatpush1.xpose.msra.mxu0 0.0
    %629 = vmatprep.subr.mxu0 0.0
    %630 = vmatpush1.xpose.msra.mxu0 0.0
    %631 = vmatprep.subr.mxu0 0.0
    %632 = vmatpush1.xpose.msra.mxu0 0.0
    %633 = vmatprep.subr.mxu0 0.0
    %634 = vmatpush1.xpose.msra.mxu0 0.0
    %635 = vmatprep.subr.mxu0 0.0
    %636 = vmatpush1.xpose.msra.mxu0 0.0
    %637 = vmatprep.subr.mxu0 0.0
    %638 = vmatpush1.xpose.msra.mxu0 %v609
    %639 = vmatprep.subr.mxu0 0.0
    %640 = vmatpush1.xpose.msra.mxu0 %v607
    %641 = vmatprep.subr.mxu0 0.0
    %642 = vmatpush1.xpose.msra.mxu0 %v605
    %643 = vmatprep.subr.mxu0 0.0
    %644 = vmatpush2.xpose.msra.mxu0 0.0
    %645 = vmatprep.subr.mxu0 0.0
    %646 = vmatpush2.xpose.msra.mxu0 0.0
    %647 = vmatprep.subr.mxu0 0.0
    %648 = vmatpush2.xpose.msra.mxu0 0.0
    %649 = vmatprep.subr.mxu0 0.0
    %650 = vmatpush2.xpose.msra.mxu0 0.0
    %651 = vmatprep.subr.mxu0 0.0
    %652 = vmatpush2.xpose.msra.mxu0 0.0
    %653 = vmatprep.subr.mxu0 0.0
    %654 = vmatpush2.xpose.msra.mxu0 0.0
    %655 = vmatprep.subr.mxu0 0.0
    %656 = vmatpush2.xpose.msra.mxu0 0.0
    %657 = vmatprep.subr.mxu0 0.0
    %658 = vmatpush2.xpose.msra.mxu0 0.0
    %659 = vmatprep.subr.mxu0 0.0
    %660 = vmatpush2.xpose.msra.mxu0 0.0
    %661 = vmatprep.subr.mxu0 0.0
    %662 = vmatpush2.xpose.msra.mxu0 0.0
    %663 = vmatprep.subr.mxu0 0.0
    %664 = vmatpush2.xpose.msra.mxu0 0.0
    %665 = vmatprep.subr.mxu0 0.0
    %666 = vmatpush2.xpose.msra.mxu0 0.0
    %667 = vmatprep.subr.mxu0 0.0
    %668 = vmatpush2.xpose.msra.mxu0 0.0
    %669 = vmatprep.subr.mxu0 0.0
    %670 = vmatpush2.xpose.msra.mxu0 0.0
    %671 = vmatprep.subr.mxu0 0.0
    %672 = vmatpush2.xpose.msra.mxu0 0.0
    %673 = vmatprep.subr.mxu0 0.0
    %674 = vmatpush2.xpose.msra.mxu0 0.0
    %675 = vmatprep.mubr.f32.mxu0 0.0
    %676 = vmatmul.mubr.f32.gmra.mxu0 %v601
    %v677 = vpop.f32.mrf.mxu0
    %v678 = vadd.f32 %v28, %v677
    %v679 = vpop.f32.mrf.mxu0
    %680 = vmatprep.mubr.f32.mxu0 0.0
    %681 = vmatmul.mubr.f32.gmra.mxu0 %v603
    %v682 = vpop.f32.mrf.mxu0
    %v683 = vadd.f32 %v29, %v682
    %v684 = vpop.f32.mrf.mxu0
    %685 = vdwg.mxu0
    %v686 = vsel %vm276, %v678, -inf
    %687 = vmax.xlane.f32.xlu0 %v686
    %v688 = vpop.xlane.xlu0 %687
    %v689 = vsel %vm276, %v683, -inf
    %690 = vmax.xlane.f32.xlu0 %v689
    %v691 = vpop.xlane.xlu0 %690
    %v692 = vsub.f32 %v678, %v688
    %v693 = vsub.f32 %v683, %v691
    %v694 = vmul.f32 %v692, 1.442695
    %v695 = vpow.pop %v694
    %v696 = vmul.f32 %v693, 1.442695
    %v697 = vpow.pop %v696
    %v698 = vsel %vm276, %v695, 0.0
    %699 = vadd.xlane.f32.xlu0 %v698
    %v700 = vpop.xlane.xlu0 %699
    %v701 = vsel %vm276, %v697, 0.0
    %702 = vadd.xlane.f32.xlu0 %v701
    %v703 = vpop.xlane.xlu0 %702
    %v704 = vrcp.pop %v700
    %v705 = vmul.f32 %v695, %v704
    %v706 = vrcp.pop %v703
    %v707 = vmul.f32 %v697, %v706
    %708 = vrot.lane.b32.xlu0 %v188, 112
    %v709 = vpop.permute.xlu0 %708
    %710 = vrot.lane.b32.xlu0 %v183, 112
    %v711 = vpop.permute.xlu0 %710
    %712 = vrot.lane.b32.xlu0 %v185, 112
    %v713 = vpop.permute.xlu0 %712
    %v717 = vsel %vm276, %v705, 0
    %v720 = vsel %vm276, %v707, 0
    %v722 = vsel %vm168, %v713, 0
    %724 = vmatprep.subr.mxu0 0.0
    %725 = vmatpush1.msra.mxu0 0.0
    %726 = vmatprep.subr.mxu0 0.0
    %727 = vmatpush1.msra.mxu0 0.0
    %728 = vmatprep.subr.mxu0 0.0
    %729 = vmatpush1.msra.mxu0 0.0
    %730 = vmatprep.subr.mxu0 0.0
    %731 = vmatpush1.msra.mxu0 0.0
    %732 = vmatprep.subr.mxu0 0.0
    %733 = vmatpush1.msra.mxu0 0.0
    %734 = vmatprep.subr.mxu0 0.0
    %735 = vmatpush1.msra.mxu0 0.0
    %736 = vmatprep.subr.mxu0 0.0
    %737 = vmatpush1.msra.mxu0 0.0
    %738 = vmatprep.subr.mxu0 0.0
    %739 = vmatpush1.msra.mxu0 0.0
    %740 = vmatprep.subr.mxu0 0.0
    %741 = vmatpush1.msra.mxu0 0.0
    %742 = vmatprep.subr.mxu0 0.0
    %743 = vmatpush1.msra.mxu0 0.0
    %744 = vmatprep.subr.mxu0 0.0
    %745 = vmatpush1.msra.mxu0 0.0
    %746 = vmatprep.subr.mxu0 0.0
    %747 = vmatpush1.msra.mxu0 0.0
    %748 = vmatprep.subr.mxu0 0.0
    %749 = vmatpush1.msra.mxu0 0.0
    %750 = vmatprep.subr.mxu0 0.0
    %751 = vmatpush1.msra.mxu0 %v722
    %752 = vmatprep.subr.mxu0 0.0
    %753 = vmatpush1.msra.mxu0 %v711
    %754 = vmatprep.subr.mxu0 0.0
    %755 = vmatpush1.msra.mxu0 %v709
    %756 = vmatprep.subr.mxu0 0.0
    %757 = vmatpush2.msra.mxu0 0.0
    %758 = vmatprep.subr.mxu0 0.0
    %759 = vmatpush2.msra.mxu0 0.0
    %760 = vmatprep.subr.mxu0 0.0
    %761 = vmatpush2.msra.mxu0 0.0
    %762 = vmatprep.subr.mxu0 0.0
    %763 = vmatpush2.msra.mxu0 0.0
    %764 = vmatprep.subr.mxu0 0.0
    %765 = vmatpush2.msra.mxu0 0.0
    %766 = vmatprep.subr.mxu0 0.0
    %767 = vmatpush2.msra.mxu0 0.0
    %768 = vmatprep.subr.mxu0 0.0
    %769 = vmatpush2.msra.mxu0 0.0
    %770 = vmatprep.subr.mxu0 0.0
    %771 = vmatpush2.msra.mxu0 0.0
    %772 = vmatprep.subr.mxu0 0.0
    %773 = vmatpush2.msra.mxu0 0.0
    %774 = vmatprep.subr.mxu0 0.0
    %775 = vmatpush2.msra.mxu0 0.0
    %776 = vmatprep.subr.mxu0 0.0
    %777 = vmatpush2.msra.mxu0 0.0
    %778 = vmatprep.subr.mxu0 0.0
    %779 = vmatpush2.msra.mxu0 0.0
    %780 = vmatprep.subr.mxu0 0.0
    %781 = vmatpush2.msra.mxu0 0.0
    %782 = vmatprep.subr.mxu0 0.0
    %783 = vmatpush2.msra.mxu0 0.0
    %784 = vmatprep.subr.mxu0 0.0
    %785 = vmatpush2.msra.mxu0 0.0
    %786 = vmatprep.subr.mxu0 0.0
    %787 = vmatpush2.msra.mxu0 0.0
    %788 = vmatprep.mubr.f32.mxu0 0.0
    %789 = vmatmul.mubr.f32.gmra.mxu0 %v717
    %v790 = vpop.f32.mrf.mxu0
    %v791 = vadd.f32 0.0, %v790
    %v792 = vpop.f32.mrf.mxu0
    %793 = vmatprep.mubr.f32.mxu0 0.0
    %794 = vmatmul.mubr.f32.gmra.mxu0 %v720
    %v795 = vpop.f32.mrf.mxu0
    %v796 = vadd.f32 0.0, %v795
    %v797 = vpop.f32.mrf.mxu0
    %798 = vdwg.mxu0
    %799 = vrot.lane.b32.xlu0 %v156, 104
    %v800 = vpop.permute.xlu0 %799
    %801 = vrot.lane.b32.xlu0 %v161, 104
    %v802 = vpop.permute.xlu0 %801
    %803 = vrot.lane.b32.xlu0 %v179, 104
    %v804 = vpop.permute.xlu0 %803
    %805 = vrot.lane.b32.xlu0 %v175, 104
    %v806 = vpop.permute.xlu0 %805
    %807 = vrot.lane.b32.xlu0 %v177, 104
    %v808 = vpop.permute.xlu0 %807
    %v809 = vsel %vm189, %v800, 0
    %v811 = vsel %vm189, %v802, 0
    %v813 = vsel %vm189, %v804, 0
    %v815 = vsel %vm189, %v806, 0
    %v817 = vsel %vm189, %v808, 0
    %819 = vmatprep.subr.mxu0 0.0
    %820 = vmatpush1.xpose.msra.mxu0 0.0
    %821 = vmatprep.subr.mxu0 0.0
    %822 = vmatpush1.xpose.msra.mxu0 0.0
    %823 = vmatprep.subr.mxu0 0.0
    %824 = vmatpush1.xpose.msra.mxu0 0.0
    %825 = vmatprep.subr.mxu0 0.0
    %826 = vmatpush1.xpose.msra.mxu0 0.0
    %827 = vmatprep.subr.mxu0 0.0
    %828 = vmatpush1.xpose.msra.mxu0 0.0
    %829 = vmatprep.subr.mxu0 0.0
    %830 = vmatpush1.xpose.msra.mxu0 0.0
    %831 = vmatprep.subr.mxu0 0.0
    %832 = vmatpush1.xpose.msra.mxu0 0.0
    %833 = vmatprep.subr.mxu0 0.0
    %834 = vmatpush1.xpose.msra.mxu0 0.0
    %835 = vmatprep.subr.mxu0 0.0
    %836 = vmatpush1.xpose.msra.mxu0 0.0
    %837 = vmatprep.subr.mxu0 0.0
    %838 = vmatpush1.xpose.msra.mxu0 0.0
    %839 = vmatprep.subr.mxu0 0.0
    %840 = vmatpush1.xpose.msra.mxu0 0.0
    %841 = vmatprep.subr.mxu0 0.0
    %842 = vmatpush1.xpose.msra.mxu0 0.0
    %843 = vmatprep.subr.mxu0 0.0
    %844 = vmatpush1.xpose.msra.mxu0 0.0
    %845 = vmatprep.subr.mxu0 0.0
    %846 = vmatpush1.xpose.msra.mxu0 %v817
    %847 = vmatprep.subr.mxu0 0.0
    %848 = vmatpush1.xpose.msra.mxu0 %v815
    %849 = vmatprep.subr.mxu0 0.0
    %850 = vmatpush1.xpose.msra.mxu0 %v813
    %851 = vmatprep.subr.mxu0 0.0
    %852 = vmatpush2.xpose.msra.mxu0 0.0
    %853 = vmatprep.subr.mxu0 0.0
    %854 = vmatpush2.xpose.msra.mxu0 0.0
    %855 = vmatprep.subr.mxu0 0.0
    %856 = vmatpush2.xpose.msra.mxu0 0.0
    %857 = vmatprep.subr.mxu0 0.0
    %858 = vmatpush2.xpose.msra.mxu0 0.0
    %859 = vmatprep.subr.mxu0 0.0
    %860 = vmatpush2.xpose.msra.mxu0 0.0
    %861 = vmatprep.subr.mxu0 0.0
    %862 = vmatpush2.xpose.msra.mxu0 0.0
    %863 = vmatprep.subr.mxu0 0.0
    %864 = vmatpush2.xpose.msra.mxu0 0.0
    %865 = vmatprep.subr.mxu0 0.0
    %866 = vmatpush2.xpose.msra.mxu0 0.0
    %867 = vmatprep.subr.mxu0 0.0
    %868 = vmatpush2.xpose.msra.mxu0 0.0
    %869 = vmatprep.subr.mxu0 0.0
    %870 = vmatpush2.xpose.msra.mxu0 0.0
    %871 = vmatprep.subr.mxu0 0.0
    %872 = vmatpush2.xpose.msra.mxu0 0.0
    %873 = vmatprep.subr.mxu0 0.0
    %874 = vmatpush2.xpose.msra.mxu0 0.0
    %875 = vmatprep.subr.mxu0 0.0
    %876 = vmatpush2.xpose.msra.mxu0 0.0
    %877 = vmatprep.subr.mxu0 0.0
    %878 = vmatpush2.xpose.msra.mxu0 0.0
    %879 = vmatprep.subr.mxu0 0.0
    %880 = vmatpush2.xpose.msra.mxu0 0.0
    %881 = vmatprep.subr.mxu0 0.0
    %882 = vmatpush2.xpose.msra.mxu0 0.0
    %883 = vmatprep.mubr.f32.mxu0 0.0
    %884 = vmatmul.mubr.f32.gmra.mxu0 %v809
    %v885 = vpop.f32.mrf.mxu0
    %v886 = vadd.f32 %v28, %v885
    %v887 = vpop.f32.mrf.mxu0
    %888 = vmatprep.mubr.f32.mxu0 0.0
    %889 = vmatmul.mubr.f32.gmra.mxu0 %v811
    %v890 = vpop.f32.mrf.mxu0
    %v891 = vadd.f32 %v29, %v890
    %v892 = vpop.f32.mrf.mxu0
    %893 = vdwg.mxu0
    %v894 = vsel %vm276, %v886, -inf
    %895 = vmax.xlane.f32.xlu0 %v894
    %v896 = vpop.xlane.xlu0 %895
    %v897 = vsel %vm276, %v891, -inf
    %898 = vmax.xlane.f32.xlu0 %v897
    %v899 = vpop.xlane.xlu0 %898
    %v900 = vsub.f32 %v886, %v896
    %v901 = vsub.f32 %v891, %v899
    %v902 = vmul.f32 %v900, 1.442695
    %v903 = vpow.pop %v902
    %v904 = vmul.f32 %v901, 1.442695
    %v905 = vpow.pop %v904
    %v906 = vsel %vm276, %v903, 0.0
    %907 = vadd.xlane.f32.xlu0 %v906
    %v908 = vpop.xlane.xlu0 %907
    %v909 = vsel %vm276, %v905, 0.0
    %910 = vadd.xlane.f32.xlu0 %v909
    %v911 = vpop.xlane.xlu0 %910
    %v912 = vrcp.pop %v908
    %v913 = vmul.f32 %v903, %v912
    %v914 = vrcp.pop %v911
    %v915 = vmul.f32 %v905, %v914
    %916 = vrot.lane.b32.xlu0 %v188, 104
    %v917 = vpop.permute.xlu0 %916
    %918 = vrot.lane.b32.xlu0 %v183, 104
    %v919 = vpop.permute.xlu0 %918
    %920 = vrot.lane.b32.xlu0 %v185, 104
    %v921 = vpop.permute.xlu0 %920
    %v925 = vsel %vm276, %v913, 0
    %v928 = vsel %vm276, %v915, 0
    %v930 = vsel %vm168, %v921, 0
    %932 = vmatprep.subr.mxu0 0.0
    %933 = vmatpush1.msra.mxu0 0.0
    %934 = vmatprep.subr.mxu0 0.0
    %935 = vmatpush1.msra.mxu0 0.0
    %936 = vmatprep.subr.mxu0 0.0
    %937 = vmatpush1.msra.mxu0 0.0
    %938 = vmatprep.subr.mxu0 0.0
    %939 = vmatpush1.msra.mxu0 0.0
    %940 = vmatprep.subr.mxu0 0.0
    %941 = vmatpush1.msra.mxu0 0.0
    %942 = vmatprep.subr.mxu0 0.0
    %943 = vmatpush1.msra.mxu0 0.0
    %944 = vmatprep.subr.mxu0 0.0
    %945 = vmatpush1.msra.mxu0 0.0
    %946 = vmatprep.subr.mxu0 0.0
    %947 = vmatpush1.msra.mxu0 0.0
    %948 = vmatprep.subr.mxu0 0.0
    %949 = vmatpush1.msra.mxu0 0.0
    %950 = vmatprep.subr.mxu0 0.0
    %951 = vmatpush1.msra.mxu0 0.0
    %952 = vmatprep.subr.mxu0 0.0
    %953 = vmatpush1.msra.mxu0 0.0
    %954 = vmatprep.subr.mxu0 0.0
    %955 = vmatpush1.msra.mxu0 0.0
    %956 = vmatprep.subr.mxu0 0.0
    %957 = vmatpush1.msra.mxu0 0.0
    %958 = vmatprep.subr.mxu0 0.0
    %959 = vmatpush1.msra.mxu0 %v930
    %960 = vmatprep.subr.mxu0 0.0
    %961 = vmatpush1.msra.mxu0 %v919
    %962 = vmatprep.subr.mxu0 0.0
    %963 = vmatpush1.msra.mxu0 %v917
    %964 = vmatprep.subr.mxu0 0.0
    %965 = vmatpush2.msra.mxu0 0.0
    %966 = vmatprep.subr.mxu0 0.0
    %967 = vmatpush2.msra.mxu0 0.0
    %968 = vmatprep.subr.mxu0 0.0
    %969 = vmatpush2.msra.mxu0 0.0
    %970 = vmatprep.subr.mxu0 0.0
    %971 = vmatpush2.msra.mxu0 0.0
    %972 = vmatprep.subr.mxu0 0.0
    %973 = vmatpush2.msra.mxu0 0.0
    %974 = vmatprep.subr.mxu0 0.0
    %975 = vmatpush2.msra.mxu0 0.0
    %976 = vmatprep.subr.mxu0 0.0
    %977 = vmatpush2.msra.mxu0 0.0
    %978 = vmatprep.subr.mxu0 0.0
    %979 = vmatpush2.msra.mxu0 0.0
    %980 = vmatprep.subr.mxu0 0.0
    %981 = vmatpush2.msra.mxu0 0.0
    %982 = vmatprep.subr.mxu0 0.0
    %983 = vmatpush2.msra.mxu0 0.0
    %984 = vmatprep.subr.mxu0 0.0
    %985 = vmatpush2.msra.mxu0 0.0
    %986 = vmatprep.subr.mxu0 0.0
    %987 = vmatpush2.msra.mxu0 0.0
    %988 = vmatprep.subr.mxu0 0.0
    %989 = vmatpush2.msra.mxu0 0.0
    %990 = vmatprep.subr.mxu0 0.0
    %991 = vmatpush2.msra.mxu0 0.0
    %992 = vmatprep.subr.mxu0 0.0
    %993 = vmatpush2.msra.mxu0 0.0
    %994 = vmatprep.subr.mxu0 0.0
    %995 = vmatpush2.msra.mxu0 0.0
    %996 = vmatprep.mubr.f32.mxu0 0.0
    %997 = vmatmul.mubr.f32.gmra.mxu0 %v925
    %v998 = vpop.f32.mrf.mxu0
    %v999 = vadd.f32 0.0, %v998
    %v1000 = vpop.f32.mrf.mxu0
    %1001 = vmatprep.mubr.f32.mxu0 0.0
    %1002 = vmatmul.mubr.f32.gmra.mxu0 %v928
    %v1003 = vpop.f32.mrf.mxu0
    %v1004 = vadd.f32 0.0, %v1003
    %v1005 = vpop.f32.mrf.mxu0
    %1006 = vdwg.mxu0
    %1009 = vrot.lane.b32.xlu0 %v583, 8
    %v1010 = vpop.permute.xlu0 %1009
    %1011 = vrot.lane.b32.xlu0 %v588, 8
    %v1012 = vpop.permute.xlu0 %1011
    %1017 = vrot.lane.b32.xlu0 %v791, 16
    %v1018 = vpop.permute.xlu0 %1017
    %1019 = vrot.lane.b32.xlu0 %v796, 16
    %v1020 = vpop.permute.xlu0 %1019
    %1025 = vrot.lane.b32.xlu0 %v999, 24
    %v1026 = vpop.permute.xlu0 %1025
    %1027 = vrot.lane.b32.xlu0 %v1004, 24
    %v1028 = vpop.permute.xlu0 %1027
    %v1031 = vsel %vm189, %v374, %v1010
    %v1032 = vsel %vm189, %v379, %v1012
    %vm1033 = vcmask 130048
    %v1034 = vsel %vm1033, %v1031, %v1018
    %v1035 = vsel %vm1033, %v1032, %v1020
    %vm1036 = vcmask 195584
    %v1037 = vsel %vm1036, %v1034, %v1026
    %v1038 = vsel %vm1036, %v1035, %v1028
    %v1039 = vld [vmem:[#allocation2 + $0x28] sm:$0xff]
    %v1040 = vld [vmem:[#allocation2 + $0x30] sm:$0xff]
    %v1041 = vld [vmem:[#allocation2 + $0x38] sm:$0xff]
    %v1042 = vld [vmem:[#allocation2 + $0x40] sm:$0xff]
    %v1043 = vld [vmem:[#allocation2 + $0x48] sm:$0x1]
    %v1044 = vlaneseq
    %v1045 = vshrl.u32 %v1044, 7
    %v1046 = vsub.s32 0, %v1045
    %v1047 = vrot.slane %v1043, %v1046
    %v1049 = vsel %vm34, %v1037, 0
    %v1052 = vsel %vm34, %v1038, 0
    %1054 = vmatprep.subr.mxu0 0.0
    %1055 = vmatpush1.msra.mxu0 0.0
    %1056 = vmatprep.subr.mxu0 0.0
    %1057 = vmatpush1.msra.mxu0 0.0
    %1058 = vmatprep.subr.mxu0 0.0
    %1059 = vmatpush1.msra.mxu0 0.0
    %1060 = vmatprep.subr.mxu0 0.0
    %1061 = vmatpush1.msra.mxu0 0.0
    %1062 = vmatprep.subr.mxu0 0.0
    %1063 = vmatpush1.msra.mxu0 0.0
    %1064 = vmatprep.subr.mxu0 0.0
    %1065 = vmatpush1.msra.mxu0 0.0
    %1066 = vmatprep.subr.mxu0 0.0
    %1067 = vmatpush1.msra.mxu0 0.0
    %1068 = vmatprep.subr.mxu0 0.0
    %1069 = vmatpush1.msra.mxu0 0.0
    %1070 = vmatprep.subr.mxu0 0.0
    %1071 = vmatpush1.msra.mxu0 0.0
    %1072 = vmatprep.subr.mxu0 0.0
    %1073 = vmatpush1.msra.mxu0 0.0
    %1074 = vmatprep.subr.mxu0 0.0
    %1075 = vmatpush1.msra.mxu0 0.0
    %1076 = vmatprep.subr.mxu0 0.0
    %1077 = vmatpush1.msra.mxu0 0.0
    %1078 = vmatprep.subr.mxu0 0.0
    %1079 = vmatpush1.msra.mxu0 %v1042
    %1080 = vmatprep.subr.mxu0 0.0
    %1081 = vmatpush1.msra.mxu0 %v1041
    %1082 = vmatprep.subr.mxu0 0.0
    %1083 = vmatpush1.msra.mxu0 %v1040
    %1084 = vmatprep.subr.mxu0 0.0
    %1085 = vmatpush1.msra.mxu0 %v1039
    %1086 = vmatprep.subr.mxu0 0.0
    %1087 = vmatpush2.msra.mxu0 0.0
    %1088 = vmatprep.subr.mxu0 0.0
    %1089 = vmatpush2.msra.mxu0 0.0
    %1090 = vmatprep.subr.mxu0 0.0
    %1091 = vmatpush2.msra.mxu0 0.0
    %1092 = vmatprep.subr.mxu0 0.0
    %1093 = vmatpush2.msra.mxu0 0.0
    %1094 = vmatprep.subr.mxu0 0.0
    %1095 = vmatpush2.msra.mxu0 0.0
    %1096 = vmatprep.subr.mxu0 0.0
    %1097 = vmatpush2.msra.mxu0 0.0
    %1098 = vmatprep.subr.mxu0 0.0
    %1099 = vmatpush2.msra.mxu0 0.0
    %1100 = vmatprep.subr.mxu0 0.0
    %1101 = vmatpush2.msra.mxu0 0.0
    %1102 = vmatprep.subr.mxu0 0.0
    %1103 = vmatpush2.msra.mxu0 0.0
    %1104 = vmatprep.subr.mxu0 0.0
    %1105 = vmatpush2.msra.mxu0 0.0
    %1106 = vmatprep.subr.mxu0 0.0
    %1107 = vmatpush2.msra.mxu0 0.0
    %1108 = vmatprep.subr.mxu0 0.0
    %1109 = vmatpush2.msra.mxu0 0.0
    %1110 = vmatprep.subr.mxu0 0.0
    %1111 = vmatpush2.msra.mxu0 0.0
    %1112 = vmatprep.subr.mxu0 0.0
    %1113 = vmatpush2.msra.mxu0 0.0
    %1114 = vmatprep.subr.mxu0 0.0
    %1115 = vmatpush2.msra.mxu0 0.0
    %1116 = vmatprep.subr.mxu0 0.0
    %1117 = vmatpush2.msra.mxu0 0.0
    %1118 = vmatprep.mubr.f32.mxu0 0.0
    %1119 = vmatmul.mubr.f32.gmra.mxu0 %v1049
    %v1120 = vpop.f32.mrf.mxu0
    %v1121 = vadd.f32 %v1047, %v1120
    %v1122 = vpop.f32.mrf.mxu0
    %1123 = vmatprep.mubr.f32.mxu0 0.0
    %1124 = vmatmul.mubr.f32.gmra.mxu0 %v1052
    %v1125 = vpop.f32.mrf.mxu0
    %v1126 = vadd.f32 %v1047, %v1125
    %v1127 = vpop.f32.mrf.mxu0
    %1128 = vdwg.mxu0
    %v1129 = vadd.f32 %v1121, %v72
    %v1130 = vadd.f32 %v1126, %v73
    %v1131 = vld [vmem:[#allocation2 + $0x50] sm:$0x1]
    %v1132 = vld [vmem:[#allocation2 + $0x58] sm:$0x1]
    %v1133 = vsel %vm34, %v1129, 0.0
    %1134 = vadd.xlane.f32.xlu0 %v1133
    %v1135 = vpop.xlane.xlu0 %1134
    %v1136 = vsel %vm34, %v1130, 0.0
    %1137 = vadd.xlane.f32.xlu0 %v1136
    %v1138 = vpop.xlane.xlu0 %1137
    %v1139 = vmul.f32 %v1135, %v41
    %v1140 = vmul.f32 %v1138, %v41
    %v1141 = vsub.f32 %v1129, %v1139
    %v1142 = vsub.f32 %v1130, %v1140
    %v1143 = vmul.f32 %v1141, %v1141
    %v1144 = vmul.f32 %v1142, %v1142
    %v1145 = vsel %vm34, %v1143, 0.0
    %1146 = vadd.xlane.f32.xlu0 %v1145
    %v1147 = vpop.xlane.xlu0 %1146
    %v1148 = vsel %vm34, %v1144, 0.0
    %1149 = vadd.xlane.f32.xlu0 %v1148
    %v1150 = vpop.xlane.xlu0 %1149
    %v1151 = vmul.f32 %v1147, %v41
    %v1152 = vmul.f32 %v1150, %v41
    %v1153 = vadd.f32 %v1151, 1e-12
    %v1154 = vadd.f32 %v1152, 1e-12
    %v1155 = vrsqrt.pop %v1153
    %v1156 = vrsqrt.pop %v1154
    %v1157 = vmul.f32 %v1141, %v1155
    %v1158 = vmul.f32 %v1142, %v1156
    %v1159 = vlaneseq
    %v1160 = vshrl.u32 %v1159, 7
    %v1161 = vsub.s32 0, %v1160
    %v1162 = vrot.slane %v1131, %v1161
    %v1163 = vmul.f32 %v1157, %v1162
    %v1164 = vmul.f32 %v1158, %v1162
    %v1165 = vlaneseq
    %v1166 = vshrl.u32 %v1165, 7
    %v1167 = vsub.s32 0, %v1166
    %v1168 = vrot.slane %v1132, %v1167
    %v1169 = vadd.f32 %v1163, %v1168
    %v1170 = vadd.f32 %v1164, %v1168
    %v1171 = vld [vmem:[#allocation2 + $0x60] sm:$0xff]
    %v1172 = vld [vmem:[#allocation2 + $0x68] sm:$0xff]
    %v1173 = vld [vmem:[#allocation2 + $0x70] sm:$0xff]
    %v1174 = vld [vmem:[#allocation2 + $0x78] sm:$0xff]
    %v1175 = vld [vmem:[#allocation2 + $0x80] sm:$0x1]
    %v1176 = vlaneseq
    %v1177 = vshrl.u32 %v1176, 7
    %v1178 = vsub.s32 0, %v1177
    %v1179 = vrot.slane %v1175, %v1178
    %v1181 = vsel %vm34, %v1169, 0
    %v1184 = vsel %vm34, %v1170, 0
    %1186 = vmatprep.subr.mxu0 0.0
    %1187 = vmatpush1.msra.mxu0 0.0
    %1188 = vmatprep.subr.mxu0 0.0
    %1189 = vmatpush1.msra.mxu0 0.0
    %1190 = vmatprep.subr.mxu0 0.0
    %1191 = vmatpush1.msra.mxu0 0.0
    %1192 = vmatprep.subr.mxu0 0.0
    %1193 = vmatpush1.msra.mxu0 0.0
    %1194 = vmatprep.subr.mxu0 0.0
    %1195 = vmatpush1.msra.mxu0 0.0
    %1196 = vmatprep.subr.mxu0 0.0
    %1197 = vmatpush1.msra.mxu0 0.0
    %1198 = vmatprep.subr.mxu0 0.0
    %1199 = vmatpush1.msra.mxu0 0.0
    %1200 = vmatprep.subr.mxu0 0.0
    %1201 = vmatpush1.msra.mxu0 0.0
    %1202 = vmatprep.subr.mxu0 0.0
    %1203 = vmatpush1.msra.mxu0 0.0
    %1204 = vmatprep.subr.mxu0 0.0
    %1205 = vmatpush1.msra.mxu0 0.0
    %1206 = vmatprep.subr.mxu0 0.0
    %1207 = vmatpush1.msra.mxu0 0.0
    %1208 = vmatprep.subr.mxu0 0.0
    %1209 = vmatpush1.msra.mxu0 0.0
    %1210 = vmatprep.subr.mxu0 0.0
    %1211 = vmatpush1.msra.mxu0 %v1174
    %1212 = vmatprep.subr.mxu0 0.0
    %1213 = vmatpush1.msra.mxu0 %v1173
    %1214 = vmatprep.subr.mxu0 0.0
    %1215 = vmatpush1.msra.mxu0 %v1172
    %1216 = vmatprep.subr.mxu0 0.0
    %1217 = vmatpush1.msra.mxu0 %v1171
    %1218 = vmatprep.subr.mxu0 0.0
    %1219 = vmatpush2.msra.mxu0 0.0
    %1220 = vmatprep.subr.mxu0 0.0
    %1221 = vmatpush2.msra.mxu0 0.0
    %1222 = vmatprep.subr.mxu0 0.0
    %1223 = vmatpush2.msra.mxu0 0.0
    %1224 = vmatprep.subr.mxu0 0.0
    %1225 = vmatpush2.msra.mxu0 0.0
    %1226 = vmatprep.subr.mxu0 0.0
    %1227 = vmatpush2.msra.mxu0 0.0
    %1228 = vmatprep.subr.mxu0 0.0
    %1229 = vmatpush2.msra.mxu0 0.0
    %1230 = vmatprep.subr.mxu0 0.0
    %1231 = vmatpush2.msra.mxu0 0.0
    %1232 = vmatprep.subr.mxu0 0.0
    %1233 = vmatpush2.msra.mxu0 0.0
    %1234 = vmatprep.subr.mxu0 0.0
    %1235 = vmatpush2.msra.mxu0 0.0
    %1236 = vmatprep.subr.mxu0 0.0
    %1237 = vmatpush2.msra.mxu0 0.0
    %1238 = vmatprep.subr.mxu0 0.0
    %1239 = vmatpush2.msra.mxu0 0.0
    %1240 = vmatprep.subr.mxu0 0.0
    %1241 = vmatpush2.msra.mxu0 0.0
    %1242 = vmatprep.subr.mxu0 0.0
    %1243 = vmatpush2.msra.mxu0 0.0
    %1244 = vmatprep.subr.mxu0 0.0
    %1245 = vmatpush2.msra.mxu0 0.0
    %1246 = vmatprep.subr.mxu0 0.0
    %1247 = vmatpush2.msra.mxu0 0.0
    %1248 = vmatprep.subr.mxu0 0.0
    %1249 = vmatpush2.msra.mxu0 0.0
    %1250 = vmatprep.mubr.f32.mxu0 0.0
    %1251 = vmatmul.mubr.f32.gmra.mxu0 %v1181
    %v1252 = vpop.f32.mrf.mxu0
    %v1253 = vadd.f32 %v1179, %v1252
    %v1254 = vpop.f32.mrf.mxu0
    %1255 = vmatprep.mubr.f32.mxu0 0.0
    %1256 = vmatmul.mubr.f32.gmra.mxu0 %v1184
    %v1257 = vpop.f32.mrf.mxu0
    %v1258 = vadd.f32 %v1179, %v1257
    %v1259 = vpop.f32.mrf.mxu0
    %1260 = vdwg.mxu0
    %v1261 = vmul.f32 %v1253, %v1253
    %v1262 = vmul.f32 %v1258, %v1258
    %v1263 = vmul.f32 %v1253, %v1261
    %v1264 = vmul.f32 %v1258, %v1262
    %v1265 = vmul.f32 %v1263, 0.044715
    %v1266 = vmul.f32 %v1264, 0.044715
    %v1267 = vadd.f32 %v1253, %v1265
    %v1268 = vadd.f32 %v1258, %v1266
    %v1269 = vmul.f32 %v1267, 0.7978846
    %v1270 = vmul.f32 %v1268, 0.7978846
    %v1271 = vtanh.pop %v1269
    %v1272 = vtanh.pop %v1270
    %v1273 = vadd.f32 %v1271, 1.0
    %v1274 = vadd.f32 %v1272, 1.0
    %v1275 = vmul.f32 %v1273, 0.5
    %v1276 = vmul.f32 %v1274, 0.5
    %v1277 = vmul.f32 %v1253, %v1275
    %v1278 = vmul.f32 %v1258, %v1276
    %v1279 = vld [vmem:[#allocation2 + $0x88] sm:$0xff]
    %v1280 = vld [vmem:[#allocation2 + $0x90] sm:$0xff]
    %v1281 = vld [vmem:[#allocation2 + $0x98] sm:$0xff]
    %v1282 = vld [vmem:[#allocation2 + $0xa0] sm:$0xff]
    %v1283 = vld [vmem:[#allocation2 + $0xa8] sm:$0xff]
    %v1284 = vld [vmem:[#allocation2 + $0xb0] sm:$0xff]
    %v1285 = vld [vmem:[#allocation2 + $0xb8] sm:$0xff]
    %v1286 = vld [vmem:[#allocation2 + $0xc0] sm:$0xff]
    %v1287 = vld [vmem:[#allocation2 + $0xc8] sm:$0x1]
    %v1288 = vlaneseq
    %v1289 = vshrl.u32 %v1288, 7
    %v1290 = vsub.s32 0, %v1289
    %v1291 = vrot.slane %v1287, %v1290
    %vm1292 = vcmask 523264
    %v1294 = vsel %vm1292, %v1277, 0
    %v1297 = vsel %vm1292, %v1278, 0
    %1299 = vmatprep.subr.mxu0 0.0
    %1300 = vmatpush1.msra.mxu0 0.0
    %1301 = vmatprep.subr.mxu0 0.0
    %1302 = vmatpush1.msra.mxu0 0.0
    %1303 = vmatprep.subr.mxu0 0.0
    %1304 = vmatpush1.msra.mxu0 0.0
    %1305 = vmatprep.subr.mxu0 0.0
    %1306 = vmatpush1.msra.mxu0 0.0
    %1307 = vmatprep.subr.mxu0 0.0
    %1308 = vmatpush1.msra.mxu0 0.0
    %1309 = vmatprep.subr.mxu0 0.0
    %1310 = vmatpush1.msra.mxu0 0.0
    %1311 = vmatprep.subr.mxu0 0.0
    %1312 = vmatpush1.msra.mxu0 0.0
    %1313 = vmatprep.subr.mxu0 0.0
    %1314 = vmatpush1.msra.mxu0 0.0
    %1315 = vmatprep.subr.mxu0 0.0
    %1316 = vmatpush1.msra.mxu0 %v1286
    %1317 = vmatprep.subr.mxu0 0.0
    %1318 = vmatpush1.msra.mxu0 %v1285
    %1319 = vmatprep.subr.mxu0 0.0
    %1320 = vmatpush1.msra.mxu0 %v1284
    %1321 = vmatprep.subr.mxu0 0.0
    %1322 = vmatpush1.msra.mxu0 %v1283
    %1323 = vmatprep.subr.mxu0 0.0
    %1324 = vmatpush1.msra.mxu0 %v1282
    %1325 = vmatprep.subr.mxu0 0.0
    %1326 = vmatpush1.msra.mxu0 %v1281
    %1327 = vmatprep.subr.mxu0 0.0
    %1328 = vmatpush1.msra.mxu0 %v1280
    %1329 = vmatprep.subr.mxu0 0.0
    %1330 = vmatpush1.msra.mxu0 %v1279
    %1331 = vmatprep.subr.mxu0 0.0
    %1332 = vmatpush2.msra.mxu0 0.0
    %1333 = vmatprep.subr.mxu0 0.0
    %1334 = vmatpush2.msra.mxu0 0.0
    %1335 = vmatprep.subr.mxu0 0.0
    %1336 = vmatpush2.msra.mxu0 0.0
    %1337 = vmatprep.subr.mxu0 0.0
    %1338 = vmatpush2.msra.mxu0 0.0
    %1339 = vmatprep.subr.mxu0 0.0
    %1340 = vmatpush2.msra.mxu0 0.0
    %1341 = vmatprep.subr.mxu0 0.0
    %1342 = vmatpush2.msra.mxu0 0.0
    %1343 = vmatprep.subr.mxu0 0.0
    %1344 = vmatpush2.msra.mxu0 0.0
    %1345 = vmatprep.subr.mxu0 0.0
    %1346 = vmatpush2.msra.mxu0 0.0
    %1347 = vmatprep.subr.mxu0 0.0
    %1348 = vmatpush2.msra.mxu0 0.0
    %1349 = vmatprep.subr.mxu0 0.0
    %1350 = vmatpush2.msra.mxu0 0.0
    %1351 = vmatprep.subr.mxu0 0.0
    %1352 = vmatpush2.msra.mxu0 0.0
    %1353 = vmatprep.subr.mxu0 0.0
    %1354 = vmatpush2.msra.mxu0 0.0
    %1355 = vmatprep.subr.mxu0 0.0
    %1356 = vmatpush2.msra.mxu0 0.0
    %1357 = vmatprep.subr.mxu0 0.0
    %1358 = vmatpush2.msra.mxu0 0.0
    %1359 = vmatprep.subr.mxu0 0.0
    %1360 = vmatpush2.msra.mxu0 0.0
    %1361 = vmatprep.subr.mxu0 0.0
    %1362 = vmatpush2.msra.mxu0 0.0
    %1363 = vmatprep.mubr.f32.mxu0 0.0
    %1364 = vmatmul.mubr.f32.gmra.mxu0 %v1294
    %v1365 = vpop.f32.mrf.mxu0
    %v1366 = vadd.f32 %v1291, %v1365
    %v1367 = vpop.f32.mrf.mxu0
    %1368 = vmatprep.mubr.f32.mxu0 0.0
    %1369 = vmatmul.mubr.f32.gmra.mxu0 %v1297
    %v1370 = vpop.f32.mrf.mxu0
    %v1371 = vadd.f32 %v1291, %v1370
    %v1372 = vpop.f32.mrf.mxu0
    %1373 = vdwg.mxu0
    %v1374 = vadd.f32 %v1366, %v1169
    %v1375 = vadd.f32 %v1371, %v1170
    %v1376 = vld [vmem:[#allocation2 + $0xd0] sm:$0x1]
    %v1377 = vld [vmem:[#allocation2 + $0xd8] sm:$0x1]
    %v1378 = vsel %vm34, %v1374, 0.0
    %1379 = vadd.xlane.f32.xlu0 %v1378
    %v1380 = vpop.xlane.xlu0 %1379
    %v1381 = vsel %vm34, %v1375, 0.0
    %1382 = vadd.xlane.f32.xlu0 %v1381
    %v1383 = vpop.xlane.xlu0 %1382
    %v1384 = vmul.f32 %v1380, %v41
    %v1385 = vmul.f32 %v1383, %v41
    %v1386 = vsub.f32 %v1374, %v1384
    %v1387 = vsub.f32 %v1375, %v1385
    %v1388 = vmul.f32 %v1386, %v1386
    %v1389 = vmul.f32 %v1387, %v1387
    %v1390 = vsel %vm34, %v1388, 0.0
    %1391 = vadd.xlane.f32.xlu0 %v1390
    %v1392 = vpop.xlane.xlu0 %1391
    %v1393 = vsel %vm34, %v1389, 0.0
    %1394 = vadd.xlane.f32.xlu0 %v1393
    %v1395 = vpop.xlane.xlu0 %1394
    %v1396 = vmul.f32 %v1392, %v41
    %v1397 = vmul.f32 %v1395, %v41
    %v1398 = vadd.f32 %v1396, 1e-12
    %v1399 = vadd.f32 %v1397, 1e-12
    %v1400 = vrsqrt.pop %v1398
    %v1401 = vrsqrt.pop %v1399
    %v1402 = vmul.f32 %v1386, %v1400
    %v1403 = vmul.f32 %v1387, %v1401
    %v1404 = vlaneseq
    %v1405 = vshrl.u32 %v1404, 7
    %v1406 = vsub.s32 0, %v1405
    %v1407 = vrot.slane %v1376, %v1406
    %v1408 = vmul.f32 %v1402, %v1407
    %v1409 = vmul.f32 %v1403, %v1407
    %v1410 = vlaneseq
    %v1411 = vshrl.u32 %v1410, 7
    %v1412 = vsub.s32 0, %v1411
    %v1413 = vrot.slane %v1377, %v1412
    %v1414 = vadd.f32 %v1408, %v1413
    %v1415 = vadd.f32 %v1409, %v1413
    %v1416 = vld [vmem:[#allocation2 + $0xf0] sm:$0xff]
    %v1417 = vld [vmem:[#allocation2 + $0xf8] sm:$0xff]
    %v1418 = vld [vmem:[#allocation2 + $0x100] sm:$0xff]
    %v1419 = vld [vmem:[#allocation2 + $0x108] sm:$0xff]
    %v1420 = vld [vmem:[#allocation2 + $0x110] sm:$0x1]
    %v1421 = vlaneseq
    %v1422 = vshrl.u32 %v1421, 7
    %v1423 = vsub.s32 0, %v1422
    %v1424 = vrot.slane %v1420, %v1423
    %v1426 = vsel %vm34, %v1414, 0
    %v1429 = vsel %vm34, %v1415, 0
    %1431 = vmatprep.subr.mxu0 0.0
    %1432 = vmatpush1.msra.mxu0 0.0
    %1433 = vmatprep.subr.mxu0 0.0
    %1434 = vmatpush1.msra.mxu0 0.0
    %1435 = vmatprep.subr.mxu0 0.0
    %1436 = vmatpush1.msra.mxu0 0.0
    %1437 = vmatprep.subr.mxu0 0.0
    %1438 = vmatpush1.msra.mxu0 0.0
    %1439 = vmatprep.subr.mxu0 0.0
    %1440 = vmatpush1.msra.mxu0 0.0
    %1441 = vmatprep.subr.mxu0 0.0
    %1442 = vmatpush1.msra.mxu0 0.0
    %1443 = vmatprep.subr.mxu0 0.0
    %1444 = vmatpush1.msra.mxu0 0.0
    %1445 = vmatprep.subr.mxu0 0.0
    %1446 = vmatpush1.msra.mxu0 0.0
    %1447 = vmatprep.subr.mxu0 0.0
    %1448 = vmatpush1.msra.mxu0 0.0
    %1449 = vmatprep.subr.mxu0 0.0
    %1450 = vmatpush1.msra.mxu0 0.0
    %1451 = vmatprep.subr.mxu0 0.0
    %1452 = vmatpush1.msra.mxu0 0.0
    %1453 = vmatprep.subr.mxu0 0.0
    %1454 = vmatpush1.msra.mxu0 0.0
    %1455 = vmatprep.subr.mxu0 0.0
    %1456 = vmatpush1.msra.mxu0 %v1419
    %1457 = vmatprep.subr.mxu0 0.0
    %1458 = vmatpush1.msra.mxu0 %v1418
    %1459 = vmatprep.subr.mxu0 0.0
    %1460 = vmatpush1.msra.mxu0 %v1417
    %1461 = vmatprep.subr.mxu0 0.0
    %1462 = vmatpush1.msra.mxu0 %v1416
    %1463 = vmatprep.subr.mxu0 0.0
    %1464 = vmatpush2.msra.mxu0 0.0
    %1465 = vmatprep.subr.mxu0 0.0
    %1466 = vmatpush2.msra.mxu0 0.0
    %1467 = vmatprep.subr.mxu0 0.0
    %1468 = vmatpush2.msra.mxu0 0.0
    %1469 = vmatprep.subr.mxu0 0.0
    %1470 = vmatpush2.msra.mxu0 0.0
    %1471 = vmatprep.subr.mxu0 0.0
    %1472 = vmatpush2.msra.mxu0 0.0
    %1473 = vmatprep.subr.mxu0 0.0
    %1474 = vmatpush2.msra.mxu0 0.0
    %1475 = vmatprep.subr.mxu0 0.0
    %1476 = vmatpush2.msra.mxu0 0.0
    %1477 = vmatprep.subr.mxu0 0.0
    %1478 = vmatpush2.msra.mxu0 0.0
    %1479 = vmatprep.subr.mxu0 0.0
    %1480 = vmatpush2.msra.mxu0 0.0
    %1481 = vmatprep.subr.mxu0 0.0
    %1482 = vmatpush2.msra.mxu0 0.0
    %1483 = vmatprep.subr.mxu0 0.0
    %1484 = vmatpush2.msra.mxu0 0.0
    %1485 = vmatprep.subr.mxu0 0.0
    %1486 = vmatpush2.msra.mxu0 0.0
    %1487 = vmatprep.subr.mxu0 0.0
    %1488 = vmatpush2.msra.mxu0 0.0
    %1489 = vmatprep.subr.mxu0 0.0
    %1490 = vmatpush2.msra.mxu0 0.0
    %1491 = vmatprep.subr.mxu0 0.0
    %1492 = vmatpush2.msra.mxu0 0.0
    %1493 = vmatprep.subr.mxu0 0.0
    %1494 = vmatpush2.msra.mxu0 0.0
    %1495 = vmatprep.mubr.f32.mxu0 0.0
    %1496 = vmatmul.mubr.f32.gmra.mxu0 %v1426
    %v1497 = vpop.f32.mrf.mxu0
    %v1498 = vadd.f32 %v1424, %v1497
    %v1499 = vpop.f32.mrf.mxu0
    %1500 = vmatprep.mubr.f32.mxu0 0.0
    %1501 = vmatmul.mubr.f32.gmra.mxu0 %v1429
    %v1502 = vpop.f32.mrf.mxu0
    %v1503 = vadd.f32 %v1424, %v1502
    %v1504 = vpop.f32.mrf.mxu0
    %1505 = vdwg.mxu0
    %v1506 = vld [vmem:[#allocation2 + $0x1d0] sm:$0xf]
    %v1507 = vld [vmem:[#allocation2 + $0x1d8] sm:$0xf]
    %v1510 = vrot.slane %v1498, 4
    %v1511 = vrot.slane %v1503, 4
    %v1512 = vsel %vm168, %v1510, %v1511
    %1513 = vrot.lane.b32.xlu0 %v1510, 96
    %v1514 = vpop.permute.xlu0 %1513
    %1515 = vrot.lane.b32.xlu0 %v1512, 96
    %v1516 = vpop.permute.xlu0 %1515
    %1517 = vrot.lane.b32.xlu0 %v1511, 96
    %v1518 = vpop.permute.xlu0 %1517
    %v1520 = vsel %vm168, %v1506, %v1514
    %1521 = vrot.lane.b32.xlu0 %v1510, 64
    %v1522 = vpop.permute.xlu0 %1521
    %1523 = vrot.lane.b32.xlu0 %v1512, 64
    %v1524 = vpop.permute.xlu0 %1523
    %1525 = vrot.lane.b32.xlu0 %v1511, 64
    %v1526 = vpop.permute.xlu0 %1525
    %v1529 = vsel %vm168, %v1507, %v1522
    %v1530 = vsel %vm189, %v1498, 0
    %v1532 = vsel %vm189, %v1503, 0
    %v1535 = vsel %vm189, %v1520, 0
    %v1537 = vsel %vm189, %v1516, 0
    %v1539 = vsel %vm189, %v1518, 0
    %1541 = vmatprep.subr.mxu0 0.0
    %1542 = vmatpush1.xpose.msra.mxu0 0.0
    %1543 = vmatprep.subr.mxu0 0.0
    %1544 = vmatpush1.xpose.msra.mxu0 0.0
    %1545 = vmatprep.subr.mxu0 0.0
    %1546 = vmatpush1.xpose.msra.mxu0 0.0
    %1547 = vmatprep.subr.mxu0 0.0
    %1548 = vmatpush1.xpose.msra.mxu0 0.0
    %1549 = vmatprep.subr.mxu0 0.0
    %1550 = vmatpush1.xpose.msra.mxu0 0.0
    %1551 = vmatprep.subr.mxu0 0.0
    %1552 = vmatpush1.xpose.msra.mxu0 0.0
    %1553 = vmatprep.subr.mxu0 0.0
    %1554 = vmatpush1.xpose.msra.mxu0 0.0
    %1555 = vmatprep.subr.mxu0 0.0
    %1556 = vmatpush1.xpose.msra.mxu0 0.0
    %1557 = vmatprep.subr.mxu0 0.0
    %1558 = vmatpush1.xpose.msra.mxu0 0.0
    %1559 = vmatprep.subr.mxu0 0.0
    %1560 = vmatpush1.xpose.msra.mxu0 0.0
    %1561 = vmatprep.subr.mxu0 0.0
    %1562 = vmatpush1.xpose.msra.mxu0 0.0
    %1563 = vmatprep.subr.mxu0 0.0
    %1564 = vmatpush1.xpose.msra.mxu0 0.0
    %1565 = vmatprep.subr.mxu0 0.0
    %1566 = vmatpush1.xpose.msra.mxu0 0.0
    %1567 = vmatprep.subr.mxu0 0.0
    %1568 = vmatpush1.xpose.msra.mxu0 %v1539
    %1569 = vmatprep.subr.mxu0 0.0
    %1570 = vmatpush1.xpose.msra.mxu0 %v1537
    %1571 = vmatprep.subr.mxu0 0.0
    %1572 = vmatpush1.xpose.msra.mxu0 %v1535
    %1573 = vmatprep.subr.mxu0 0.0
    %1574 = vmatpush2.xpose.msra.mxu0 0.0
    %1575 = vmatprep.subr.mxu0 0.0
    %1576 = vmatpush2.xpose.msra.mxu0 0.0
    %1577 = vmatprep.subr.mxu0 0.0
    %1578 = vmatpush2.xpose.msra.mxu0 0.0
    %1579 = vmatprep.subr.mxu0 0.0
    %1580 = vmatpush2.xpose.msra.mxu0 0.0
    %1581 = vmatprep.subr.mxu0 0.0
    %1582 = vmatpush2.xpose.msra.mxu0 0.0
    %1583 = vmatprep.subr.mxu0 0.0
    %1584 = vmatpush2.xpose.msra.mxu0 0.0
    %1585 = vmatprep.subr.mxu0 0.0
    %1586 = vmatpush2.xpose.msra.mxu0 0.0
    %1587 = vmatprep.subr.mxu0 0.0
    %1588 = vmatpush2.xpose.msra.mxu0 0.0
    %1589 = vmatprep.subr.mxu0 0.0
    %1590 = vmatpush2.xpose.msra.mxu0 0.0
    %1591 = vmatprep.subr.mxu0 0.0
    %1592 = vmatpush2.xpose.msra.mxu0 0.0
    %1593 = vmatprep.subr.mxu0 0.0
    %1594 = vmatpush2.xpose.msra.mxu0 0.0
    %1595 = vmatprep.subr.mxu0 0.0
    %1596 = vmatpush2.xpose.msra.mxu0 0.0
    %1597 = vmatprep.subr.mxu0 0.0
    %1598 = vmatpush2.xpose.msra.mxu0 0.0
    %1599 = vmatprep.subr.mxu0 0.0
    %1600 = vmatpush2.xpose.msra.mxu0 0.0
    %1601 = vmatprep.subr.mxu0 0.0
    %1602 = vmatpush2.xpose.msra.mxu0 0.0
    %1603 = vmatprep.subr.mxu0 0.0
    %1604 = vmatpush2.xpose.msra.mxu0 0.0
    %1605 = vmatprep.mubr.f32.mxu0 0.0
    %1606 = vmatmul.mubr.f32.gmra.mxu0 %v1530
    %v1607 = vpop.f32.mrf.mxu0
    %v1608 = vadd.f32 %v28, %v1607
    %v1609 = vpop.f32.mrf.mxu0
    %1610 = vmatprep.mubr.f32.mxu0 0.0
    %1611 = vmatmul.mubr.f32.gmra.mxu0 %v1532
    %v1612 = vpop.f32.mrf.mxu0
    %v1613 = vadd.f32 %v29, %v1612
    %v1614 = vpop.f32.mrf.mxu0
    %1615 = vdwg.mxu0
    %v1616 = vsel %vm276, %v1608, -inf
    %1617 = vmax.xlane.f32.xlu0 %v1616
    %v1618 = vpop.xlane.xlu0 %1617
    %v1619 = vsel %vm276, %v1613, -inf
    %1620 = vmax.xlane.f32.xlu0 %v1619
    %v1621 = vpop.xlane.xlu0 %1620
    %v1622 = vsub.f32 %v1608, %v1618
    %v1623 = vsub.f32 %v1613, %v1621
    %v1624 = vmul.f32 %v1622, 1.442695
    %v1625 = vpow.pop %v1624
    %v1626 = vmul.f32 %v1623, 1.442695
    %v1627 = vpow.pop %v1626
    %v1628 = vsel %vm276, %v1625, 0.0
    %1629 = vadd.xlane.f32.xlu0 %v1628
    %v1630 = vpop.xlane.xlu0 %1629
    %v1631 = vsel %vm276, %v1627, 0.0
    %1632 = vadd.xlane.f32.xlu0 %v1631
    %v1633 = vpop.xlane.xlu0 %1632
    %v1634 = vrcp.pop %v1630
    %v1635 = vmul.f32 %v1625, %v1634
    %v1636 = vrcp.pop %v1633
    %v1637 = vmul.f32 %v1627, %v1636
    %v1639 = vsel %vm276, %v1635, 0
    %v1642 = vsel %vm276, %v1637, 0
    %v1644 = vsel %vm168, %v1526, 0
    %1646 = vmatprep.subr.mxu0 0.0
    %1647 = vmatpush1.msra.mxu0 0.0
    %1648 = vmatprep.subr.mxu0 0.0
    %1649 = vmatpush1.msra.mxu0 0.0
    %1650 = vmatprep.subr.mxu0 0.0
    %1651 = vmatpush1.msra.mxu0 0.0
    %1652 = vmatprep.subr.mxu0 0.0
    %1653 = vmatpush1.msra.mxu0 0.0
    %1654 = vmatprep.subr.mxu0 0.0
    %1655 = vmatpush1.msra.mxu0 0.0
    %1656 = vmatprep.subr.mxu0 0.0
    %1657 = vmatpush1.msra.mxu0 0.0
    %1658 = vmatprep.subr.mxu0 0.0
    %1659 = vmatpush1.msra.mxu0 0.0
    %1660 = vmatprep.subr.mxu0 0.0
    %1661 = vmatpush1.msra.mxu0 0.0
    %1662 = vmatprep.subr.mxu0 0.0
    %1663 = vmatpush1.msra.mxu0 0.0
    %1664 = vmatprep.subr.mxu0 0.0
    %1665 = vmatpush1.msra.mxu0 0.0
    %1666 = vmatprep.subr.mxu0 0.0
    %1667 = vmatpush1.msra.mxu0 0.0
    %1668 = vmatprep.subr.mxu0 0.0
    %1669 = vmatpush1.msra.mxu0 0.0
    %1670 = vmatprep.subr.mxu0 0.0
    %1671 = vmatpush1.msra.mxu0 0.0
    %1672 = vmatprep.subr.mxu0 0.0
    %1673 = vmatpush1.msra.mxu0 %v1644
    %1674 = vmatprep.subr.mxu0 0.0
    %1675 = vmatpush1.msra.mxu0 %v1524
    %1676 = vmatprep.subr.mxu0 0.0
    %1677 = vmatpush1.msra.mxu0 %v1529
    %1678 = vmatprep.subr.mxu0 0.0
    %1679 = vmatpush2.msra.mxu0 0.0
    %1680 = vmatprep.subr.mxu0 0.0
    %1681 = vmatpush2.msra.mxu0 0.0
    %1682 = vmatprep.subr.mxu0 0.0
    %1683 = vmatpush2.msra.mxu0 0.0
    %1684 = vmatprep.subr.mxu0 0.0
    %1685 = vmatpush2.msra.mxu0 0.0
    %1686 = vmatprep.subr.mxu0 0.0
    %1687 = vmatpush2.msra.mxu0 0.0
    %1688 = vmatprep.subr.mxu0 0.0
    %1689 = vmatpush2.msra.mxu0 0.0
    %1690 = vmatprep.subr.mxu0 0.0
    %1691 = vmatpush2.msra.mxu0 0.0
    %1692 = vmatprep.subr.mxu0 0.0
    %1693 = vmatpush2.msra.mxu0 0.0
    %1694 = vmatprep.subr.mxu0 0.0
    %1695 = vmatpush2.msra.mxu0 0.0
    %1696 = vmatprep.subr.mxu0 0.0
    %1697 = vmatpush2.msra.mxu0 0.0
    %1698 = vmatprep.subr.mxu0 0.0
    %1699 = vmatpush2.msra.mxu0 0.0
    %1700 = vmatprep.subr.mxu0 0.0
    %1701 = vmatpush2.msra.mxu0 0.0
    %1702 = vmatprep.subr.mxu0 0.0
    %1703 = vmatpush2.msra.mxu0 0.0
    %1704 = vmatprep.subr.mxu0 0.0
    %1705 = vmatpush2.msra.mxu0 0.0
    %1706 = vmatprep.subr.mxu0 0.0
    %1707 = vmatpush2.msra.mxu0 0.0
    %1708 = vmatprep.subr.mxu0 0.0
    %1709 = vmatpush2.msra.mxu0 0.0
    %1710 = vmatprep.mubr.f32.mxu0 0.0
    %1711 = vmatmul.mubr.f32.gmra.mxu0 %v1639
    %v1712 = vpop.f32.mrf.mxu0
    %v1713 = vadd.f32 0.0, %v1712
    %v1714 = vpop.f32.mrf.mxu0
    %1715 = vmatprep.mubr.f32.mxu0 0.0
    %1716 = vmatmul.mubr.f32.gmra.mxu0 %v1642
    %v1717 = vpop.f32.mrf.mxu0
    %v1718 = vadd.f32 0.0, %v1717
    %v1719 = vpop.f32.mrf.mxu0
    %1720 = vdwg.mxu0
    %1721 = vrot.lane.b32.xlu0 %v1498, 120
    %v1722 = vpop.permute.xlu0 %1721
    %1723 = vrot.lane.b32.xlu0 %v1503, 120
    %v1724 = vpop.permute.xlu0 %1723
    %1725 = vrot.lane.b32.xlu0 %v1520, 120
    %v1726 = vpop.permute.xlu0 %1725
    %1727 = vrot.lane.b32.xlu0 %v1516, 120
    %v1728 = vpop.permute.xlu0 %1727
    %1729 = vrot.lane.b32.xlu0 %v1518, 120
    %v1730 = vpop.permute.xlu0 %1729
    %v1731 = vsel %vm189, %v1722, 0
    %v1733 = vsel %vm189, %v1724, 0
    %v1735 = vsel %vm189, %v1726, 0
    %v1737 = vsel %vm189, %v1728, 0
    %v1739 = vsel %vm189, %v1730, 0
    %1741 = vmatprep.subr.mxu0 0.0
    %1742 = vmatpush1.xpose.msra.mxu0 0.0
    %1743 = vmatprep.subr.mxu0 0.0
    %1744 = vmatpush1.xpose.msra.mxu0 0.0
    %1745 = vmatprep.subr.mxu0 0.0
    %1746 = vmatpush1.xpose.msra.mxu0 0.0
    %1747 = vmatprep.subr.mxu0 0.0
    %1748 = vmatpush1.xpose.msra.mxu0 0.0
    %1749 = vmatprep.subr.mxu0 0.0
    %1750 = vmatpush1.xpose.msra.mxu0 0.0
    %1751 = vmatprep.subr.mxu0 0.0
    %1752 = vmatpush1.xpose.msra.mxu0 0.0
    %1753 = vmatprep.subr.mxu0 0.0
    %1754 = vmatpush1.xpose.msra.mxu0 0.0
    %1755 = vmatprep.subr.mxu0 0.0
    %1756 = vmatpush1.xpose.msra.mxu0 0.0
    %1757 = vmatprep.subr.mxu0 0.0
    %1758 = vmatpush1.xpose.msra.mxu0 0.0
    %1759 = vmatprep.subr.mxu0 0.0
    %1760 = vmatpush1.xpose.msra.mxu0 0.0
    %1761 = vmatprep.subr.mxu0 0.0
    %1762 = vmatpush1.xpose.msra.mxu0 0.0
    %1763 = vmatprep.subr.mxu0 0.0
    %1764 = vmatpush1.xpose.msra.mxu0 0.0
    %1765 = vmatprep.subr.mxu0 0.0
    %1766 = vmatpush1.xpose.msra.mxu0 0.0
    %1767 = vmatprep.subr.mxu0 0.0
    %1768 = vmatpush1.xpose.msra.mxu0 %v1739
    %1769 = vmatprep.subr.mxu0 0.0
    %1770 = vmatpush1.xpose.msra.mxu0 %v1737
    %1771 = vmatprep.subr.mxu0 0.0
    %1772 = vmatpush1.xpose.msra.mxu0 %v1735
    %1773 = vmatprep.subr.mxu0 0.0
    %1774 = vmatpush2.xpose.msra.mxu0 0.0
    %1775 = vmatprep.subr.mxu0 0.0
    %1776 = vmatpush2.xpose.msra.mxu0 0.0
    %1777 = vmatprep.subr.mxu0 0.0
    %1778 = vmatpush2.xpose.msra.mxu0 0.0
    %1779 = vmatprep.subr.mxu0 0.0
    %1780 = vmatpush2.xpose.msra.mxu0 0.0
    %1781 = vmatprep.subr.mxu0 0.0
    %1782 = vmatpush2.xpose.msra.mxu0 0.0
    %1783 = vmatprep.subr.mxu0 0.0
    %1784 = vmatpush2.xpose.msra.mxu0 0.0
    %1785 = vmatprep.subr.mxu0 0.0
    %1786 = vmatpush2.xpose.msra.mxu0 0.0
    %1787 = vmatprep.subr.mxu0 0.0
    %1788 = vmatpush2.xpose.msra.mxu0 0.0
    %1789 = vmatprep.subr.mxu0 0.0
    %1790 = vmatpush2.xpose.msra.mxu0 0.0
    %1791 = vmatprep.subr.mxu0 0.0
    %1792 = vmatpush2.xpose.msra.mxu0 0.0
    %1793 = vmatprep.subr.mxu0 0.0
    %1794 = vmatpush2.xpose.msra.mxu0 0.0
    %1795 = vmatprep.subr.mxu0 0.0
    %1796 = vmatpush2.xpose.msra.mxu0 0.0
    %1797 = vmatprep.subr.mxu0 0.0
    %1798 = vmatpush2.xpose.msra.mxu0 0.0
    %1799 = vmatprep.subr.mxu0 0.0
    %1800 = vmatpush2.xpose.msra.mxu0 0.0
    %1801 = vmatprep.subr.mxu0 0.0
    %1802 = vmatpush2.xpose.msra.mxu0 0.0
    %1803 = vmatprep.subr.mxu0 0.0
    %1804 = vmatpush2.xpose.msra.mxu0 0.0
    %1805 = vmatprep.mubr.f32.mxu0 0.0
    %1806 = vmatmul.mubr.f32.gmra.mxu0 %v1731
    %v1807 = vpop.f32.mrf.mxu0
    %v1808 = vadd.f32 %v28, %v1807
    %v1809 = vpop.f32.mrf.mxu0
    %1810 = vmatprep.mubr.f32.mxu0 0.0
    %1811 = vmatmul.mubr.f32.gmra.mxu0 %v1733
    %v1812 = vpop.f32.mrf.mxu0
    %v1813 = vadd.f32 %v29, %v1812
    %v1814 = vpop.f32.mrf.mxu0
    %1815 = vdwg.mxu0
    %v1816 = vsel %vm276, %v1808, -inf
    %1817 = vmax.xlane.f32.xlu0 %v1816
    %v1818 = vpop.xlane.xlu0 %1817
    %v1819 = vsel %vm276, %v1813, -inf
    %1820 = vmax.xlane.f32.xlu0 %v1819
    %v1821 = vpop.xlane.xlu0 %1820
    %v1822 = vsub.f32 %v1808, %v1818
    %v1823 = vsub.f32 %v1813, %v1821
    %v1824 = vmul.f32 %v1822, 1.442695
    %v1825 = vpow.pop %v1824
    %v1826 = vmul.f32 %v1823, 1.442695
    %v1827 = vpow.pop %v1826
    %v1828 = vsel %vm276, %v1825, 0.0
    %1829 = vadd.xlane.f32.xlu0 %v1828
    %v1830 = vpop.xlane.xlu0 %1829
    %v1831 = vsel %vm276, %v1827, 0.0
    %1832 = vadd.xlane.f32.xlu0 %v1831
    %v1833 = vpop.xlane.xlu0 %1832
    %v1834 = vrcp.pop %v1830
    %v1835 = vmul.f32 %v1825, %v1834
    %v1836 = vrcp.pop %v1833
    %v1837 = vmul.f32 %v1827, %v1836
    %1839 = vrot.lane.b32.xlu0 %v1529, 120
    %v1840 = vpop.permute.xlu0 %1839
    %1841 = vrot.lane.b32.xlu0 %v1524, 120
    %v1842 = vpop.permute.xlu0 %1841
    %1843 = vrot.lane.b32.xlu0 %v1526, 120
    %v1844 = vpop.permute.xlu0 %1843
    %v1848 = vsel %vm276, %v1835, 0
    %v1851 = vsel %vm276, %v1837, 0
    %v1853 = vsel %vm168, %v1844, 0
    %1855 = vmatprep.subr.mxu0 0.0
    %1856 = vmatpush1.msra.mxu0 0.0
    %1857 = vmatprep.subr.mxu0 0.0
    %1858 = vmatpush1.msra.mxu0 0.0
    %1859 = vmatprep.subr.mxu0 0.0
    %1860 = vmatpush1.msra.mxu0 0.0
    %1861 = vmatprep.subr.mxu0 0.0
    %1862 = vmatpush1.msra.mxu0 0.0
    %1863 = vmatprep.subr.mxu0 0.0
    %1864 = vmatpush1.msra.mxu0 0.0
    %1865 = vmatprep.subr.mxu0 0.0
    %1866 = vmatpush1.msra.mxu0 0.0
    %1867 = vmatprep.subr.mxu0 0.0
    %1868 = vmatpush1.msra.mxu0 0.0
    %1869 = vmatprep.subr.mxu0 0.0
    %1870 = vmatpush1.msra.mxu0 0.0
    %1871 = vmatprep.subr.mxu0 0.0
    %1872 = vmatpush1.msra.mxu0 0.0
    %1873 = vmatprep.subr.mxu0 0.0
    %1874 = vmatpush1.msra.mxu0 0.0
    %1875 = vmatprep.subr.mxu0 0.0
    %1876 = vmatpush1.msra.mxu0 0.0
    %1877 = vmatprep.subr.mxu0 0.0
    %1878 = vmatpush1.msra.mxu0 0.0
    %1879 = vmatprep.subr.mxu0 0.0
    %1880 = vmatpush1.msra.mxu0 0.0
    %1881 = vmatprep.subr.mxu0 0.0
    %1882 = vmatpush1.msra.mxu0 %v1853
    %1883 = vmatprep.subr.mxu0 0.0
    %1884 = vmatpush1.msra.mxu0 %v1842
    %1885 = vmatprep.subr.mxu0 0.0
    %1886 = vmatpush1.msra.mxu0 %v1840
    %1887 = vmatprep.subr.mxu0 0.0
    %1888 = vmatpush2.msra.mxu0 0.0
    %1889 = vmatprep.subr.mxu0 0.0
    %1890 = vmatpush2.msra.mxu0 0.0
    %1891 = vmatprep.subr.mxu0 0.0
    %1892 = vmatpush2.msra.mxu0 0.0
    %1893 = vmatprep.subr.mxu0 0.0
    %1894 = vmatpush2.msra.mxu0 0.0
    %1895 = vmatprep.subr.mxu0 0.0
    %1896 = vmatpush2.msra.mxu0 0.0
    %1897 = vmatprep.subr.mxu0 0.0
    %1898 = vmatpush2.msra.mxu0 0.0
    %1899 = vmatprep.subr.mxu0 0.0
    %1900 = vmatpush2.msra.mxu0 0.0
    %1901 = vmatprep.subr.mxu0 0.0
    %1902 = vmatpush2.msra.mxu0 0.0
    %1903 = vmatprep.subr.mxu0 0.0
    %1904 = vmatpush2.msra.mxu0 0.0
    %1905 = vmatprep.subr.mxu0 0.0
    %1906 = vmatpush2.msra.mxu0 0.0
    %1907 = vmatprep.subr.mxu0 0.0
    %1908 = vmatpush2.msra.mxu0 0.0
    %1909 = vmatprep.subr.mxu0 0.0
    %1910 = vmatpush2.msra.mxu0 0.0
    %1911 = vmatprep.subr.mxu0 0.0
    %1912 = vmatpush2.msra.mxu0 0.0
    %1913 = vmatprep.subr.mxu0 0.0
    %1914 = vmatpush2.msra.mxu0 0.0
    %1915 = vmatprep.subr.mxu0 0.0
    %1916 = vmatpush2.msra.mxu0 0.0
    %1917 = vmatprep.subr.mxu0 0.0
    %1918 = vmatpush2.msra.mxu0 0.0
    %1919 = vmatprep.mubr.f32.mxu0 0.0
    %1920 = vmatmul.mubr.f32.gmra.mxu0 %v1848
    %v1921 = vpop.f32.mrf.mxu0
    %v1922 = vadd.f32 0.0, %v1921
    %v1923 = vpop.f32.mrf.mxu0
    %1924 = vmatprep.mubr.f32.mxu0 0.0
    %1925 = vmatmul.mubr.f32.gmra.mxu0 %v1851
    %v1926 = vpop.f32.mrf.mxu0
    %v1927 = vadd.f32 0.0, %v1926
    %v1928 = vpop.f32.mrf.mxu0
    %1929 = vdwg.mxu0
    %1930 = vrot.lane.b32.xlu0 %v1498, 112
    %v1931 = vpop.permute.xlu0 %1930
    %1932 = vrot.lane.b32.xlu0 %v1503, 112
    %v1933 = vpop.permute.xlu0 %1932
    %1934 = vrot.lane.b32.xlu0 %v1520, 112
    %v1935 = vpop.permute.xlu0 %1934
    %1936 = vrot.lane.b32.xlu0 %v1516, 112
    %v1937 = vpop.permute.xlu0 %1936
    %1938 = vrot.lane.b32.xlu0 %v1518, 112
    %v1939 = vpop.permute.xlu0 %1938
    %v1940 = vsel %vm189, %v1931, 0
    %v1942 = vsel %vm189, %v1933, 0
    %v1944 = vsel %vm189, %v1935, 0
    %v1946 = vsel %vm189, %v1937, 0
    %v1948 = vsel %vm189, %v1939, 0
    %1950 = vmatprep.subr.mxu0 0.0
    %1951 = vmatpush1.xpose.msra.mxu0 0.0
    %1952 = vmatprep.subr.mxu0 0.0
    %1953 = vmatpush1.xpose.msra.mxu0 0.0
    %1954 = vmatprep.subr.mxu0 0.0
    %1955 = vmatpush1.xpose.msra.mxu0 0.0
    %1956 = vmatprep.subr.mxu0 0.0
    %1957 = vmatpush1.xpose.msra.mxu0 0.0
    %1958 = vmatprep.subr.mxu0 0.0
    %1959 = vmatpush1.xpose.msra.mxu0 0.0
    %1960 = vmatprep.subr.mxu0 0.0
    %1961 = vmatpush1.xpose.msra.mxu0 0.0
    %1962 = vmatprep.subr.mxu0 0.0
    %1963 = vmatpush1.xpose.msra.mxu0 0.0
    %1964 = vmatprep.subr.mxu0 0.0
    %1965 = vmatpush1.xpose.msra.mxu0 0.0
    %1966 = vmatprep.subr.mxu0 0.0
    %1967 = vmatpush1.xpose.msra.mxu0 0.0
    %1968 = vmatprep.subr.mxu0 0.0
    %1969 = vmatpush1.xpose.msra.mxu0 0.0
    %1970 = vmatprep.subr.mxu0 0.0
    %1971 = vmatpush1.xpose.msra.mxu0 0.0
    %1972 = vmatprep.subr.mxu0 0.0
    %1973 = vmatpush1.xpose.msra.mxu0 0.0
    %1974 = vmatprep.subr.mxu0 0.0
    %1975 = vmatpush1.xpose.msra.mxu0 0.0
    %1976 = vmatprep.subr.mxu0 0.0
    %1977 = vmatpush1.xpose.msra.mxu0 %v1948
    %1978 = vmatprep.subr.mxu0 0.0
    %1979 = vmatpush1.xpose.msra.mxu0 %v1946
    %1980 = vmatprep.subr.mxu0 0.0
    %1981 = vmatpush1.xpose.msra.mxu0 %v1944
    %1982 = vmatprep.subr.mxu0 0.0
    %1983 = vmatpush2.xpose.msra.mxu0 0.0
    %1984 = vmatprep.subr.mxu0 0.0
    %1985 = vmatpush2.xpose.msra.mxu0 0.0
    %1986 = vmatprep.subr.mxu0 0.0
    %1987 = vmatpush2.xpose.msra.mxu0 0.0
    %1988 = vmatprep.subr.mxu0 0.0
    %1989 = vmatpush2.xpose.msra.mxu0 0.0
    %1990 = vmatprep.subr.mxu0 0.0
    %1991 = vmatpush2.xpose.msra.mxu0 0.0
    %1992 = vmatprep.subr.mxu0 0.0
    %1993 = vmatpush2.xpose.msra.mxu0 0.0
    %1994 = vmatprep.subr.mxu0 0.0
    %1995 = vmatpush2.xpose.msra.mxu0 0.0
    %1996 = vmatprep.subr.mxu0 0.0
    %1997 = vmatpush2.xpose.msra.mxu0 0.0
    %1998 = vmatprep.subr.mxu0 0.0
    %1999 = vmatpush2.xpose.msra.mxu0 0.0
    %2000 = vmatprep.subr.mxu0 0.0
    %2001 = vmatpush2.xpose.msra.mxu0 0.0
    %2002 = vmatprep.subr.mxu0 0.0
    %2003 = vmatpush2.xpose.msra.mxu0 0.0
    %2004 = vmatprep.subr.mxu0 0.0
    %2005 = vmatpush2.xpose.msra.mxu0 0.0
    %2006 = vmatprep.subr.mxu0 0.0
    %2007 = vmatpush2.xpose.msra.mxu0 0.0
    %2008 = vmatprep.subr.mxu0 0.0
    %2009 = vmatpush2.xpose.msra.mxu0 0.0
    %2010 = vmatprep.subr.mxu0 0.0
    %2011 = vmatpush2.xpose.msra.mxu0 0.0
    %2012 = vmatprep.subr.mxu0 0.0
    %2013 = vmatpush2.xpose.msra.mxu0 0.0
    %2014 = vmatprep.mubr.f32.mxu0 0.0
    %2015 = vmatmul.mubr.f32.gmra.mxu0 %v1940
    %v2016 = vpop.f32.mrf.mxu0
    %v2017 = vadd.f32 %v28, %v2016
    %v2018 = vpop.f32.mrf.mxu0
    %2019 = vmatprep.mubr.f32.mxu0 0.0
    %2020 = vmatmul.mubr.f32.gmra.mxu0 %v1942
    %v2021 = vpop.f32.mrf.mxu0
    %v2022 = vadd.f32 %v29, %v2021
    %v2023 = vpop.f32.mrf.mxu0
    %2024 = vdwg.mxu0
    %v2025 = vsel %vm276, %v2017, -inf
    %2026 = vmax.xlane.f32.xlu0 %v2025
    %v2027 = vpop.xlane.xlu0 %2026
    %v2028 = vsel %vm276, %v2022, -inf
    %2029 = vmax.xlane.f32.xlu0 %v2028
    %v2030 = vpop.xlane.xlu0 %2029
    %v2031 = vsub.f32 %v2017, %v2027
    %v2032 = vsub.f32 %v2022, %v2030
    %v2033 = vmul.f32 %v2031, 1.442695
    %v2034 = vpow.pop %v2033
    %v2035 = vmul.f32 %v2032, 1.442695
    %v2036 = vpow.pop %v2035
    %v2037 = vsel %vm276, %v2034, 0.0
    %2038 = vadd.xlane.f32.xlu0 %v2037
    %v2039 = vpop.xlane.xlu0 %2038
    %v2040 = vsel %vm276, %v2036, 0.0
    %2041 = vadd.xlane.f32.xlu0 %v2040
    %v2042 = vpop.xlane.xlu0 %2041
    %v2043 = vrcp.pop %v2039
    %v2044 = vmul.f32 %v2034, %v2043
    %v2045 = vrcp.pop %v2042
    %v2046 = vmul.f32 %v2036, %v2045
    %2047 = vrot.lane.b32.xlu0 %v1529, 112
    %v2048 = vpop.permute.xlu0 %2047
    %2049 = vrot.lane.b32.xlu0 %v1524, 112
    %v2050 = vpop.permute.xlu0 %2049
    %2051 = vrot.lane.b32.xlu0 %v1526, 112
    %v2052 = vpop.permute.xlu0 %2051
    %v2056 = vsel %vm276, %v2044, 0
    %v2059 = vsel %vm276, %v2046, 0
    %v2061 = vsel %vm168, %v2052, 0
    %2063 = vmatprep.subr.mxu0 0.0
    %2064 = vmatpush1.msra.mxu0 0.0
    %2065 = vmatprep.subr.mxu0 0.0
    %2066 = vmatpush1.msra.mxu0 0.0
    %2067 = vmatprep.subr.mxu0 0.0
    %2068 = vmatpush1.msra.mxu0 0.0
    %2069 = vmatprep.subr.mxu0 0.0
    %2070 = vmatpush1.msra.mxu0 0.0
    %2071 = vmatprep.subr.mxu0 0.0
    %2072 = vmatpush1.msra.mxu0 0.0
    %2073 = vmatprep.subr.mxu0 0.0
    %2074 = vmatpush1.msra.mxu0 0.0
    %2075 = vmatprep.subr.mxu0 0.0
    %2076 = vmatpush1.msra.mxu0 0.0
    %2077 = vmatprep.subr.mxu0 0.0
    %2078 = vmatpush1.msra.mxu0 0.0
    %2079 = vmatprep.subr.mxu0 0.0
    %2080 = vmatpush1.msra.mxu0 0.0
    %2081 = vmatprep.subr.mxu0 0.0
    %2082 = vmatpush1.msra.mxu0 0.0
    %2083 = vmatprep.subr.mxu0 0.0
    %2084 = vmatpush1.msra.mxu0 0.0
    %2085 = vmatprep.subr.mxu0 0.0
    %2086 = vmatpush1.msra.mxu0 0.0
    %2087 = vmatprep.subr.mxu0 0.0
    %2088 = vmatpush1.msra.mxu0 0.0
    %2089 = vmatprep.subr.mxu0 0.0
    %2090 = vmatpush1.msra.mxu0 %v2061
    %2091 = vmatprep.subr.mxu0 0.0
    %2092 = vmatpush1.msra.mxu0 %v2050
    %2093 = vmatprep.subr.mxu0 0.0
    %2094 = vmatpush1.msra.mxu0 %v2048
    %2095 = vmatprep.subr.mxu0 0.0
    %2096 = vmatpush2.msra.mxu0 0.0
    %2097 = vmatprep.subr.mxu0 0.0
    %2098 = vmatpush2.msra.mxu0 0.0
    %2099 = vmatprep.subr.mxu0 0.0
    %2100 = vmatpush2.msra.mxu0 0.0
    %2101 = vmatprep.subr.mxu0 0.0
    %2102 = vmatpush2.msra.mxu0 0.0
    %2103 = vmatprep.subr.mxu0 0.0
    %2104 = vmatpush2.msra.mxu0 0.0
    %2105 = vmatprep.subr.mxu0 0.0
    %2106 = vmatpush2.msra.mxu0 0.0
    %2107 = vmatprep.subr.mxu0 0.0
    %2108 = vmatpush2.msra.mxu0 0.0
    %2109 = vmatprep.subr.mxu0 0.0
    %2110 = vmatpush2.msra.mxu0 0.0
    %2111 = vmatprep.subr.mxu0 0.0
    %2112 = vmatpush2.msra.mxu0 0.0
    %2113 = vmatprep.subr.mxu0 0.0
    %2114 = vmatpush2.msra.mxu0 0.0
    %2115 = vmatprep.subr.mxu0 0.0
    %2116 = vmatpush2.msra.mxu0 0.0
    %2117 = vmatprep.subr.mxu0 0.0
    %2118 = vmatpush2.msra.mxu0 0.0
    %2119 = vmatprep.subr.mxu0 0.0
    %2120 = vmatpush2.msra.mxu0 0.0
    %2121 = vmatprep.subr.mxu0 0.0
    %2122 = vmatpush2.msra.mxu0 0.0
    %2123 = vmatprep.subr.mxu0 0.0
    %2124 = vmatpush2.msra.mxu0 0.0
    %2125 = vmatprep.subr.mxu0 0.0
    %2126 = vmatpush2.msra.mxu0 0.0
    %2127 = vmatprep.mubr.f32.mxu0 0.0
    %2128 = vmatmul.mubr.f32.gmra.mxu0 %v2056
    %v2129 = vpop.f32.mrf.mxu0
    %v2130 = vadd.f32 0.0, %v2129
    %v2131 = vpop.f32.mrf.mxu0
    %2132 = vmatprep.mubr.f32.mxu0 0.0
    %2133 = vmatmul.mubr.f32.gmra.mxu0 %v2059
    %v2134 = vpop.f32.mrf.mxu0
    %v2135 = vadd.f32 0.0, %v2134
    %v2136 = vpop.f32.mrf.mxu0
    %2137 = vdwg.mxu0
    %2138 = vrot.lane.b32.xlu0 %v1498, 104
    %v2139 = vpop.permute.xlu0 %2138
    %2140 = vrot.lane.b32.xlu0 %v1503, 104
    %v2141 = vpop.permute.xlu0 %2140
    %2142 = vrot.lane.b32.xlu0 %v1520, 104
    %v2143 = vpop.permute.xlu0 %2142
    %2144 = vrot.lane.b32.xlu0 %v1516, 104
    %v2145 = vpop.permute.xlu0 %2144
    %2146 = vrot.lane.b32.xlu0 %v1518, 104
    %v2147 = vpop.permute.xlu0 %2146
    %v2148 = vsel %vm189, %v2139, 0
    %v2150 = vsel %vm189, %v2141, 0
    %v2152 = vsel %vm189, %v2143, 0
    %v2154 = vsel %vm189, %v2145, 0
    %v2156 = vsel %vm189, %v2147, 0
    %2158 = vmatprep.subr.mxu0 0.0
    %2159 = vmatpush1.xpose.msra.mxu0 0.0
    %2160 = vmatprep.subr.mxu0 0.0
    %2161 = vmatpush1.xpose.msra.mxu0 0.0
    %2162 = vmatprep.subr.mxu0 0.0
    %2163 = vmatpush1.xpose.msra.mxu0 0.0
    %2164 = vmatprep.subr.mxu0 0.0
    %2165 = vmatpush1.xpose.msra.mxu0 0.0
    %2166 = vmatprep.subr.mxu0 0.0
    %2167 = vmatpush1.xpose.msra.mxu0 0.0
    %2168 = vmatprep.subr.mxu0 0.0
    %2169 = vmatpush1.xpose.msra.mxu0 0.0
    %2170 = vmatprep.subr.mxu0 0.0
    %2171 = vmatpush1.xpose.msra.mxu0 0.0
    %2172 = vmatprep.subr.mxu0 0.0
    %2173 = vmatpush1.xpose.msra.mxu0 0.0
    %2174 = vmatprep.subr.mxu0 0.0
    %2175 = vmatpush1.xpose.msra.mxu0 0.0
    %2176 = vmatprep.subr.mxu0 0.0
    %2177 = vmatpush1.xpose.msra.mxu0 0.0
    %2178 = vmatprep.subr.mxu0 0.0
    %2179 = vmatpush1.xpose.msra.mxu0 0.0
    %2180 = vmatprep.subr.mxu0 0.0
    %2181 = vmatpush1.xpose.msra.mxu0 0.0
    %2182 = vmatprep.subr.mxu0 0.0
    %2183 = vmatpush1.xpose.msra.mxu0 0.0
    %2184 = vmatprep.subr.mxu0 0.0
    %2185 = vmatpush1.xpose.msra.mxu0 %v2156
    %2186 = vmatprep.subr.mxu0 0.0
    %2187 = vmatpush1.xpose.msra.mxu0 %v2154
    %2188 = vmatprep.subr.mxu0 0.0
    %2189 = vmatpush1.xpose.msra.mxu0 %v2152
    %2190 = vmatprep.subr.mxu0 0.0
    %2191 = vmatpush2.xpose.msra.mxu0 0.0
    %2192 = vmatprep.subr.mxu0 0.0
    %2193 = vmatpush2.xpose.msra.mxu0 0.0
    %2194 = vmatprep.subr.mxu0 0.0
    %2195 = vmatpush2.xpose.msra.mxu0 0.0
    %2196 = vmatprep.subr.mxu0 0.0
    %2197 = vmatpush2.xpose.msra.mxu0 0.0
    %2198 = vmatprep.subr.mxu0 0.0
    %2199 = vmatpush2.xpose.msra.mxu0 0.0
    %2200 = vmatprep.subr.mxu0 0.0
    %2201 = vmatpush2.xpose.msra.mxu0 0.0
    %2202 = vmatprep.subr.mxu0 0.0
    %2203 = vmatpush2.xpose.msra.mxu0 0.0
    %2204 = vmatprep.subr.mxu0 0.0
    %2205 = vmatpush2.xpose.msra.mxu0 0.0
    %2206 = vmatprep.subr.mxu0 0.0
    %2207 = vmatpush2.xpose.msra.mxu0 0.0
    %2208 = vmatprep.subr.mxu0 0.0
    %2209 = vmatpush2.xpose.msra.mxu0 0.0
    %2210 = vmatprep.subr.mxu0 0.0
    %2211 = vmatpush2.xpose.msra.mxu0 0.0
    %2212 = vmatprep.subr.mxu0 0.0
    %2213 = vmatpush2.xpose.msra.mxu0 0.0
    %2214 = vmatprep.subr.mxu0 0.0
    %2215 = vmatpush2.xpose.msra.mxu0 0.0
    %2216 = vmatprep.subr.mxu0 0.0
    %2217 = vmatpush2.xpose.msra.mxu0 0.0
    %2218 = vmatprep.subr.mxu0 0.0
    %2219 = vmatpush2.xpose.msra.mxu0 0.0
    %2220 = vmatprep.subr.mxu0 0.0
    %2221 = vmatpush2.xpose.msra.mxu0 0.0
    %2222 = vmatprep.mubr.f32.mxu0 0.0
    %2223 = vmatmul.mubr.f32.gmra.mxu0 %v2148
    %v2224 = vpop.f32.mrf.mxu0
    %v2225 = vadd.f32 %v28, %v2224
    %v2226 = vpop.f32.mrf.mxu0
    %2227 = vmatprep.mubr.f32.mxu0 0.0
    %2228 = vmatmul.mubr.f32.gmra.mxu0 %v2150
    %v2229 = vpop.f32.mrf.mxu0
    %v2230 = vadd.f32 %v29, %v2229
    %v2231 = vpop.f32.mrf.mxu0
    %2232 = vdwg.mxu0
    %v2233 = vsel %vm276, %v2225, -inf
    %2234 = vmax.xlane.f32.xlu0 %v2233
    %v2235 = vpop.xlane.xlu0 %2234
    %v2236 = vsel %vm276, %v2230, -inf
    %2237 = vmax.xlane.f32.xlu0 %v2236
    %v2238 = vpop.xlane.xlu0 %2237
    %v2239 = vsub.f32 %v2225, %v2235
    %v2240 = vsub.f32 %v2230, %v2238
    %v2241 = vmul.f32 %v2239, 1.442695
    %v2242 = vpow.pop %v2241
    %v2243 = vmul.f32 %v2240, 1.442695
    %v2244 = vpow.pop %v2243
    %v2245 = vsel %vm276, %v2242, 0.0
    %2246 = vadd.xlane.f32.xlu0 %v2245
    %v2247 = vpop.xlane.xlu0 %2246
    %v2248 = vsel %vm276, %v2244, 0.0
    %2249 = vadd.xlane.f32.xlu0 %v2248
    %v2250 = vpop.xlane.xlu0 %2249
    %v2251 = vrcp.pop %v2247
    %v2252 = vmul.f32 %v2242, %v2251
    %v2253 = vrcp.pop %v2250
    %v2254 = vmul.f32 %v2244, %v2253
    %2255 = vrot.lane.b32.xlu0 %v1529, 104
    %v2256 = vpop.permute.xlu0 %2255
    %2257 = vrot.lane.b32.xlu0 %v1524, 104
    %v2258 = vpop.permute.xlu0 %2257
    %2259 = vrot.lane.b32.xlu0 %v1526, 104
    %v2260 = vpop.permute.xlu0 %2259
    %v2264 = vsel %vm276, %v2252, 0
    %v2267 = vsel %vm276, %v2254, 0
    %v2269 = vsel %vm168, %v2260, 0
    %2271 = vmatprep.subr.mxu0 0.0
    %2272 = vmatpush1.msra.mxu0 0.0
    %2273 = vmatprep.subr.mxu0 0.0
    %2274 = vmatpush1.msra.mxu0 0.0
    %2275 = vmatprep.subr.mxu0 0.0
    %2276 = vmatpush1.msra.mxu0 0.0
    %2277 = vmatprep.subr.mxu0 0.0
    %2278 = vmatpush1.msra.mxu0 0.0
    %2279 = vmatprep.subr.mxu0 0.0
    %2280 = vmatpush1.msra.mxu0 0.0
    %2281 = vmatprep.subr.mxu0 0.0
    %2282 = vmatpush1.msra.mxu0 0.0
    %2283 = vmatprep.subr.mxu0 0.0
    %2284 = vmatpush1.msra.mxu0 0.0
    %2285 = vmatprep.subr.mxu0 0.0
    %2286 = vmatpush1.msra.mxu0 0.0
    %2287 = vmatprep.subr.mxu0 0.0
    %2288 = vmatpush1.msra.mxu0 0.0
    %2289 = vmatprep.subr.mxu0 0.0
    %2290 = vmatpush1.msra.mxu0 0.0
    %2291 = vmatprep.subr.mxu0 0.0
    %2292 = vmatpush1.msra.mxu0 0.0
    %2293 = vmatprep.subr.mxu0 0.0
    %2294 = vmatpush1.msra.mxu0 0.0
    %2295 = vmatprep.subr.mxu0 0.0
    %2296 = vmatpush1.msra.mxu0 0.0
    %2297 = vmatprep.subr.mxu0 0.0
    %2298 = vmatpush1.msra.mxu0 %v2269
    %2299 = vmatprep.subr.mxu0 0.0
    %2300 = vmatpush1.msra.mxu0 %v2258
    %2301 = vmatprep.subr.mxu0 0.0
    %2302 = vmatpush1.msra.mxu0 %v2256
    %2303 = vmatprep.subr.mxu0 0.0
    %2304 = vmatpush2.msra.mxu0 0.0
    %2305 = vmatprep.subr.mxu0 0.0
    %2306 = vmatpush2.msra.mxu0 0.0
    %2307 = vmatprep.subr.mxu0 0.0
    %2308 = vmatpush2.msra.mxu0 0.0
    %2309 = vmatprep.subr.mxu0 0.0
    %2310 = vmatpush2.msra.mxu0 0.0
    %2311 = vmatprep.subr.mxu0 0.0
    %2312 = vmatpush2.msra.mxu0 0.0
    %2313 = vmatprep.subr.mxu0 0.0
    %2314 = vmatpush2.msra.mxu0 0.0
    %2315 = vmatprep.subr.mxu0 0.0
    %2316 = vmatpush2.msra.mxu0 0.0
    %2317 = vmatprep.subr.mxu0 0.0
    %2318 = vmatpush2.msra.mxu0 0.0
    %2319 = vmatprep.subr.mxu0 0.0
    %2320 = vmatpush2.msra.mxu0 0.0
    %2321 = vmatprep.subr.mxu0 0.0
    %2322 = vmatpush2.msra.mxu0 0.0
    %2323 = vmatprep.subr.mxu0 0.0
    %2324 = vmatpush2.msra.mxu0 0.0
    %2325 = vmatprep.subr.mxu0 0.0
    %2326 = vmatpush2.msra.mxu0 0.0
    %2327 = vmatprep.subr.mxu0 0.0
    %2328 = vmatpush2.msra.mxu0 0.0
    %2329 = vmatprep.subr.mxu0 0.0
    %2330 = vmatpush2.msra.mxu0 0.0
    %2331 = vmatprep.subr.mxu0 0.0
    %2332 = vmatpush2.msra.mxu0 0.0
    %2333 = vmatprep.subr.mxu0 0.0
    %2334 = vmatpush2.msra.mxu0 0.0
    %2335 = vmatprep.mubr.f32.mxu0 0.0
    %2336 = vmatmul.mubr.f32.gmra.mxu0 %v2264
    %v2337 = vpop.f32.mrf.mxu0
    %v2338 = vadd.f32 0.0, %v2337
    %v2339 = vpop.f32.mrf.mxu0
    %2340 = vmatprep.mubr.f32.mxu0 0.0
    %2341 = vmatmul.mubr.f32.gmra.mxu0 %v2267
    %v2342 = vpop.f32.mrf.mxu0
    %v2343 = vadd.f32 0.0, %v2342
    %v2344 = vpop.f32.mrf.mxu0
    %2345 = vdwg.mxu0
    %2348 = vrot.lane.b32.xlu0 %v1922, 8
    %v2349 = vpop.permute.xlu0 %2348
    %2350 = vrot.lane.b32.xlu0 %v1927, 8
    %v2351 = vpop.permute.xlu0 %2350
    %2356 = vrot.lane.b32.xlu0 %v2130, 16
    %v2357 = vpop.permute.xlu0 %2356
    %2358 = vrot.lane.b32.xlu0 %v2135, 16
    %v2359 = vpop.permute.xlu0 %2358
    %2364 = vrot.lane.b32.xlu0 %v2338, 24
    %v2365 = vpop.permute.xlu0 %2364
    %2366 = vrot.lane.b32.xlu0 %v2343, 24
    %v2367 = vpop.permute.xlu0 %2366
    %v2370 = vsel %vm189, %v1713, %v2349
    %v2371 = vsel %vm189, %v1718, %v2351
    %v2372 = vsel %vm1033, %v2370, %v2357
    %v2373 = vsel %vm1033, %v2371, %v2359
    %v2374 = vsel %vm1036, %v2372, %v2365
    %v2375 = vsel %vm1036, %v2373, %v2367
    %v2376 = vld [vmem:[#allocation2 + $0x118] sm:$0xff]
    %v2377 = vld [vmem:[#allocation2 + $0x120] sm:$0xff]
    %v2378 = vld [vmem:[#allocation2 + $0x128] sm:$0xff]
    %v2379 = vld [vmem:[#allocation2 + $0x130] sm:$0xff]
    %v2380 = vld [vmem:[#allocation2 + $0x138] sm:$0x1]
    %v2381 = vlaneseq
    %v2382 = vshrl.u32 %v2381, 7
    %v2383 = vsub.s32 0, %v2382
    %v2384 = vrot.slane %v2380, %v2383
    %v2386 = vsel %vm34, %v2374, 0
    %v2389 = vsel %vm34, %v2375, 0
    %2391 = vmatprep.subr.mxu0 0.0
    %2392 = vmatpush1.msra.mxu0 0.0
    %2393 = vmatprep.subr.mxu0 0.0
    %2394 = vmatpush1.msra.mxu0 0.0
    %2395 = vmatprep.subr.mxu0 0.0
    %2396 = vmatpush1.msra.mxu0 0.0
    %2397 = vmatprep.subr.mxu0 0.0
    %2398 = vmatpush1.msra.mxu0 0.0
    %2399 = vmatprep.subr.mxu0 0.0
    %2400 = vmatpush1.msra.mxu0 0.0
    %2401 = vmatprep.subr.mxu0 0.0
    %2402 = vmatpush1.msra.mxu0 0.0
    %2403 = vmatprep.subr.mxu0 0.0
    %2404 = vmatpush1.msra.mxu0 0.0
    %2405 = vmatprep.subr.mxu0 0.0
    %2406 = vmatpush1.msra.mxu0 0.0
    %2407 = vmatprep.subr.mxu0 0.0
    %2408 = vmatpush1.msra.mxu0 0.0
    %2409 = vmatprep.subr.mxu0 0.0
    %2410 = vmatpush1.msra.mxu0 0.0
    %2411 = vmatprep.subr.mxu0 0.0
    %2412 = vmatpush1.msra.mxu0 0.0
    %2413 = vmatprep.subr.mxu0 0.0
    %2414 = vmatpush1.msra.mxu0 0.0
    %2415 = vmatprep.subr.mxu0 0.0
    %2416 = vmatpush1.msra.mxu0 %v2379
    %2417 = vmatprep.subr.mxu0 0.0
    %2418 = vmatpush1.msra.mxu0 %v2378
    %2419 = vmatprep.subr.mxu0 0.0
    %2420 = vmatpush1.msra.mxu0 %v2377
    %2421 = vmatprep.subr.mxu0 0.0
    %2422 = vmatpush1.msra.mxu0 %v2376
    %2423 = vmatprep.subr.mxu0 0.0
    %2424 = vmatpush2.msra.mxu0 0.0
    %2425 = vmatprep.subr.mxu0 0.0
    %2426 = vmatpush2.msra.mxu0 0.0
    %2427 = vmatprep.subr.mxu0 0.0
    %2428 = vmatpush2.msra.mxu0 0.0
    %2429 = vmatprep.subr.mxu0 0.0
    %2430 = vmatpush2.msra.mxu0 0.0
    %2431 = vmatprep.subr.mxu0 0.0
    %2432 = vmatpush2.msra.mxu0 0.0
    %2433 = vmatprep.subr.mxu0 0.0
    %2434 = vmatpush2.msra.mxu0 0.0
    %2435 = vmatprep.subr.mxu0 0.0
    %2436 = vmatpush2.msra.mxu0 0.0
    %2437 = vmatprep.subr.mxu0 0.0
    %2438 = vmatpush2.msra.mxu0 0.0
    %2439 = vmatprep.subr.mxu0 0.0
    %2440 = vmatpush2.msra.mxu0 0.0
    %2441 = vmatprep.subr.mxu0 0.0
    %2442 = vmatpush2.msra.mxu0 0.0
    %2443 = vmatprep.subr.mxu0 0.0
    %2444 = vmatpush2.msra.mxu0 0.0
    %2445 = vmatprep.subr.mxu0 0.0
    %2446 = vmatpush2.msra.mxu0 0.0
    %2447 = vmatprep.subr.mxu0 0.0
    %2448 = vmatpush2.msra.mxu0 0.0
    %2449 = vmatprep.subr.mxu0 0.0
    %2450 = vmatpush2.msra.mxu0 0.0
    %2451 = vmatprep.subr.mxu0 0.0
    %2452 = vmatpush2.msra.mxu0 0.0
    %2453 = vmatprep.subr.mxu0 0.0
    %2454 = vmatpush2.msra.mxu0 0.0
    %2455 = vmatprep.mubr.f32.mxu0 0.0
    %2456 = vmatmul.mubr.f32.gmra.mxu0 %v2386
    %v2457 = vpop.f32.mrf.mxu0
    %v2458 = vadd.f32 %v2384, %v2457
    %v2459 = vpop.f32.mrf.mxu0
    %2460 = vmatprep.mubr.f32.mxu0 0.0
    %2461 = vmatmul.mubr.f32.gmra.mxu0 %v2389
    %v2462 = vpop.f32.mrf.mxu0
    %v2463 = vadd.f32 %v2384, %v2462
    %v2464 = vpop.f32.mrf.mxu0
    %2465 = vdwg.mxu0
    %v2466 = vadd.f32 %v2458, %v1414
    %v2467 = vadd.f32 %v2463, %v1415
    %v2468 = vld [vmem:[#allocation2 + $0x140] sm:$0x1]
    %v2469 = vld [vmem:[#allocation2 + $0x148] sm:$0x1]
    %v2470 = vsel %vm34, %v2466, 0.0
    %2471 = vadd.xlane.f32.xlu0 %v2470
    %v2472 = vpop.xlane.xlu0 %2471
    %v2473 = vsel %vm34, %v2467, 0.0
    %2474 = vadd.xlane.f32.xlu0 %v2473
    %v2475 = vpop.xlane.xlu0 %2474
    %v2476 = vmul.f32 %v2472, %v41
    %v2477 = vmul.f32 %v2475, %v41
    %v2478 = vsub.f32 %v2466, %v2476
    %v2479 = vsub.f32 %v2467, %v2477
    %v2480 = vmul.f32 %v2478, %v2478
    %v2481 = vmul.f32 %v2479, %v2479
    %v2482 = vsel %vm34, %v2480, 0.0
    %2483 = vadd.xlane.f32.xlu0 %v2482
    %v2484 = vpop.xlane.xlu0 %2483
    %v2485 = vsel %vm34, %v2481, 0.0
    %2486 = vadd.xlane.f32.xlu0 %v2485
    %v2487 = vpop.xlane.xlu0 %2486
    %v2488 = vmul.f32 %v2484, %v41
    %v2489 = vmul.f32 %v2487, %v41
    %v2490 = vadd.f32 %v2488, 1e-12
    %v2491 = vadd.f32 %v2489, 1e-12
    %v2492 = vrsqrt.pop %v2490
    %v2493 = vrsqrt.pop %v2491
    %v2494 = vmul.f32 %v2478, %v2492
    %v2495 = vmul.f32 %v2479, %v2493
    %v2496 = vlaneseq
    %v2497 = vshrl.u32 %v2496, 7
    %v2498 = vsub.s32 0, %v2497
    %v2499 = vrot.slane %v2468, %v2498
    %v2500 = vmul.f32 %v2494, %v2499
    %v2501 = vmul.f32 %v2495, %v2499
    %v2502 = vlaneseq
    %v2503 = vshrl.u32 %v2502, 7
    %v2504 = vsub.s32 0, %v2503
    %v2505 = vrot.slane %v2469, %v2504
    %v2506 = vadd.f32 %v2500, %v2505
    %v2507 = vadd.f32 %v2501, %v2505
    %v2508 = vld [vmem:[#allocation2 + $0x150] sm:$0xff]
    %v2509 = vld [vmem:[#allocation2 + $0x158] sm:$0xff]
    %v2510 = vld [vmem:[#allocation2 + $0x160] sm:$0xff]
    %v2511 = vld [vmem:[#allocation2 + $0x168] sm:$0xff]
    %v2512 = vld [vmem:[#allocation2 + $0x170] sm:$0x1]
    %v2513 = vlaneseq
    %v2514 = vshrl.u32 %v2513, 7
    %v2515 = vsub.s32 0, %v2514
    %v2516 = vrot.slane %v2512, %v2515
    %v2518 = vsel %vm34, %v2506, 0
    %v2521 = vsel %vm34, %v2507, 0
    %2523 = vmatprep.subr.mxu0 0.0
    %2524 = vmatpush1.msra.mxu0 0.0
    %2525 = vmatprep.subr.mxu0 0.0
    %2526 = vmatpush1.msra.mxu0 0.0
    %2527 = vmatprep.subr.mxu0 0.0
    %2528 = vmatpush1.msra.mxu0 0.0
    %2529 = vmatprep.subr.mxu0 0.0
    %2530 = vmatpush1.msra.mxu0 0.0
    %2531 = vmatprep.subr.mxu0 0.0
    %2532 = vmatpush1.msra.mxu0 0.0
    %2533 = vmatprep.subr.mxu0 0.0
    %2534 = vmatpush1.msra.mxu0 0.0
    %2535 = vmatprep.subr.mxu0 0.0
    %2536 = vmatpush1.msra.mxu0 0.0
    %2537 = vmatprep.subr.mxu0 0.0
    %2538 = vmatpush1.msra.mxu0 0.0
    %2539 = vmatprep.subr.mxu0 0.0
    %2540 = vmatpush1.msra.mxu0 0.0
    %2541 = vmatprep.subr.mxu0 0.0
    %2542 = vmatpush1.msra.mxu0 0.0
    %2543 = vmatprep.subr.mxu0 0.0
    %2544 = vmatpush1.msra.mxu0 0.0
    %2545 = vmatprep.subr.mxu0 0.0
    %2546 = vmatpush1.msra.mxu0 0.0
    %2547 = vmatprep.subr.mxu0 0.0
    %2548 = vmatpush1.msra.mxu0 %v2511
    %2549 = vmatprep.subr.mxu0 0.0
    %2550 = vmatpush1.msra.mxu0 %v2510
    %2551 = vmatprep.subr.mxu0 0.0
    %2552 = vmatpush1.msra.mxu0 %v2509
    %2553 = vmatprep.subr.mxu0 0.0
    %2554 = vmatpush1.msra.mxu0 %v2508
    %2555 = vmatprep.subr.mxu0 0.0
    %2556 = vmatpush2.msra.mxu0 0.0
    %2557 = vmatprep.subr.mxu0 0.0
    %2558 = vmatpush2.msra.mxu0 0.0
    %2559 = vmatprep.subr.mxu0 0.0
    %2560 = vmatpush2.msra.mxu0 0.0
    %2561 = vmatprep.subr.mxu0 0.0
    %2562 = vmatpush2.msra.mxu0 0.0
    %2563 = vmatprep.subr.mxu0 0.0
    %2564 = vmatpush2.msra.mxu0 0.0
    %2565 = vmatprep.subr.mxu0 0.0
    %2566 = vmatpush2.msra.mxu0 0.0
    %2567 = vmatprep.subr.mxu0 0.0
    %2568 = vmatpush2.msra.mxu0 0.0
    %2569 = vmatprep.subr.mxu0 0.0
    %2570 = vmatpush2.msra.mxu0 0.0
    %2571 = vmatprep.subr.mxu0 0.0
    %2572 = vmatpush2.msra.mxu0 0.0
    %2573 = vmatprep.subr.mxu0 0.0
    %2574 = vmatpush2.msra.mxu0 0.0
    %2575 = vmatprep.subr.mxu0 0.0
    %2576 = vmatpush2.msra.mxu0 0.0
    %2577 = vmatprep.subr.mxu0 0.0
    %2578 = vmatpush2.msra.mxu0 0.0
    %2579 = vmatprep.subr.mxu0 0.0
    %2580 = vmatpush2.msra.mxu0 0.0
    %2581 = vmatprep.subr.mxu0 0.0
    %2582 = vmatpush2.msra.mxu0 0.0
    %2583 = vmatprep.subr.mxu0 0.0
    %2584 = vmatpush2.msra.mxu0 0.0
    %2585 = vmatprep.subr.mxu0 0.0
    %2586 = vmatpush2.msra.mxu0 0.0
    %2587 = vmatprep.mubr.f32.mxu0 0.0
    %2588 = vmatmul.mubr.f32.gmra.mxu0 %v2518
    %v2589 = vpop.f32.mrf.mxu0
    %v2590 = vadd.f32 %v2516, %v2589
    %v2591 = vpop.f32.mrf.mxu0
    %2592 = vmatprep.mubr.f32.mxu0 0.0
    %2593 = vmatmul.mubr.f32.gmra.mxu0 %v2521
    %v2594 = vpop.f32.mrf.mxu0
    %v2595 = vadd.f32 %v2516, %v2594
    %v2596 = vpop.f32.mrf.mxu0
    %2597 = vdwg.mxu0
    %v2598 = vmul.f32 %v2590, %v2590
    %v2599 = vmul.f32 %v2595, %v2595
    %v2600 = vmul.f32 %v2590, %v2598
    %v2601 = vmul.f32 %v2595, %v2599
    %v2602 = vmul.f32 %v2600, 0.044715
    %v2603 = vmul.f32 %v2601, 0.044715
    %v2604 = vadd.f32 %v2590, %v2602
    %v2605 = vadd.f32 %v2595, %v2603
    %v2606 = vmul.f32 %v2604, 0.7978846
    %v2607 = vmul.f32 %v2605, 0.7978846
    %v2608 = vtanh.pop %v2606
    %v2609 = vtanh.pop %v2607
    %v2610 = vadd.f32 %v2608, 1.0
    %v2611 = vadd.f32 %v2609, 1.0
    %v2612 = vmul.f32 %v2610, 0.5
    %v2613 = vmul.f32 %v2611, 0.5
    %v2614 = vmul.f32 %v2590, %v2612
    %v2615 = vmul.f32 %v2595, %v2613
    %v2616 = vld [vmem:[#allocation2 + $0x178] sm:$0xff]
    %v2617 = vld [vmem:[#allocation2 + $0x180] sm:$0xff]
    %v2618 = vld [vmem:[#allocation2 + $0x188] sm:$0xff]
    %v2619 = vld [vmem:[#allocation2 + $0x190] sm:$0xff]
    %v2620 = vld [vmem:[#allocation2 + $0x198] sm:$0xff]
    %v2621 = vld [vmem:[#allocation2 + $0x1a0] sm:$0xff]
    %v2622 = vld [vmem:[#allocation2 + $0x1a8] sm:$0xff]
    %v2623 = vld [vmem:[#allocation2 + $0x1b0] sm:$0xff]
    %v2624 = vld [vmem:[#allocation2 + $0x1b8] sm:$0x1]
    %v2625 = vlaneseq
    %v2626 = vshrl.u32 %v2625, 7
    %v2627 = vsub.s32 0, %v2626
    %v2628 = vrot.slane %v2624, %v2627
    %v2630 = vsel %vm1292, %v2614, 0
    %v2633 = vsel %vm1292, %v2615, 0
    %2635 = vmatprep.subr.mxu0 0.0
    %2636 = vmatpush1.msra.mxu0 0.0
    %2637 = vmatprep.subr.mxu0 0.0
    %2638 = vmatpush1.msra.mxu0 0.0
    %2639 = vmatprep.subr.mxu0 0.0
    %2640 = vmatpush1.msra.mxu0 0.0
    %2641 = vmatprep.subr.mxu0 0.0
    %2642 = vmatpush1.msra.mxu0 0.0
    %2643 = vmatprep.subr.mxu0 0.0
    %2644 = vmatpush1.msra.mxu0 0.0
    %2645 = vmatprep.subr.mxu0 0.0
    %2646 = vmatpush1.msra.mxu0 0.0
    %2647 = vmatprep.subr.mxu0 0.0
    %2648 = vmatpush1.msra.mxu0 0.0
    %2649 = vmatprep.subr.mxu0 0.0
    %2650 = vmatpush1.msra.mxu0 0.0
    %2651 = vmatprep.subr.mxu0 0.0
    %2652 = vmatpush1.msra.mxu0 %v2623
    %2653 = vmatprep.subr.mxu0 0.0
    %2654 = vmatpush1.msra.mxu0 %v2622
    %2655 = vmatprep.subr.mxu0 0.0
    %2656 = vmatpush1.msra.mxu0 %v2621
    %2657 = vmatprep.subr.mxu0 0.0
    %2658 = vmatpush1.msra.mxu0 %v2620
    %2659 = vmatprep.subr.mxu0 0.0
    %2660 = vmatpush1.msra.mxu0 %v2619
    %2661 = vmatprep.subr.mxu0 0.0
    %2662 = vmatpush1.msra.mxu0 %v2618
    %2663 = vmatprep.subr.mxu0 0.0
    %2664 = vmatpush1.msra.mxu0 %v2617
    %2665 = vmatprep.subr.mxu0 0.0
    %2666 = vmatpush1.msra.mxu0 %v2616
    %2667 = vmatprep.subr.mxu0 0.0
    %2668 = vmatpush2.msra.mxu0 0.0
    %2669 = vmatprep.subr.mxu0 0.0
    %2670 = vmatpush2.msra.mxu0 0.0
    %2671 = vmatprep.subr.mxu0 0.0
    %2672 = vmatpush2.msra.mxu0 0.0
    %2673 = vmatprep.subr.mxu0 0.0
    %2674 = vmatpush2.msra.mxu0 0.0
    %2675 = vmatprep.subr.mxu0 0.0
    %2676 = vmatpush2.msra.mxu0 0.0
    %2677 = vmatprep.subr.mxu0 0.0
    %2678 = vmatpush2.msra.mxu0 0.0
    %2679 = vmatprep.subr.mxu0 0.0
    %2680 = vmatpush2.msra.mxu0 0.0
    %2681 = vmatprep.subr.mxu0 0.0
    %2682 = vmatpush2.msra.mxu0 0.0
    %2683 = vmatprep.subr.mxu0 0.0
    %2684 = vmatpush2.msra.mxu0 0.0
    %2685 = vmatprep.subr.mxu0 0.0
    %2686 = vmatpush2.msra.mxu0 0.0
    %2687 = vmatprep.subr.mxu0 0.0
    %2688 = vmatpush2.msra.mxu0 0.0
    %2689 = vmatprep.subr.mxu0 0.0
    %2690 = vmatpush2.msra.mxu0 0.0
    %2691 = vmatprep.subr.mxu0 0.0
    %2692 = vmatpush2.msra.mxu0 0.0
    %2693 = vmatprep.subr.mxu0 0.0
    %2694 = vmatpush2.msra.mxu0 0.0
    %2695 = vmatprep.subr.mxu0 0.0
    %2696 = vmatpush2.msra.mxu0 0.0
    %2697 = vmatprep.subr.mxu0 0.0
    %2698 = vmatpush2.msra.mxu0 0.0
    %2699 = vmatprep.mubr.f32.mxu0 0.0
    %2700 = vmatmul.mubr.f32.gmra.mxu0 %v2630
    %v2701 = vpop.f32.mrf.mxu0
    %v2702 = vadd.f32 %v2628, %v2701
    %v2703 = vpop.f32.mrf.mxu0
    %2704 = vmatprep.mubr.f32.mxu0 0.0
    %2705 = vmatmul.mubr.f32.gmra.mxu0 %v2633
    %v2706 = vpop.f32.mrf.mxu0
    %v2707 = vadd.f32 %v2628, %v2706
    %v2708 = vpop.f32.mrf.mxu0
    %2709 = vdwg.mxu0
    %v2710 = vadd.f32 %v2702, %v2506
    %v2711 = vadd.f32 %v2707, %v2507
    %v2712 = vld [vmem:[#allocation2 + $0x1c0] sm:$0x1]
    %v2713 = vld [vmem:[#allocation2 + $0x1c8] sm:$0x1]
    %v2714 = vsel %vm34, %v2710, 0.0
    %2715 = vadd.xlane.f32.xlu0 %v2714
    %v2716 = vpop.xlane.xlu0 %2715
    %v2717 = vsel %vm34, %v2711, 0.0
    %2718 = vadd.xlane.f32.xlu0 %v2717
    %v2719 = vpop.xlane.xlu0 %2718
    %v2720 = vmul.f32 %v2716, %v41
    %v2721 = vmul.f32 %v2719, %v41
    %v2722 = vsub.f32 %v2710, %v2720
    %v2723 = vsub.f32 %v2711, %v2721
    %v2724 = vmul.f32 %v2722, %v2722
    %v2725 = vmul.f32 %v2723, %v2723
    %v2726 = vsel %vm34, %v2724, 0.0
    %2727 = vadd.xlane.f32.xlu0 %v2726
    %v2728 = vpop.xlane.xlu0 %2727
    %v2729 = vsel %vm34, %v2725, 0.0
    %2730 = vadd.xlane.f32.xlu0 %v2729
    %v2731 = vpop.xlane.xlu0 %2730
    %v2732 = vmul.f32 %v2728, %v41
    %v2733 = vmul.f32 %v2731, %v41
    %v2734 = vadd.f32 %v2732, 1e-12
    %v2735 = vadd.f32 %v2733, 1e-12
    %v2736 = vrsqrt.pop %v2734
    %v2737 = vrsqrt.pop %v2735
    %v2738 = vmul.f32 %v2722, %v2736
    %v2739 = vmul.f32 %v2723, %v2737
    %v2740 = vlaneseq
    %v2741 = vshrl.u32 %v2740, 7
    %v2742 = vsub.s32 0, %v2741
    %v2743 = vrot.slane %v2712, %v2742
    %v2744 = vmul.f32 %v2738, %v2743
    %v2745 = vmul.f32 %v2739, %v2743
    %v2746 = vlaneseq
    %v2747 = vshrl.u32 %v2746, 7
    %v2748 = vsub.s32 0, %v2747
    %v2749 = vrot.slane %v2713, %v2748
    %v2750 = vadd.f32 %v2744, %v2749
    %v2751 = vadd.f32 %v2745, %v2749
    %v2752 = vld [vmem:[#allocation2 + $0x1f0] sm:$0xff]
    %v2753 = vld [vmem:[#allocation2 + $0x1f8] sm:$0xff]
    %v2754 = vld [vmem:[#allocation2 + $0x200] sm:$0xff]
    %v2755 = vld [vmem:[#allocation2 + $0x208] sm:$0xff]
    %v2756 = vld [vmem:[#allocation2 + $0x210] sm:$0x1]
    %v2757 = vlaneseq
    %v2758 = vshrl.u32 %v2757, 7
    %v2759 = vsub.s32 0, %v2758
    %v2760 = vrot.slane %v2756, %v2759
    %v2762 = vsel %vm34, %v2750, 0
    %v2765 = vsel %vm34, %v2751, 0
    %2767 = vmatprep.subr.mxu0 0.0
    %2768 = vmatpush1.msra.mxu0 0.0
    %2769 = vmatprep.subr.mxu0 0.0
    %2770 = vmatpush1.msra.mxu0 0.0
    %2771 = vmatprep.subr.mxu0 0.0
    %2772 = vmatpush1.msra.mxu0 0.0
    %2773 = vmatprep.subr.mxu0 0.0
    %2774 = vmatpush1.msra.mxu0 0.0
    %2775 = vmatprep.subr.mxu0 0.0
    %2776 = vmatpush1.msra.mxu0 0.0
    %2777 = vmatprep.subr.mxu0 0.0
    %2778 = vmatpush1.msra.mxu0 0.0
    %2779 = vmatprep.subr.mxu0 0.0
    %2780 = vmatpush1.msra.mxu0 0.0
    %2781 = vmatprep.subr.mxu0 0.0
    %2782 = vmatpush1.msra.mxu0 0.0
    %2783 = vmatprep.subr.mxu0 0.0
    %2784 = vmatpush1.msra.mxu0 0.0
    %2785 = vmatprep.subr.mxu0 0.0
    %2786 = vmatpush1.msra.mxu0 0.0
    %2787 = vmatprep.subr.mxu0 0.0
    %2788 = vmatpush1.msra.mxu0 0.0
    %2789 = vmatprep.subr.mxu0 0.0
    %2790 = vmatpush1.msra.mxu0 0.0
    %2791 = vmatprep.subr.mxu0 0.0
    %2792 = vmatpush1.msra.mxu0 %v2755
    %2793 = vmatprep.subr.mxu0 0.0
    %2794 = vmatpush1.msra.mxu0 %v2754
    %2795 = vmatprep.subr.mxu0 0.0
    %2796 = vmatpush1.msra.mxu0 %v2753
    %2797 = vmatprep.subr.mxu0 0.0
    %2798 = vmatpush1.msra.mxu0 %v2752
    %2799 = vmatprep.subr.mxu0 0.0
    %2800 = vmatpush2.msra.mxu0 0.0
    %2801 = vmatprep.subr.mxu0 0.0
    %2802 = vmatpush2.msra.mxu0 0.0
    %2803 = vmatprep.subr.mxu0 0.0
    %2804 = vmatpush2.msra.mxu0 0.0
    %2805 = vmatprep.subr.mxu0 0.0
    %2806 = vmatpush2.msra.mxu0 0.0
    %2807 = vmatprep.subr.mxu0 0.0
    %2808 = vmatpush2.msra.mxu0 0.0
    %2809 = vmatprep.subr.mxu0 0.0
    %2810 = vmatpush2.msra.mxu0 0.0
    %2811 = vmatprep.subr.mxu0 0.0
    %2812 = vmatpush2.msra.mxu0 0.0
    %2813 = vmatprep.subr.mxu0 0.0
    %2814 = vmatpush2.msra.mxu0 0.0
    %2815 = vmatprep.subr.mxu0 0.0
    %2816 = vmatpush2.msra.mxu0 0.0
    %2817 = vmatprep.subr.mxu0 0.0
    %2818 = vmatpush2.msra.mxu0 0.0
    %2819 = vmatprep.subr.mxu0 0.0
    %2820 = vmatpush2.msra.mxu0 0.0
    %2821 = vmatprep.subr.mxu0 0.0
    %2822 = vmatpush2.msra.mxu0 0.0
    %2823 = vmatprep.subr.mxu0 0.0
    %2824 = vmatpush2.msra.mxu0 0.0
    %2825 = vmatprep.subr.mxu0 0.0
    %2826 = vmatpush2.msra.mxu0 0.0
    %2827 = vmatprep.subr.mxu0 0.0
    %2828 = vmatpush2.msra.mxu0 0.0
    %2829 = vmatprep.subr.mxu0 0.0
    %2830 = vmatpush2.msra.mxu0 0.0
    %2831 = vmatprep.mubr.f32.mxu0 0.0
    %2832 = vmatmul.mubr.f32.gmra.mxu0 %v2762
    %v2833 = vpop.f32.mrf.mxu0
    %v2834 = vadd.f32 %v2760, %v2833
    %v2835 = vpop.f32.mrf.mxu0
    %2836 = vmatprep.mubr.f32.mxu0 0.0
    %2837 = vmatmul.mubr.f32.gmra.mxu0 %v2765
    %v2838 = vpop.f32.mrf.mxu0
    %v2839 = vadd.f32 %v2760, %v2838
    %v2840 = vpop.f32.mrf.mxu0
    %2841 = vdwg.mxu0
    %2842 = vmax.xlane.f32.xlu0 %v2834
    %v2843 = vpop.xlane.xlu0 %2842
    %2844 = vmax.xlane.f32.xlu0 %v2839
    %v2845 = vpop.xlane.xlu0 %2844
    %v2846 = vsub.f32 %v2834, %v2843
    %v2847 = vsub.f32 %v2839, %v2845
    %v2848 = vmul.f32 %v2846, 1.442695
    %v2849 = vpow.pop %v2848
    %v2850 = vmul.f32 %v2847, 1.442695
    %v2851 = vpow.pop %v2850
    %2852 = vadd.xlane.f32.xlu0 %v2849
    %v2853 = vpop.xlane.xlu0 %2852
    %2854 = vadd.xlane.f32.xlu0 %v2851
    %v2855 = vpop.xlane.xlu0 %2854
    %v2856 = vrcp.pop %v2853
    %v2857 = vmul.f32 %v2849, %v2856
    %v2858 = vrcp.pop %v2855
    %v2859 = vmul.f32 %v2851, %v2858
    %v2860 = vld [vmem:[#allocation2 + $0x218] sm:$0xff]
    %v2861 = vld [vmem:[#allocation2 + $0x220] sm:$0xff]
    %v2862 = vld [vmem:[#allocation2 + $0x228] sm:$0xff]
    %v2863 = vld [vmem:[#allocation2 + $0x230] sm:$0xff]
    %v2864 = vld [vmem:[#allocation2 + $0x238] sm:$0x1f]
    %vm2865 = vcmask 39936
    %v2867 = vsel %vm2865, %v2857, 0
    %v2870 = vsel %vm2865, %v2859, 0
    %vm2872 = vcmask 1044480
    %v2874 = vsel %vm2872, %v2864, 0
    %2876 = vmatprep.subr.mxu0 0.0
    %2877 = vmatpush1.msra.mxu0 0.0
    %2878 = vmatprep.subr.mxu0 0.0
    %2879 = vmatpush1.msra.mxu0 0.0
    %2880 = vmatprep.subr.mxu0 0.0
    %2881 = vmatpush1.msra.mxu0 0.0
    %2882 = vmatprep.subr.mxu0 0.0
    %2883 = vmatpush1.msra.mxu0 0.0
    %2884 = vmatprep.subr.mxu0 0.0
    %2885 = vmatpush1.msra.mxu0 0.0
    %2886 = vmatprep.subr.mxu0 0.0
    %2887 = vmatpush1.msra.mxu0 0.0
    %2888 = vmatprep.subr.mxu0 0.0
    %2889 = vmatpush1.msra.mxu0 0.0
    %2890 = vmatprep.subr.mxu0 0.0
    %2891 = vmatpush1.msra.mxu0 0.0
    %2892 = vmatprep.subr.mxu0 0.0
    %2893 = vmatpush1.msra.mxu0 0.0
    %2894 = vmatprep.subr.mxu0 0.0
    %2895 = vmatpush1.msra.mxu0 0.0
    %2896 = vmatprep.subr.mxu0 0.0
    %2897 = vmatpush1.msra.mxu0 0.0
    %2898 = vmatprep.subr.mxu0 0.0
    %2899 = vmatpush1.msra.mxu0 0.0
    %2900 = vmatprep.subr.mxu0 0.0
    %2901 = vmatpush1.msra.mxu0 0.0
    %2902 = vmatprep.subr.mxu0 0.0
    %2903 = vmatpush1.msra.mxu0 0.0
    %2904 = vmatprep.subr.mxu0 0.0
    %2905 = vmatpush1.msra.mxu0 0.0
    %2906 = vmatprep.subr.mxu0 0.0
    %2907 = vmatpush1.msra.mxu0 %v2874
    %2908 = vmatprep.subr.mxu0 0.0
    %2909 = vmatpush2.msra.mxu0 0.0
    %2910 = vmatprep.subr.mxu0 0.0
    %2911 = vmatpush2.msra.mxu0 0.0
    %2912 = vmatprep.subr.mxu0 0.0
    %2913 = vmatpush2.msra.mxu0 0.0
    %2914 = vmatprep.subr.mxu0 0.0
    %2915 = vmatpush2.msra.mxu0 0.0
    %2916 = vmatprep.subr.mxu0 0.0
    %2917 = vmatpush2.msra.mxu0 0.0
    %2918 = vmatprep.subr.mxu0 0.0
    %2919 = vmatpush2.msra.mxu0 0.0
    %2920 = vmatprep.subr.mxu0 0.0
    %2921 = vmatpush2.msra.mxu0 0.0
    %2922 = vmatprep.subr.mxu0 0.0
    %2923 = vmatpush2.msra.mxu0 0.0
    %2924 = vmatprep.subr.mxu0 0.0
    %2925 = vmatpush2.msra.mxu0 0.0
    %2926 = vmatprep.subr.mxu0 0.0
    %2927 = vmatpush2.msra.mxu0 0.0
    %2928 = vmatprep.subr.mxu0 0.0
    %2929 = vmatpush2.msra.mxu0 0.0
    %2930 = vmatprep.subr.mxu0 0.0
    %2931 = vmatpush2.msra.mxu0 0.0
    %2932 = vmatprep.subr.mxu0 0.0
    %2933 = vmatpush2.msra.mxu0 0.0
    %2934 = vmatprep.subr.mxu0 0.0
    %2935 = vmatpush2.msra.mxu0 0.0
    %2936 = vmatprep.subr.mxu0 0.0
    %2937 = vmatpush2.msra.mxu0 0.0
    %2938 = vmatprep.subr.mxu0 0.0
    %2939 = vmatpush2.msra.mxu0 0.0
    %2940 = vmatprep.mubr.f32.mxu0 0.0
    %2941 = vmatmul.mubr.f32.gmra.mxu0 %v2867
    %v2942 = vpop.f32.mrf.mxu0
    %v2943 = vadd.f32 0.0, %v2942
    %v2944 = vpop.f32.mrf.mxu0
    %2945 = vmatprep.mubr.f32.mxu0 0.0
    %2946 = vmatmul.mubr.f32.gmra.mxu0 %v2870
    %v2947 = vpop.f32.mrf.mxu0
    %v2948 = vadd.f32 0.0, %v2947
    %v2949 = vpop.f32.mrf.mxu0
    %2950 = vdwg.mxu0
    %2951 = vmatprep.subr.mxu0 0.0
    %2952 = vmatpush1.msra.mxu0 0.0
    %2953 = vmatprep.subr.mxu0 0.0
    %2954 = vmatpush1.msra.mxu0 0.0
    %2955 = vmatprep.subr.mxu0 0.0
    %2956 = vmatpush1.msra.mxu0 0.0
    %2957 = vmatprep.subr.mxu0 0.0
    %2958 = vmatpush1.msra.mxu0 0.0
    %2959 = vmatprep.subr.mxu0 0.0
    %2960 = vmatpush1.msra.mxu0 0.0
    %2961 = vmatprep.subr.mxu0 0.0
    %2962 = vmatpush1.msra.mxu0 0.0
    %2963 = vmatprep.subr.mxu0 0.0
    %2964 = vmatpush1.msra.mxu0 0.0
    %2965 = vmatprep.subr.mxu0 0.0
    %2966 = vmatpush1.msra.mxu0 0.0
    %2967 = vmatprep.subr.mxu0 0.0
    %2968 = vmatpush1.msra.mxu0 0.0
    %2969 = vmatprep.subr.mxu0 0.0
    %2970 = vmatpush1.msra.mxu0 0.0
    %2971 = vmatprep.subr.mxu0 0.0
    %2972 = vmatpush1.msra.mxu0 0.0
    %2973 = vmatprep.subr.mxu0 0.0
    %2974 = vmatpush1.msra.mxu0 0.0
    %2975 = vmatprep.subr.mxu0 0.0
    %2976 = vmatpush1.msra.mxu0 %v2863
    %2977 = vmatprep.subr.mxu0 0.0
    %2978 = vmatpush1.msra.mxu0 %v2862
    %2979 = vmatprep.subr.mxu0 0.0
    %2980 = vmatpush1.msra.mxu0 %v2861
    %2981 = vmatprep.subr.mxu0 0.0
    %2982 = vmatpush1.msra.mxu0 %v2860
    %2983 = vmatprep.subr.mxu0 0.0
    %2984 = vmatpush2.msra.mxu0 0.0
    %2985 = vmatprep.subr.mxu0 0.0
    %2986 = vmatpush2.msra.mxu0 0.0
    %2987 = vmatprep.subr.mxu0 0.0
    %2988 = vmatpush2.msra.mxu0 0.0
    %2989 = vmatprep.subr.mxu0 0.0
    %2990 = vmatpush2.msra.mxu0 0.0
    %2991 = vmatprep.subr.mxu0 0.0
    %2992 = vmatpush2.msra.mxu0 0.0
    %2993 = vmatprep.subr.mxu0 0.0
    %2994 = vmatpush2.msra.mxu0 0.0
    %2995 = vmatprep.subr.mxu0 0.0
    %2996 = vmatpush2.msra.mxu0 0.0
    %2997 = vmatprep.subr.mxu0 0.0
    %2998 = vmatpush2.msra.mxu0 0.0
    %2999 = vmatprep.subr.mxu0 0.0
    %3000 = vmatpush2.msra.mxu0 0.0
    %3001 = vmatprep.subr.mxu0 0.0
    %3002 = vmatpush2.msra.mxu0 0.0
    %3003 = vmatprep.subr.mxu0 0.0
    %3004 = vmatpush2.msra.mxu0 0.0
    %3005 = vmatprep.subr.mxu0 0.0
    %3006 = vmatpush2.msra.mxu0 0.0
    %3007 = vmatprep.subr.mxu0 0.0
    %3008 = vmatpush2.msra.mxu0 0.0
    %3009 = vmatprep.subr.mxu0 0.0
    %3010 = vmatpush2.msra.mxu0 0.0
    %3011 = vmatprep.subr.mxu0 0.0
    %3012 = vmatpush2.msra.mxu0 0.0
    %3013 = vmatprep.subr.mxu0 0.0
    %3014 = vmatpush2.msra.mxu0 0.0
    %3015 = vmatprep.mubr.f32.mxu0 0.0
    %3016 = vmatmul.mubr.f32.gmra.mxu0 %v2762
    %v3017 = vpop.f32.mrf.mxu0
    %v3018 = vadd.f32 %v2943, %v3017
    %v3019 = vpop.f32.mrf.mxu0
    %3020 = vmatprep.mubr.f32.mxu0 0.0
    %3021 = vmatmul.mubr.f32.gmra.mxu0 %v2765
    %v3022 = vpop.f32.mrf.mxu0
    %v3023 = vadd.f32 %v2948, %v3022
    %v3024 = vpop.f32.mrf.mxu0
    %3025 = vdwg.mxu0
    %v3026 = vld [vmem:[#allocation2 + $0x240] sm:$0x1]
    %v3027 = vlaneseq
    %v3028 = vshrl.u32 %v3027, 7
    %v3029 = vsub.s32 0, %v3028
    %v3030 = vrot.slane %v3026, %v3029
    %v3031 = vadd.f32 %v3018, %v3030
    %v3032 = vadd.f32 %v3023, %v3030
    %v3033 = vtanh.pop %v3031
    %v3034 = vtanh.pop %v3032
    %v3035 = vld [vmem:[#allocation2 + $0x248] sm:$0x1]
    %v3036 = vld [vmem:[#allocation2 + $0x250] sm:$0x1]
    %vm3037 = vcmask 302080
    %v3038 = vsel %vm3037, %v3033, 0.0
    %3039 = vadd.xlane.f32.xlu0 %v3038
    %v3040 = vpop.xlane.xlu0 %3039
    %v3041 = vsel %vm3037, %v3034, 0.0
    %3042 = vadd.xlane.f32.xlu0 %v3041
    %v3043 = vpop.xlane.xlu0 %3042
    %v3044 = vrcp.pop 37.0
    %v3045 = vmul.f32 %v3040, %v3044
    %v3046 = vmul.f32 %v3043, %v3044
    %v3047 = vsub.f32 %v3033, %v3045
    %v3048 = vsub.f32 %v3034, %v3046
    %v3049 = vmul.f32 %v3047, %v3047
    %v3050 = vmul.f32 %v3048, %v3048
    %v3051 = vsel %vm3037, %v3049, 0.0
    %3052 = vadd.xlane.f32.xlu0 %v3051
    %v3053 = vpop.xlane.xlu0 %3052
    %v3054 = vsel %vm3037, %v3050, 0.0
    %3055 = vadd.xlane.f32.xlu0 %v3054
    %v3056 = vpop.xlane.xlu0 %3055
    %v3057 = vmul.f32 %v3053, %v3044
    %v3058 = vmul.f32 %v3056, %v3044
    %v3059 = vadd.f32 %v3057, 1e-05
    %v3060 = vadd.f32 %v3058, 1e-05
    %v3061 = vrsqrt.pop %v3059
    %v3062 = vrsqrt.pop %v3060
    %v3063 = vmul.f32 %v3047, %v3061
    %v3064 = vmul.f32 %v3048, %v3062
    %v3065 = vlaneseq
    %v3066 = vshrl.u32 %v3065, 7
    %v3067 = vsub.s32 0, %v3066
    %v3068 = vrot.slane %v3035, %v3067
    %v3069 = vmul.f32 %v3063, %v3068
    %v3070 = vmul.f32 %v3064, %v3068
    %v3071 = vlaneseq
    %v3072 = vshrl.u32 %v3071, 7
    %v3073 = vsub.s32 0, %v3072
    %v3074 = vrot.slane %v3036, %v3073
    %v3075 = vadd.f32 %v3069, %v3074
    %v3076 = vadd.f32 %v3070, %v3074
    %v3077 = vld [vmem:[#allocation2 + $0x258] sm:$0xff]
    %v3078 = vld [vmem:[#allocation2 + $0x260] sm:$0xff]
    %v3079 = vld [vmem:[#allocation2 + $0x268] sm:$0xff]
    %v3080 = vld [vmem:[#allocation2 + $0x270] sm:$0xff]
    %v3081 = vld [vmem:[#allocation2 + $0x278] sm:$0x1f]
    %v3082 = vld [vmem:[#allocation2 + $0x280] sm:$0x1]
    %v3083 = vlaneseq
    %v3084 = vshrl.u32 %v3083, 7
    %v3085 = vsub.s32 0, %v3084
    %v3086 = vrot.slane %v3082, %v3085
    %v3088 = vsel %vm3037, %v3075, 0
    %v3091 = vsel %vm3037, %v3076, 0
    %v3094 = vsel %vm2872, %v3081, 0
    %3096 = vmatprep.subr.mxu0 0.0
    %3097 = vmatpush1.msra.mxu0 0.0
    %3098 = vmatprep.subr.mxu0 0.0
    %3099 = vmatpush1.msra.mxu0 0.0
    %3100 = vmatprep.subr.mxu0 0.0
    %3101 = vmatpush1.msra.mxu0 0.0
    %3102 = vmatprep.subr.mxu0 0.0
    %3103 = vmatpush1.msra.mxu0 0.0
    %3104 = vmatprep.subr.mxu0 0.0
    %3105 = vmatpush1.msra.mxu0 0.0
    %3106 = vmatprep.subr.mxu0 0.0
    %3107 = vmatpush1.msra.mxu0 0.0
    %3108 = vmatprep.subr.mxu0 0.0
    %3109 = vmatpush1.msra.mxu0 0.0
    %3110 = vmatprep.subr.mxu0 0.0
    %3111 = vmatpush1.msra.mxu0 0.0
    %3112 = vmatprep.subr.mxu0 0.0
    %3113 = vmatpush1.msra.mxu0 0.0
    %3114 = vmatprep.subr.mxu0 0.0
    %3115 = vmatpush1.msra.mxu0 0.0
    %3116 = vmatprep.subr.mxu0 0.0
    %3117 = vmatpush1.msra.mxu0 0.0
    %3118 = vmatprep.subr.mxu0 0.0
    %3119 = vmatpush1.msra.mxu0 %v3094
    %3120 = vmatprep.subr.mxu0 0.0
    %3121 = vmatpush1.msra.mxu0 %v3080
    %3122 = vmatprep.subr.mxu0 0.0
    %3123 = vmatpush1.msra.mxu0 %v3079
    %3124 = vmatprep.subr.mxu0 0.0
    %3125 = vmatpush1.msra.mxu0 %v3078
    %3126 = vmatprep.subr.mxu0 0.0
    %3127 = vmatpush1.msra.mxu0 %v3077
    %3128 = vmatprep.subr.mxu0 0.0
    %3129 = vmatpush2.msra.mxu0 0.0
    %3130 = vmatprep.subr.mxu0 0.0
    %3131 = vmatpush2.msra.mxu0 0.0
    %3132 = vmatprep.subr.mxu0 0.0
    %3133 = vmatpush2.msra.mxu0 0.0
    %3134 = vmatprep.subr.mxu0 0.0
    %3135 = vmatpush2.msra.mxu0 0.0
    %3136 = vmatprep.subr.mxu0 0.0
    %3137 = vmatpush2.msra.mxu0 0.0
    %3138 = vmatprep.subr.mxu0 0.0
    %3139 = vmatpush2.msra.mxu0 0.0
    %3140 = vmatprep.subr.mxu0 0.0
    %3141 = vmatpush2.msra.mxu0 0.0
    %3142 = vmatprep.subr.mxu0 0.0
    %3143 = vmatpush2.msra.mxu0 0.0
    %3144 = vmatprep.subr.mxu0 0.0
    %3145 = vmatpush2.msra.mxu0 0.0
    %3146 = vmatprep.subr.mxu0 0.0
    %3147 = vmatpush2.msra.mxu0 0.0
    %3148 = vmatprep.subr.mxu0 0.0
    %3149 = vmatpush2.msra.mxu0 0.0
    %3150 = vmatprep.subr.mxu0 0.0
    %3151 = vmatpush2.msra.mxu0 0.0
    %3152 = vmatprep.subr.mxu0 0.0
    %3153 = vmatpush2.msra.mxu0 0.0
    %3154 = vmatprep.subr.mxu0 0.0
    %3155 = vmatpush2.msra.mxu0 0.0
    %3156 = vmatprep.subr.mxu0 0.0
    %3157 = vmatpush2.msra.mxu0 0.0
    %3158 = vmatprep.subr.mxu0 0.0
    %3159 = vmatpush2.msra.mxu0 0.0
    %3160 = vmatprep.mubr.f32.mxu0 0.0
    %3161 = vmatmul.mubr.f32.gmra.mxu0 %v3088
    %v3162 = vpop.f32.mrf.mxu0
    %v3163 = vadd.f32 %v3086, %v3162
    %v3164 = vpop.f32.mrf.mxu0
    %3165 = vmatprep.mubr.f32.mxu0 0.0
    %3166 = vmatmul.mubr.f32.gmra.mxu0 %v3091
    %v3167 = vpop.f32.mrf.mxu0
    %v3168 = vadd.f32 %v3086, %v3167
    %v3169 = vpop.f32.mrf.mxu0
    %3170 = vdwg.mxu0
    %3171 = vst [vmem:[%s3] sm:$0xff] %v2834
    %3172 = vst [vmem:[%s3 + $0x8] sm:$0xff] %v2839
    %3173 = vst [vmem:[%s3 + $0x10] sm:$0xff] %v3163
    %3174 = vst [vmem:[%s3 + $0x18] sm:$0xff] %v3168
    // Predicated region
    $region18: #{bert_span_prefix_forward.1} parent=1 // pred_check
      _
    $region19: #{bert_span_prefix_forward.1} parent=1 // pred_check_branch
      %3176 = sbr.rel (0) target = $region21
    $region20: #{bert_span_prefix_forward.1} parent=1 // pred_region
      _
    $region21: #{bert_span_prefix_forward.1} parent=1 // pred_fallthru
      _
    // Predicated region
    $region22: #{bert_span_prefix_forward.1} parent=1 // pred_check
      _
    $region23: #{bert_span_prefix_forward.1} parent=1 // pred_check_branch
      %3178 = sbr.rel (0) target = $region25
    $region24: #{bert_span_prefix_forward.1} parent=1 // pred_region
      _
    $region25: #{bert_span_prefix_forward.1} parent=1 // pred_fallthru
      _
    %3179 = vsyncpa [#allocation3], 1

</llo_original>
